<compile_context>
chip_gen: v5e
topology: v5e:2x2
jax: 0.10.0
libtpu: 0.0.40
codegen_flags: <defaults>
</compile_context>

<pallas_src>
import functools

import jax
import jax.numpy as jnp
from jax.experimental import pallas as pl
from jax.experimental.pallas import tpu as pltpu


C_PAD = 128                      # all channel dims padded to one full lane row
_VMEM_LIMIT = 48 * 1024 * 1024   # safe on v5e/v6e (128 MiB) and v7x (64 MiB)
_BN_EPS = 1e-5
_NEG_SLOPE = 0.01                # nn.LeakyReLU default


def _round_up(x, m):
    return (x + m - 1) // m * m


def _choose_tiles(n_pad):
    """Row tile (tm) and contraction tile (tk) for the P @ XW kernel."""
    tm = 256 if n_pad % 256 == 0 else 128
    tk = 128
    for cand in (2048, 1024, 512, 256):
        if n_pad % cand == 0:
            tk = cand
            break
    return tm, tk


def _row_params(n_grid_axes=1):
    return pltpu.CompilerParams(
        dimension_semantics=("parallel",) * n_grid_axes,
        vmem_limit_bytes=_VMEM_LIMIT)


# -----------------------------------------------------------------------------
# Pallas kernels
# -----------------------------------------------------------------------------
def _xw_kernel(x_ref, w_ref, o_ref):
    # (tm, C) @ (C, C) in bf16 on the MXU, f32 accumulate, bf16 result
    # (the operand of the P matmul).
    xb = x_ref[...].astype(jnp.bfloat16)
    wb = w_ref[...].astype(jnp.bfloat16)
    o_ref[...] = jnp.dot(xb, wb,
                         preferred_element_type=jnp.float32).astype(o_ref.dtype)


def _propagate_kernel(cnt_ref, kidx_ref, p_ref, xw_ref, b_ref,
                      a_ref, stats_ref, acc_ref, *, tm, n_valid):
    """acc += P_tile @ XW_tile; at k==last: bias + LeakyReLU + BN partials."""
    i = pl.program_id(0)
    k = pl.program_id(1)

    @pl.when(k == 0)
    def _():
        acc_ref[...] = jnp.zeros_like(acc_ref)

    # Block-sparse skip: only accumulate tiles that contain edges.
    @pl.when(k < cnt_ref[i])
    def _():
        acc_ref[...] += jnp.dot(p_ref[...], xw_ref[...],
                                preferred_element_type=jnp.float32)

    @pl.when(k == pl.num_programs(1) - 1)
    def _():
        h = acc_ref[...] + b_ref[...]
        a = jnp.where(h >= 0, h, jnp.float32(_NEG_SLOPE) * h)
        a_ref[...] = a
        # BatchNorm partial sums over the *real* node rows of this tile.
        row = i * tm + jax.lax.broadcasted_iota(jnp.int32, a.shape, 0)
        am = jnp.where(row < n_valid, a, 0.0)
        s1 = jnp.sum(am, axis=0, keepdims=True)          # (1, C)
        s2 = jnp.sum(am * am, axis=0, keepdims=True)     # (1, C)
        ridx = jax.lax.broadcasted_iota(jnp.int32, stats_ref.shape, 0)
        stats_ref[...] = (jnp.where(ridx == 0, s1, 0.0)
                          + jnp.where(ridx == 1, s2, 0.0))


def _bn_kernel(a_ref, m_ref, r_ref, g_ref, bt_ref, o_ref):
    o_ref[...] = (a_ref[...] - m_ref[...]) * r_ref[...] * g_ref[...] + bt_ref[...]


def _bn_res_kernel(a_ref, m_ref, r_ref, g_ref, bt_ref, res_ref, o_ref):
    o_ref[...] = ((a_ref[...] - m_ref[...]) * r_ref[...] * g_ref[...]
                  + bt_ref[...] + res_ref[...])


def _linear_kernel(x_ref, w_ref, b_ref, o_ref):
    xb = x_ref[...].astype(jnp.bfloat16)
    wb = w_ref[...].astype(jnp.bfloat16)
    o_ref[...] = (jnp.dot(xb, wb, preferred_element_type=jnp.float32)
                  + b_ref[...])


# -----------------------------------------------------------------------------
# pallas_call wrappers
# -----------------------------------------------------------------------------
def compute_xw(x, w, *, tm):
    n_pad, cin = x.shape
    cout = w.shape[1]
    return pl.pallas_call(
        _xw_kernel,
        grid=(n_pad // tm,),
        in_specs=[pl.BlockSpec((tm, cin), lambda i: (i, 0)),
                  pl.BlockSpec((cin, cout), lambda i: (0, 0))],
        out_specs=pl.BlockSpec((tm, cout), lambda i: (i, 0)),
        out_shape=jax.ShapeDtypeStruct((n_pad, cout), jnp.bfloat16),
        compiler_params=_row_params(),
    )(x, w)


def propagate(p_pad, kcount, kidx, xw, bias, *, n_valid, tm, tk):
    n_pad = p_pad.shape[0]
    c = xw.shape[1]
    n_rt, nk = n_pad // tm, n_pad // tk

    def p_map(i, k, cnt, kid):
        return (i, kid[i, k])

    def xw_map(i, k, cnt, kid):
        return (kid[i, k], 0)

    if nk >= 3:   # deeper pipelining once the contraction is long enough
        p_spec = pl.BlockSpec((tm, tk), p_map, pipeline_mode=pl.Buffered(3))
    else:
        p_spec = pl.BlockSpec((tm, tk), p_map)

    grid_spec = pltpu.PrefetchScalarGridSpec(
        num_scalar_prefetch=2,
        grid=(n_rt, nk),
        in_specs=[
            p_spec,
            pl.BlockSpec((tk, c), xw_map),
            pl.BlockSpec((1, c), lambda i, k, cnt, kid: (0, 0)),
        ],
        out_specs=(
            pl.BlockSpec((tm, c), lambda i, k, cnt, kid: (i, 0)),
            pl.BlockSpec((8, c), lambda i, k, cnt, kid: (i, 0)),
        ),
        scratch_shapes=[pltpu.VMEM((tm, c), jnp.float32)],
    )

    a, stats = pl.pallas_call(
        functools.partial(_propagate_kernel, tm=tm, n_valid=n_valid),
        grid_spec=grid_spec,
        out_shape=(jax.ShapeDtypeStruct((n_pad, c), jnp.float32),
                   jax.ShapeDtypeStruct((n_rt * 8, c), jnp.float32)),
        compiler_params=pltpu.CompilerParams(
            dimension_semantics=("parallel", "arbitrary"),
            vmem_limit_bytes=_VMEM_LIMIT),
    )(kcount, kidx, p_pad, xw, bias)
    return a, stats


def batchnorm(a, mean, rstd, gamma, beta, residual=None, *, tm):
    n_pad, c = a.shape
    row_spec = pl.BlockSpec((tm, c), lambda i: (i, 0))
    vec_spec = pl.BlockSpec((1, c), lambda i: (0, 0))
    if residual is None:
        kernel = _bn_kernel
        in_specs = [row_spec] + [vec_spec] * 4
        args = (a, mean, rstd, gamma, beta)
    else:
        kernel = _bn_res_kernel
        in_specs = [row_spec] + [vec_spec] * 4 + [row_spec]
        args = (a, mean, rstd, gamma, beta, residual)
    return pl.pallas_call(
        kernel,
        grid=(n_pad // tm,),
        in_specs=in_specs,
        out_specs=row_spec,
        out_shape=jax.ShapeDtypeStruct((n_pad, c), jnp.float32),
        compiler_params=_row_params(),
    )(*args)


def linear(x, w, b, *, tm):
    n_pad, cin = x.shape
    cout = w.shape[1]
    return pl.pallas_call(
        _linear_kernel,
        grid=(n_pad // tm,),
        in_specs=[pl.BlockSpec((tm, cin), lambda i: (i, 0)),
                  pl.BlockSpec((cin, cout), lambda i: (0, 0)),
                  pl.BlockSpec((1, cout), lambda i: (0, 0))],
        out_specs=pl.BlockSpec((tm, cout), lambda i: (i, 0)),
        out_shape=jax.ShapeDtypeStruct((n_pad, cout), jnp.float32),
        compiler_params=_row_params(),
    )(x, w, b)


def bd_layer(p_pad, kcount, kidx, x, lp, *, n_valid, tm, tk, residual=None):
    """One BDLayer: GCNConv(mean) + LeakyReLU + BatchNorm1d (+ residual)."""
    xw = compute_xw(x, lp["w"], tm=tm)
    a, stats = propagate(p_pad, kcount, kidx, xw, lp["b"],
                         n_valid=n_valid, tm=tm, tk=tk)
    # Tiny reduction of the per-row-tile BN partials (XLA glue).
    st = stats.reshape(-1, 8, stats.shape[-1])
    s1 = jnp.sum(st[:, 0, :], axis=0, keepdims=True)
    s2 = jnp.sum(st[:, 1, :], axis=0, keepdims=True)
    mean = s1 / n_valid
    var = jnp.maximum(s2 / n_valid - mean * mean, 0.0)
    rstd = jax.lax.rsqrt(var + _BN_EPS)
    return batchnorm(a, mean, rstd, lp["gamma"], lp["beta"], residual, tm=tm)


# -----------------------------------------------------------------------------
# Graph preprocessing (dense P for GCNConv(aggr='mean') + block-skip tables)
# -----------------------------------------------------------------------------
def build_propagation_matrix(edge_index, num_nodes):
    src, dst = edge_index[0], edge_index[1]
    loops = jnp.arange(num_nodes, dtype=src.dtype)
    src = jnp.concatenate([src, loops])
    dst = jnp.concatenate([dst, loops])
    deg = jnp.zeros((num_nodes,), jnp.float32).at[dst].add(1.0)
    dinv = jax.lax.rsqrt(deg)           # deg >= 1 thanks to the self-loops
    norm = dinv[src] * dinv[dst]
    a = jnp.zeros((num_nodes, num_nodes), jnp.float32).at[dst, src].add(norm)
    return a / deg[:, None]             # aggr='mean'


def prepare_graph(edge_index, n_total, n_pad, tm, tk):
    """bf16 padded P plus the block-sparse skip tables (scalar prefetch)."""
    # TODO(synk): for very large meshes, replace the dense P with an edge-level
    # gather/scatter aggregation (per-row neighbour tables via scalar prefetch)
    # instead of only skipping all-zero (tm, tk) blocks.
    p = build_propagation_matrix(edge_index, n_total)
    p_pad = jnp.zeros((n_pad, n_pad), jnp.float32).at[:n_total, :n_total].set(p)
    n_rt, nk = n_pad // tm, n_pad // tk
    nz = jnp.abs(p_pad).reshape(n_rt, tm, nk, tk).sum(axis=(1, 3)) > 0
    count = jnp.maximum(nz.sum(axis=1), 1).astype(jnp.int32)
    order = jnp.argsort(jnp.logical_not(nz).astype(jnp.int32),
                        axis=1).astype(jnp.int32)   # stable: non-zero blocks first
    # Gated-off steps repeat the last valid block index -> no extra DMA.
    kpos = jnp.minimum(jnp.arange(nk, dtype=jnp.int32)[None, :],
                       count[:, None] - 1)
    kidx = jnp.take_along_axis(order, kpos, axis=1).astype(jnp.int32)
    return p_pad.astype(jnp.bfloat16), count, kidx


# -----------------------------------------------------------------------------
# Parameters (deterministic init, zero-padded to 128 channels)
# -----------------------------------------------------------------------------
def _pad_mat(w):
    out = jnp.zeros((C_PAD, C_PAD), jnp.float32)
    return out.at[:w.shape[0], :w.shape[1]].set(w)


def _pad_vec(v):
    out = jnp.zeros((1, C_PAD), jnp.float32)
    return out.at[0, :v.shape[0]].set(v)


def init_params(key, in_ch, out_ch, hidden_channels):
    down_dims = []
    cin = in_ch
    for h in hidden_channels:
        down_dims.append((cin, h))
        cin = h
    up_dims = [(hidden_channels[-1], hidden_channels[-1])]
    for i in range(1, len(hidden_channels)):
        up_dims.append((hidden_channels[-i], hidden_channels[-i - 1]))

    keys = jax.random.split(key, len(down_dims) + len(up_dims) + 1)

    def bd_params(k, ci, co):
        w = jax.random.normal(k, (ci, co), jnp.float32) * 0.1
        return {"w": _pad_mat(w),
                "b": _pad_vec(jnp.zeros((co,), jnp.float32)),
                "gamma": _pad_vec(jnp.ones((co,), jnp.float32)),
                "beta": _pad_vec(jnp.zeros((co,), jnp.float32))}

    down = [bd_params(keys[i], *d) for i, d in enumerate(down_dims)]
    up = [bd_params(keys[len(down_dims) + i], *d) for i, d in enumerate(up_dims)]
    w_lin = jax.random.normal(keys[-1], (hidden_channels[0], out_ch),
                              jnp.float32) * 0.1
    lin = {"w": _pad_mat(w_lin),
           "b": _pad_vec(jnp.zeros((out_ch,), jnp.float32))}
    return {"down": down, "up": up, "lin": lin}


# -----------------------------------------------------------------------------
# Forward
# -----------------------------------------------------------------------------
@functools.partial(jax.jit,
                   static_argnames=("batch", "num_nodes", "out_ch", "tm", "tk"))
def brain_surf_gcn_forward(params, x_pad, p_pad, kcount, kidx,
                           *, batch, num_nodes, out_ch, tm, tk):
    n_valid = batch * num_nodes
    x = x_pad
    res = []
    for lp in params["down"]:
        x = bd_layer(p_pad, kcount, kidx, x, lp, n_valid=n_valid, tm=tm, tk=tk)
        res.append(x)
    for i, lp in enumerate(params["up"]):
        x = bd_layer(p_pad, kcount, kidx, x, lp, n_valid=n_valid, tm=tm, tk=tk,
                     residual=res[-(i + 1)])
    y = linear(x, params["lin"]["w"], params["lin"]["b"], tm=tm)
    # Tiny epilogue (drop padding, reshape, transpose) stays in XLA.
    y = y[:n_valid, :out_ch].reshape(batch, num_nodes, out_ch)
    return jnp.transpose(y, (0, 2, 1))          # (batch, out_ch, num_nodes)


def reference_forward(params, x_pad, p_pad_bf16, *, batch, num_nodes, out_ch):
    """Plain-JAX reference mirroring the kernel's bf16 matmul rounding."""
    n_valid = batch * num_nodes

    def mm_bf16(a, b):
        return jnp.dot(a.astype(jnp.bfloat16), b.astype(jnp.bfloat16),
                       preferred_element_type=jnp.float32)

    def bd(x, lp, residual=None):
        xw = mm_bf16(x, lp["w"]).astype(jnp.bfloat16)
        h = mm_bf16(p_pad_bf16, xw) + lp["b"]
        a = jnp.where(h >= 0, h, _NEG_SLOPE * h)
        av = a[:n_valid]
        mean = jnp.mean(av, axis=0, keepdims=True)
        var = jnp.mean(jnp.square(av - mean), axis=0, keepdims=True)
        y = (a - mean) * jax.lax.rsqrt(var + _BN_EPS) * lp["gamma"] + lp["beta"]
        return y if residual is None else y + residual

    x = x_pad
    res = []
    for lp in params["down"]:
        x = bd(x, lp)
        res.append(x)
    for i, lp in enumerate(params["up"]):
        x = bd(x, lp, res[-(i + 1)])
    y = mm_bf16(x, params["lin"]["w"]) + params["lin"]["b"]
    y = y[:n_valid, :out_ch].reshape(batch, num_nodes, out_ch)
    return jnp.transpose(y, (0, 2, 1))


# -----------------------------------------------------------------------------
# Main
# -----------------------------------------------------------------------------
if __name__ == "__main__":
    in_ch, out_ch = 4, 3
    hidden_channels = [32, 32, 64, 64]
    batch, num_nodes = 2, 8
    n_total = batch * num_nodes

    n_pad = _round_up(max(n_total, 128), 128)
    tm, tk = _choose_tiles(n_pad)

    key = jax.random.PRNGKey(0)
    kx, kparam = jax.random.split(key)

    # data.x : (N_total, in_ch), zero-padded to (n_pad, 128)
    x = jax.random.normal(kx, (n_total, in_ch), jnp.float32)
    x_pad = jnp.zeros((n_pad, C_PAD), jnp.float32).at[:n_total, :in_ch].set(x)

    # Deterministic edge_index: a bidirectional ring within each graph.
    srcs, dsts = [], []
    for g in range(batch):
        off = g * num_nodes
        for i in range(num_nodes):
            j = (i + 1) % num_nodes
            srcs += [off + i, off + j]
            dsts += [off + j, off + i]
    edge_index = jnp.array([srcs, dsts], dtype=jnp.int32)  # (2, E)

    p_pad, kcount, kidx = prepare_graph(edge_index, n_total, n_pad, tm, tk)
    params = init_params(kparam, in_ch, out_ch, hidden_channels)

    out = brain_surf_gcn_forward(params, x_pad, p_pad, kcount, kidx,
                                 batch=batch, num_nodes=num_nodes,
                                 out_ch=out_ch, tm=tm, tk=tk)
    out = jax.block_until_ready(out)
    assert out.shape == (batch, out_ch, num_nodes), out.shape
    assert bool(jnp.all(jnp.isfinite(out)))

    ref = reference_forward(params, x_pad, p_pad,
                            batch=batch, num_nodes=num_nodes, out_ch=out_ch)
    ref = jax.block_until_ready(ref)
    err = float(jnp.max(jnp.abs(out - ref)))
    scale = float(jnp.max(jnp.abs(ref))) + 1.0
    assert err < 5e-2 * scale, f"max abs error vs reference: {err} (scale {scale})"
    print("KERNEL_OK")
</pallas_src>

<mosaic_0001>
module attributes {stable_mosaic.version = 11 : i64} {
  func.func @_xw_kernel(%arg0: i32, %arg1: memref<128x128xf32, #tpu.memory_space<vmem>>, %arg2: memref<128x128xf32, #tpu.memory_space<vmem>>, %arg3: memref<128x128xbf16, #tpu.memory_space<vmem>>) attributes {dimension_semantics = [#tpu.dimension_semantics<parallel>], iteration_bounds = array<i64: 1>, scalar_prefetch = 0 : i64, scratch_operands = 0 : i64, tpu.core_type = #tpu.core_type<tc>, window_params = [{transform_indices = @transform_0, window_bounds = array<i64: 128, 128>}, {pipeline_mode = #tpu.pipeline_mode<synchronous>, transform_indices = @transform_1, window_bounds = array<i64: 128, 128>}, {transform_indices = @transform_2, window_bounds = array<i64: 128, 128>}]} {
    %c0 = arith.constant 0 : index
    %c0_0 = arith.constant 0 : index
    %0 = vector.load %arg1[%c0, %c0_0] : memref<128x128xf32, #tpu.memory_space<vmem>>, vector<128x128xf32>
    %1 = arith.truncf %0 : vector<128x128xf32> to vector<128x128xbf16>
    %c0_1 = arith.constant 0 : index
    %c0_2 = arith.constant 0 : index
    %2 = vector.load %arg2[%c0_1, %c0_2] : memref<128x128xf32, #tpu.memory_space<vmem>>, vector<128x128xf32>
    %3 = arith.truncf %2 : vector<128x128xf32> to vector<128x128xbf16>
    %cst = arith.constant dense<0.000000e+00> : vector<128x128xf32>
    %4 = tpu.matmul %1, %3, %cst {dimension_numbers = #tpu.dot_dimension_numbers<[1], [0], [0], [1], [0, 0, 1, 1], [], []>} : vector<128x128xbf16>, vector<128x128xbf16>, vector<128x128xf32> -> vector<128x128xf32>
    %5 = arith.truncf %4 : vector<128x128xf32> to vector<128x128xbf16>
    %c0_3 = arith.constant 0 : index
    %c0_4 = arith.constant 0 : index
    %6 = vector.load %arg3[%c0_3, %c0_4] : memref<128x128xbf16, #tpu.memory_space<vmem>>, vector<128x128xbf16>
    tpu.vector_store %arg3[%c0_3, %c0_4], %5 {strides = array<i32>} : memref<128x128xbf16, #tpu.memory_space<vmem>>, vector<128x128xbf16>,
    return
  }
  func.func @transform_0(%arg0: i32) -> (i32, i32) {
    %c0_i32 = arith.constant 0 : i32
    %c0_i32_0 = arith.constant 0 : i32
    return %arg0, %c0_i32 : i32, i32
  }
  func.func @transform_1(%arg0: i32) -> (i32, i32) {
    %c0_i32 = arith.constant 0 : i32
    %c0_i32_0 = arith.constant 0 : i32
    %c0_i32_1 = arith.constant 0 : i32
    return %c0_i32, %c0_i32_0 : i32, i32
  }
  func.func @transform_2(%arg0: i32) -> (i32, i32) {
    %c0_i32 = arith.constant 0 : i32
    %c0_i32_0 = arith.constant 0 : i32
    return %arg0, %c0_i32 : i32, i32
  }
}

module attributes {stable_mosaic.version = 11 : i64} {
  func.func @_propagate_kernel(%arg0: i32, %arg1: i32, %arg2: memref<1xi32, #tpu.memory_space<smem>>, %arg3: memref<1x1xi32, #tpu.memory_space<smem>>, %arg4: memref<128x128xbf16, #tpu.memory_space<vmem>>, %arg5: memref<128x128xbf16, #tpu.memory_space<vmem>>, %arg6: memref<1x128xf32, #tpu.memory_space<vmem>>, %arg7: memref<128x128xf32, #tpu.memory_space<vmem>>, %arg8: memref<8x128xf32, #tpu.memory_space<vmem>>, %arg9: memref<128x128xf32, #tpu.memory_space<vmem>>) attributes {dimension_semantics = [#tpu.dimension_semantics<parallel>, #tpu.dimension_semantics<arbitrary>], iteration_bounds = array<i64: 1, 1>, scalar_prefetch = 2 : i64, scratch_operands = 1 : i64, tpu.core_type = #tpu.core_type<tc>, window_params = [{transform_indices = @transform_0, window_bounds = array<i64: 128, 128>}, {transform_indices = @transform_1, window_bounds = array<i64: 128, 128>}, {pipeline_mode = #tpu.pipeline_mode<synchronous>, transform_indices = @transform_2, window_bounds = array<i64: 1, 128>}, {transform_indices = @transform_3, window_bounds = array<i64: 128, 128>}, {transform_indices = @transform_4, window_bounds = array<i64: 8, 128>}]} {
    %c0_i32 = arith.constant 0 : i32
    %0 = arith.cmpi eq, %arg1, %c0_i32 : i32
    %1 = arith.extui %0 : i1 to i32
    %c0_i32_0 = arith.constant 0 : i32
    %2 = arith.cmpi ne, %1, %c0_i32_0 : i32
    scf.if %2 {
      %cst = arith.constant 0.000000e+00 : f32
      %11 = vector.broadcast %cst : f32 to vector<128x128xf32>
      %c0 = arith.constant 0 : index
      %c0_4 = arith.constant 0 : index
      %12 = vector.load %arg9[%c0, %c0_4] : memref<128x128xf32, #tpu.memory_space<vmem>>, vector<128x128xf32>
      tpu.vector_store %arg9[%c0, %c0_4], %11 {strides = array<i32>} : memref<128x128xf32, #tpu.memory_space<vmem>>, vector<128x128xf32>,
    } else {
    }
    %3 = arith.index_cast %arg0 : i32 to index
    %4 = memref.load %arg2[%3] : memref<1xi32, #tpu.memory_space<smem>>
    %5 = arith.cmpi slt, %arg1, %4 : i32
    %6 = arith.extui %5 : i1 to i32
    %c0_i32_1 = arith.constant 0 : i32
    %7 = arith.cmpi ne, %6, %c0_i32_1 : i32
    scf.if %7 {
      %c0 = arith.constant 0 : index
      %c0_4 = arith.constant 0 : index
      %11 = vector.load %arg9[%c0, %c0_4] : memref<128x128xf32, #tpu.memory_space<vmem>>, vector<128x128xf32>
      %c0_5 = arith.constant 0 : index
      %c0_6 = arith.constant 0 : index
      %12 = vector.load %arg4[%c0_5, %c0_6] : memref<128x128xbf16, #tpu.memory_space<vmem>>, vector<128x128xbf16>
      %c0_7 = arith.constant 0 : index
      %c0_8 = arith.constant 0 : index
      %13 = vector.load %arg5[%c0_7, %c0_8] : memref<128x128xbf16, #tpu.memory_space<vmem>>, vector<128x128xbf16>
      %cst = arith.constant dense<0.000000e+00> : vector<128x128xf32>
      %14 = tpu.matmul %12, %13, %cst {dimension_numbers = #tpu.dot_dimension_numbers<[1], [0], [0], [1], [0, 0, 1, 1], [], []>} : vector<128x128xbf16>, vector<128x128xbf16>, vector<128x128xf32> -> vector<128x128xf32>
      %15 = arith.addf %11, %14 : vector<128x128xf32>
      %c0_9 = arith.constant 0 : index
      %c0_10 = arith.constant 0 : index
      %16 = vector.load %arg9[%c0_9, %c0_10] : memref<128x128xf32, #tpu.memory_space<vmem>>, vector<128x128xf32>
      tpu.vector_store %arg9[%c0_9, %c0_10], %15 {strides = array<i32>} : memref<128x128xf32, #tpu.memory_space<vmem>>, vector<128x128xf32>,
    } else {
    }
    %c0_i32_2 = arith.constant 0 : i32
    %8 = arith.cmpi eq, %arg1, %c0_i32_2 : i32
    %9 = arith.extui %8 : i1 to i32
    %c0_i32_3 = arith.constant 0 : i32
    %10 = arith.cmpi ne, %9, %c0_i32_3 : i32
    scf.if %10 {
      %c0 = arith.constant 0 : index
      %c0_4 = arith.constant 0 : index
      %11 = vector.load %arg9[%c0, %c0_4] : memref<128x128xf32, #tpu.memory_space<vmem>>, vector<128x128xf32>
      %c0_5 = arith.constant 0 : index
      %c0_6 = arith.constant 0 : index
      %12 = vector.load %arg6[%c0_5, %c0_6] : memref<1x128xf32, #tpu.memory_space<vmem>>, vector<1x128xf32>
      %13 = vector.broadcast %12 : vector<1x128xf32> to vector<128x128xf32>
      %14 = arith.addf %11, %13 : vector<128x128xf32>
      %cst = arith.constant 0.000000e+00 : f32
      %15 = vector.broadcast %cst : f32 to vector<128x128xf32>
      %16 = arith.cmpf oge, %14, %15 : vector<128x128xf32>
      %cst_7 = arith.constant 0.00999999977 : f32
      %17 = vector.broadcast %cst_7 : f32 to vector<128x128xf32>
      %18 = arith.mulf %17, %14 : vector<128x128xf32>
      %19 = arith.select %16, %14, %18 : vector<128x128xi1>, vector<128x128xf32>
      %c0_8 = arith.constant 0 : index
      %c0_9 = arith.constant 0 : index
      %20 = vector.load %arg7[%c0_8, %c0_9] : memref<128x128xf32, #tpu.memory_space<vmem>>, vector<128x128xf32>
      tpu.vector_store %arg7[%c0_8, %c0_9], %19 {strides = array<i32>} : memref<128x128xf32, #tpu.memory_space<vmem>>, vector<128x128xf32>,
      %c128_i32 = arith.constant 128 : i32
      %21 = arith.muli %arg0, %c128_i32 : i32
      %22 = tpu.iota {dimensions = array<i32: 0>} : vector<128x128xi32>
      %23 = vector.broadcast %21 : i32 to vector<128x128xi32>
      %24 = arith.addi %23, %22 : vector<128x128xi32>
      %c16_i32 = arith.constant 16 : i32
      %25 = vector.broadcast %c16_i32 : i32 to vector<128x128xi32>
      %26 = arith.cmpi slt, %24, %25 : vector<128x128xi32>
      %cst_10 = arith.constant 0.000000e+00 : f32
      %27 = vector.broadcast %cst_10 : f32 to vector<128x128xf32>
      %28 = arith.select %26, %19, %27 : vector<128x128xi1>, vector<128x128xf32>
      %cst_11 = arith.constant dense<0.000000e+00> : vector<128xf32>
      %29 = vector.multi_reduction <add>, %28, %cst_11 [0] : vector<128x128xf32> to vector<128xf32>
      %30 = vector.shape_cast %29 : vector<128xf32> to vector<1x128xf32>
      %31 = arith.mulf %28, %28 : vector<128x128xf32>
      %cst_12 = arith.constant dense<0.000000e+00> : vector<128xf32>
      %32 = vector.multi_reduction <add>, %31, %cst_12 [0] : vector<128x128xf32> to vector<128xf32>
      %33 = vector.shape_cast %32 : vector<128xf32> to vector<1x128xf32>
      %34 = tpu.iota {dimensions = array<i32: 0>} : vector<8x128xi32>
      %c0_i32_13 = arith.constant 0 : i32
      %35 = vector.broadcast %c0_i32_13 : i32 to vector<8x128xi32>
      %36 = arith.cmpi eq, %34, %35 : vector<8x128xi32>
      %cst_14 = arith.constant 0.000000e+00 : f32
      %37 = vector.shape_cast %30 : vector<1x128xf32> to vector<1x128xf32>
      %38 = vector.broadcast %37 : vector<1x128xf32> to vector<8x128xf32>
      %39 = vector.broadcast %cst_14 : f32 to vector<8x128xf32>
      %40 = arith.select %36, %38, %39 : vector<8x128xi1>, vector<8x128xf32>
      %c1_i32 = arith.constant 1 : i32
      %41 = vector.broadcast %c1_i32 : i32 to vector<8x128xi32>
      %42 = arith.cmpi eq, %34, %41 : vector<8x128xi32>
      %cst_15 = arith.constant 0.000000e+00 : f32
      %43 = vector.shape_cast %33 : vector<1x128xf32> to vector<1x128xf32>
      %44 = vector.broadcast %43 : vector<1x128xf32> to vector<8x128xf32>
      %45 = vector.broadcast %cst_15 : f32 to vector<8x128xf32>
      %46 = arith.select %42, %44, %45 : vector<8x128xi1>, vector<8x128xf32>
      %47 = arith.addf %40, %46 : vector<8x128xf32>
      %c0_16 = arith.constant 0 : index
      %c0_17 = arith.constant 0 : index
      %48 = vector.load %arg8[%c0_16, %c0_17] : memref<8x128xf32, #tpu.memory_space<vmem>>, vector<8x128xf32>
      tpu.vector_store %arg8[%c0_16, %c0_17], %47 {strides = array<i32>} : memref<8x128xf32, #tpu.memory_space<vmem>>, vector<8x128xf32>,
    } else {
    }
    return
  }
  func.func @transform_0(%arg0: i32, %arg1: i32, %arg2: memref<1xi32, #tpu.memory_space<smem>>, %arg3: memref<1x1xi32, #tpu.memory_space<smem>>) -> (i32, i32) {
    %0 = arith.index_cast %arg0 : i32 to index
    %1 = arith.index_cast %arg1 : i32 to index
    %2 = memref.load %arg3[%0, %1] : memref<1x1xi32, #tpu.memory_space<smem>>
    %c0_i32 = arith.constant 0 : i32
    return %arg0, %2 : i32, i32
  }
  func.func @transform_1(%arg0: i32, %arg1: i32, %arg2: memref<1xi32, #tpu.memory_space<smem>>, %arg3: memref<1x1xi32, #tpu.memory_space<smem>>) -> (i32, i32) {
    %0 = arith.index_cast %arg0 : i32 to index
    %1 = arith.index_cast %arg1 : i32 to index
    %2 = memref.load %arg3[%0, %1] : memref<1x1xi32, #tpu.memory_space<smem>>
    %c0_i32 = arith.constant 0 : i32
    %c0_i32_0 = arith.constant 0 : i32
    return %2, %c0_i32 : i32, i32
  }
  func.func @transform_2(%arg0: i32, %arg1: i32, %arg2: memref<1xi32, #tpu.memory_space<smem>>, %arg3: memref<1x1xi32, #tpu.memory_space<smem>>) -> (i32, i32) {
    %c0_i32 = arith.constant 0 : i32
    %c0_i32_0 = arith.constant 0 : i32
    %c0_i32_1 = arith.constant 0 : i32
    return %c0_i32, %c0_i32_0 : i32, i32
  }
  func.func @transform_3(%arg0: i32, %arg1: i32, %arg2: memref<1xi32, #tpu.memory_space<smem>>, %arg3: memref<1x1xi32, #tpu.memory_space<smem>>) -> (i32, i32) {
    %c0_i32 = arith.constant 0 : i32
    %c0_i32_0 = arith.constant 0 : i32
    return %arg0, %c0_i32 : i32, i32
  }
  func.func @transform_4(%arg0: i32, %arg1: i32, %arg2: memref<1xi32, #tpu.memory_space<smem>>, %arg3: memref<1x1xi32, #tpu.memory_space<smem>>) -> (i32, i32) {
    %c0_i32 = arith.constant 0 : i32
    %c0_i32_0 = arith.constant 0 : i32
    return %arg0, %c0_i32 : i32, i32
  }
}

module attributes {stable_mosaic.version = 11 : i64} {
  func.func @_bn_kernel(%arg0: i32, %arg1: memref<128x128xf32, #tpu.memory_space<vmem>>, %arg2: memref<1x128xf32, #tpu.memory_space<vmem>>, %arg3: memref<1x128xf32, #tpu.memory_space<vmem>>, %arg4: memref<1x128xf32, #tpu.memory_space<vmem>>, %arg5: memref<1x128xf32, #tpu.memory_space<vmem>>, %arg6: memref<128x128xf32, #tpu.memory_space<vmem>>) attributes {dimension_semantics = [#tpu.dimension_semantics<parallel>], iteration_bounds = array<i64: 1>, scalar_prefetch = 0 : i64, scratch_operands = 0 : i64, tpu.core_type = #tpu.core_type<tc>, window_params = [{transform_indices = @transform_0, window_bounds = array<i64: 128, 128>}, {pipeline_mode = #tpu.pipeline_mode<synchronous>, transform_indices = @transform_1, window_bounds = array<i64: 1, 128>}, {pipeline_mode = #tpu.pipeline_mode<synchronous>, transform_indices = @transform_2, window_bounds = array<i64: 1, 128>}, {pipeline_mode = #tpu.pipeline_mode<synchronous>, transform_indices = @transform_3, window_bounds = array<i64: 1, 128>}, {pipeline_mode = #tpu.pipeline_mode<synchronous>, transform_indices = @transform_4, window_bounds = array<i64: 1, 128>}, {transform_indices = @transform_5, window_bounds = array<i64: 128, 128>}]} {
    %c0 = arith.constant 0 : index
    %c0_0 = arith.constant 0 : index
    %0 = vector.load %arg1[%c0, %c0_0] : memref<128x128xf32, #tpu.memory_space<vmem>>, vector<128x128xf32>
    %c0_1 = arith.constant 0 : index
    %c0_2 = arith.constant 0 : index
    %1 = vector.load %arg2[%c0_1, %c0_2] : memref<1x128xf32, #tpu.memory_space<vmem>>, vector<1x128xf32>
    %2 = vector.broadcast %1 : vector<1x128xf32> to vector<128x128xf32>
    %3 = arith.subf %0, %2 : vector<128x128xf32>
    %c0_3 = arith.constant 0 : index
    %c0_4 = arith.constant 0 : index
    %4 = vector.load %arg3[%c0_3, %c0_4] : memref<1x128xf32, #tpu.memory_space<vmem>>, vector<1x128xf32>
    %5 = vector.broadcast %4 : vector<1x128xf32> to vector<128x128xf32>
    %6 = arith.mulf %3, %5 : vector<128x128xf32>
    %c0_5 = arith.constant 0 : index
    %c0_6 = arith.constant 0 : index
    %7 = vector.load %arg4[%c0_5, %c0_6] : memref<1x128xf32, #tpu.memory_space<vmem>>, vector<1x128xf32>
    %8 = vector.broadcast %7 : vector<1x128xf32> to vector<128x128xf32>
    %9 = arith.mulf %6, %8 : vector<128x128xf32>
    %c0_7 = arith.constant 0 : index
    %c0_8 = arith.constant 0 : index
    %10 = vector.load %arg5[%c0_7, %c0_8] : memref<1x128xf32, #tpu.memory_space<vmem>>, vector<1x128xf32>
    %11 = vector.broadcast %10 : vector<1x128xf32> to vector<128x128xf32>
    %12 = arith.addf %9, %11 : vector<128x128xf32>
    %c0_9 = arith.constant 0 : index
    %c0_10 = arith.constant 0 : index
    %13 = vector.load %arg6[%c0_9, %c0_10] : memref<128x128xf32, #tpu.memory_space<vmem>>, vector<128x128xf32>
    tpu.vector_store %arg6[%c0_9, %c0_10], %12 {strides = array<i32>} : memref<128x128xf32, #tpu.memory_space<vmem>>, vector<128x128xf32>,
    return
  }
  func.func @transform_0(%arg0: i32) -> (i32, i32) {
    %c0_i32 = arith.constant 0 : i32
    %c0_i32_0 = arith.constant 0 : i32
    return %arg0, %c0_i32 : i32, i32
  }
  func.func @transform_1(%arg0: i32) -> (i32, i32) {
    %c0_i32 = arith.constant 0 : i32
    %c0_i32_0 = arith.constant 0 : i32
    %c0_i32_1 = arith.constant 0 : i32
    return %c0_i32, %c0_i32_0 : i32, i32
  }
  func.func @transform_2(%arg0: i32) -> (i32, i32) {
    %c0_i32 = arith.constant 0 : i32
    %c0_i32_0 = arith.constant 0 : i32
    %c0_i32_1 = arith.constant 0 : i32
    return %c0_i32, %c0_i32_0 : i32, i32
  }
  func.func @transform_3(%arg0: i32) -> (i32, i32) {
    %c0_i32 = arith.constant 0 : i32
    %c0_i32_0 = arith.constant 0 : i32
    %c0_i32_1 = arith.constant 0 : i32
    return %c0_i32, %c0_i32_0 : i32, i32
  }
  func.func @transform_4(%arg0: i32) -> (i32, i32) {
    %c0_i32 = arith.constant 0 : i32
    %c0_i32_0 = arith.constant 0 : i32
    %c0_i32_1 = arith.constant 0 : i32
    return %c0_i32, %c0_i32_0 : i32, i32
  }
  func.func @transform_5(%arg0: i32) -> (i32, i32) {
    %c0_i32 = arith.constant 0 : i32
    %c0_i32_0 = arith.constant 0 : i32
    return %arg0, %c0_i32 : i32, i32
  }
}

module attributes {stable_mosaic.version = 11 : i64} {
  func.func @_xw_kernel(%arg0: i32, %arg1: memref<128x128xf32, #tpu.memory_space<vmem>>, %arg2: memref<128x128xf32, #tpu.memory_space<vmem>>, %arg3: memref<128x128xbf16, #tpu.memory_space<vmem>>) attributes {dimension_semantics = [#tpu.dimension_semantics<parallel>], iteration_bounds = array<i64: 1>, scalar_prefetch = 0 : i64, scratch_operands = 0 : i64, tpu.core_type = #tpu.core_type<tc>, window_params = [{transform_indices = @transform_0, window_bounds = array<i64: 128, 128>}, {pipeline_mode = #tpu.pipeline_mode<synchronous>, transform_indices = @transform_1, window_bounds = array<i64: 128, 128>}, {transform_indices = @transform_2, window_bounds = array<i64: 128, 128>}]} {
    %c0 = arith.constant 0 : index
    %c0_0 = arith.constant 0 : index
    %0 = vector.load %arg1[%c0, %c0_0] : memref<128x128xf32, #tpu.memory_space<vmem>>, vector<128x128xf32>
    %1 = arith.truncf %0 : vector<128x128xf32> to vector<128x128xbf16>
    %c0_1 = arith.constant 0 : index
    %c0_2 = arith.constant 0 : index
    %2 = vector.load %arg2[%c0_1, %c0_2] : memref<128x128xf32, #tpu.memory_space<vmem>>, vector<128x128xf32>
    %3 = arith.truncf %2 : vector<128x128xf32> to vector<128x128xbf16>
    %cst = arith.constant dense<0.000000e+00> : vector<128x128xf32>
    %4 = tpu.matmul %1, %3, %cst {dimension_numbers = #tpu.dot_dimension_numbers<[1], [0], [0], [1], [0, 0, 1, 1], [], []>} : vector<128x128xbf16>, vector<128x128xbf16>, vector<128x128xf32> -> vector<128x128xf32>
    %5 = arith.truncf %4 : vector<128x128xf32> to vector<128x128xbf16>
    %c0_3 = arith.constant 0 : index
    %c0_4 = arith.constant 0 : index
    %6 = vector.load %arg3[%c0_3, %c0_4] : memref<128x128xbf16, #tpu.memory_space<vmem>>, vector<128x128xbf16>
    tpu.vector_store %arg3[%c0_3, %c0_4], %5 {strides = array<i32>} : memref<128x128xbf16, #tpu.memory_space<vmem>>, vector<128x128xbf16>,
    return
  }
  func.func @transform_0(%arg0: i32) -> (i32, i32) {
    %c0_i32 = arith.constant 0 : i32
    %c0_i32_0 = arith.constant 0 : i32
    return %arg0, %c0_i32 : i32, i32
  }
  func.func @transform_1(%arg0: i32) -> (i32, i32) {
    %c0_i32 = arith.constant 0 : i32
    %c0_i32_0 = arith.constant 0 : i32
    %c0_i32_1 = arith.constant 0 : i32
    return %c0_i32, %c0_i32_0 : i32, i32
  }
  func.func @transform_2(%arg0: i32) -> (i32, i32) {
    %c0_i32 = arith.constant 0 : i32
    %c0_i32_0 = arith.constant 0 : i32
    return %arg0, %c0_i32 : i32, i32
  }
}

module attributes {stable_mosaic.version = 11 : i64} {
  func.func @_bn_kernel(%arg0: i32, %arg1: memref<128x128xf32, #tpu.memory_space<vmem>>, %arg2: memref<1x128xf32, #tpu.memory_space<vmem>>, %arg3: memref<1x128xf32, #tpu.memory_space<vmem>>, %arg4: memref<1x128xf32, #tpu.memory_space<vmem>>, %arg5: memref<1x128xf32, #tpu.memory_space<vmem>>, %arg6: memref<128x128xf32, #tpu.memory_space<vmem>>) attributes {dimension_semantics = [#tpu.dimension_semantics<parallel>], iteration_bounds = array<i64: 1>, scalar_prefetch = 0 : i64, scratch_operands = 0 : i64, tpu.core_type = #tpu.core_type<tc>, window_params = [{transform_indices = @transform_0, window_bounds = array<i64: 128, 128>}, {pipeline_mode = #tpu.pipeline_mode<synchronous>, transform_indices = @transform_1, window_bounds = array<i64: 1, 128>}, {pipeline_mode = #tpu.pipeline_mode<synchronous>, transform_indices = @transform_2, window_bounds = array<i64: 1, 128>}, {pipeline_mode = #tpu.pipeline_mode<synchronous>, transform_indices = @transform_3, window_bounds = array<i64: 1, 128>}, {pipeline_mode = #tpu.pipeline_mode<synchronous>, transform_indices = @transform_4, window_bounds = array<i64: 1, 128>}, {transform_indices = @transform_5, window_bounds = array<i64: 128, 128>}]} {
    %c0 = arith.constant 0 : index
    %c0_0 = arith.constant 0 : index
    %0 = vector.load %arg1[%c0, %c0_0] : memref<128x128xf32, #tpu.memory_space<vmem>>, vector<128x128xf32>
    %c0_1 = arith.constant 0 : index
    %c0_2 = arith.constant 0 : index
    %1 = vector.load %arg2[%c0_1, %c0_2] : memref<1x128xf32, #tpu.memory_space<vmem>>, vector<1x128xf32>
    %2 = vector.broadcast %1 : vector<1x128xf32> to vector<128x128xf32>
    %3 = arith.subf %0, %2 : vector<128x128xf32>
    %c0_3 = arith.constant 0 : index
    %c0_4 = arith.constant 0 : index
    %4 = vector.load %arg3[%c0_3, %c0_4] : memref<1x128xf32, #tpu.memory_space<vmem>>, vector<1x128xf32>
    %5 = vector.broadcast %4 : vector<1x128xf32> to vector<128x128xf32>
    %6 = arith.mulf %3, %5 : vector<128x128xf32>
    %c0_5 = arith.constant 0 : index
    %c0_6 = arith.constant 0 : index
    %7 = vector.load %arg4[%c0_5, %c0_6] : memref<1x128xf32, #tpu.memory_space<vmem>>, vector<1x128xf32>
    %8 = vector.broadcast %7 : vector<1x128xf32> to vector<128x128xf32>
    %9 = arith.mulf %6, %8 : vector<128x128xf32>
    %c0_7 = arith.constant 0 : index
    %c0_8 = arith.constant 0 : index
    %10 = vector.load %arg5[%c0_7, %c0_8] : memref<1x128xf32, #tpu.memory_space<vmem>>, vector<1x128xf32>
    %11 = vector.broadcast %10 : vector<1x128xf32> to vector<128x128xf32>
    %12 = arith.addf %9, %11 : vector<128x128xf32>
    %c0_9 = arith.constant 0 : index
    %c0_10 = arith.constant 0 : index
    %13 = vector.load %arg6[%c0_9, %c0_10] : memref<128x128xf32, #tpu.memory_space<vmem>>, vector<128x128xf32>
    tpu.vector_store %arg6[%c0_9, %c0_10], %12 {strides = array<i32>} : memref<128x128xf32, #tpu.memory_space<vmem>>, vector<128x128xf32>,
    return
  }
  func.func @transform_0(%arg0: i32) -> (i32, i32) {
    %c0_i32 = arith.constant 0 : i32
    %c0_i32_0 = arith.constant 0 : i32
    return %arg0, %c0_i32 : i32, i32
  }
  func.func @transform_1(%arg0: i32) -> (i32, i32) {
    %c0_i32 = arith.constant 0 : i32
    %c0_i32_0 = arith.constant 0 : i32
    %c0_i32_1 = arith.constant 0 : i32
    return %c0_i32, %c0_i32_0 : i32, i32
  }
  func.func @transform_2(%arg0: i32) -> (i32, i32) {
    %c0_i32 = arith.constant 0 : i32
    %c0_i32_0 = arith.constant 0 : i32
    %c0_i32_1 = arith.constant 0 : i32
    return %c0_i32, %c0_i32_0 : i32, i32
  }
  func.func @transform_3(%arg0: i32) -> (i32, i32) {
    %c0_i32 = arith.constant 0 : i32
    %c0_i32_0 = arith.constant 0 : i32
    %c0_i32_1 = arith.constant 0 : i32
    return %c0_i32, %c0_i32_0 : i32, i32
  }
  func.func @transform_4(%arg0: i32) -> (i32, i32) {
    %c0_i32 = arith.constant 0 : i32
    %c0_i32_0 = arith.constant 0 : i32
    %c0_i32_1 = arith.constant 0 : i32
    return %c0_i32, %c0_i32_0 : i32, i32
  }
  func.func @transform_5(%arg0: i32) -> (i32, i32) {
    %c0_i32 = arith.constant 0 : i32
    %c0_i32_0 = arith.constant 0 : i32
    return %arg0, %c0_i32 : i32, i32
  }
}

module attributes {stable_mosaic.version = 11 : i64} {
  func.func @_propagate_kernel(%arg0: i32, %arg1: i32, %arg2: memref<1xi32, #tpu.memory_space<smem>>, %arg3: memref<1x1xi32, #tpu.memory_space<smem>>, %arg4: memref<128x128xbf16, #tpu.memory_space<vmem>>, %arg5: memref<128x128xbf16, #tpu.memory_space<vmem>>, %arg6: memref<1x128xf32, #tpu.memory_space<vmem>>, %arg7: memref<128x128xf32, #tpu.memory_space<vmem>>, %arg8: memref<8x128xf32, #tpu.memory_space<vmem>>, %arg9: memref<128x128xf32, #tpu.memory_space<vmem>>) attributes {dimension_semantics = [#tpu.dimension_semantics<parallel>, #tpu.dimension_semantics<arbitrary>], iteration_bounds = array<i64: 1, 1>, scalar_prefetch = 2 : i64, scratch_operands = 1 : i64, tpu.core_type = #tpu.core_type<tc>, window_params = [{transform_indices = @transform_0, window_bounds = array<i64: 128, 128>}, {transform_indices = @transform_1, window_bounds = array<i64: 128, 128>}, {pipeline_mode = #tpu.pipeline_mode<synchronous>, transform_indices = @transform_2, window_bounds = array<i64: 1, 128>}, {transform_indices = @transform_3, window_bounds = array<i64: 128, 128>}, {transform_indices = @transform_4, window_bounds = array<i64: 8, 128>}]} {
    %c0_i32 = arith.constant 0 : i32
    %0 = arith.cmpi eq, %arg1, %c0_i32 : i32
    %1 = arith.extui %0 : i1 to i32
    %c0_i32_0 = arith.constant 0 : i32
    %2 = arith.cmpi ne, %1, %c0_i32_0 : i32
    scf.if %2 {
      %cst = arith.constant 0.000000e+00 : f32
      %11 = vector.broadcast %cst : f32 to vector<128x128xf32>
      %c0 = arith.constant 0 : index
      %c0_4 = arith.constant 0 : index
      %12 = vector.load %arg9[%c0, %c0_4] : memref<128x128xf32, #tpu.memory_space<vmem>>, vector<128x128xf32>
      tpu.vector_store %arg9[%c0, %c0_4], %11 {strides = array<i32>} : memref<128x128xf32, #tpu.memory_space<vmem>>, vector<128x128xf32>,
    } else {
    }
    %3 = arith.index_cast %arg0 : i32 to index
    %4 = memref.load %arg2[%3] : memref<1xi32, #tpu.memory_space<smem>>
    %5 = arith.cmpi slt, %arg1, %4 : i32
    %6 = arith.extui %5 : i1 to i32
    %c0_i32_1 = arith.constant 0 : i32
    %7 = arith.cmpi ne, %6, %c0_i32_1 : i32
    scf.if %7 {
      %c0 = arith.constant 0 : index
      %c0_4 = arith.constant 0 : index
      %11 = vector.load %arg9[%c0, %c0_4] : memref<128x128xf32, #tpu.memory_space<vmem>>, vector<128x128xf32>
      %c0_5 = arith.constant 0 : index
      %c0_6 = arith.constant 0 : index
      %12 = vector.load %arg4[%c0_5, %c0_6] : memref<128x128xbf16, #tpu.memory_space<vmem>>, vector<128x128xbf16>
      %c0_7 = arith.constant 0 : index
      %c0_8 = arith.constant 0 : index
      %13 = vector.load %arg5[%c0_7, %c0_8] : memref<128x128xbf16, #tpu.memory_space<vmem>>, vector<128x128xbf16>
      %cst = arith.constant dense<0.000000e+00> : vector<128x128xf32>
      %14 = tpu.matmul %12, %13, %cst {dimension_numbers = #tpu.dot_dimension_numbers<[1], [0], [0], [1], [0, 0, 1, 1], [], []>} : vector<128x128xbf16>, vector<128x128xbf16>, vector<128x128xf32> -> vector<128x128xf32>
      %15 = arith.addf %11, %14 : vector<128x128xf32>
      %c0_9 = arith.constant 0 : index
      %c0_10 = arith.constant 0 : index
      %16 = vector.load %arg9[%c0_9, %c0_10] : memref<128x128xf32, #tpu.memory_space<vmem>>, vector<128x128xf32>
      tpu.vector_store %arg9[%c0_9, %c0_10], %15 {strides = array<i32>} : memref<128x128xf32, #tpu.memory_space<vmem>>, vector<128x128xf32>,
    } else {
    }
    %c0_i32_2 = arith.constant 0 : i32
    %8 = arith.cmpi eq, %arg1, %c0_i32_2 : i32
    %9 = arith.extui %8 : i1 to i32
    %c0_i32_3 = arith.constant 0 : i32
    %10 = arith.cmpi ne, %9, %c0_i32_3 : i32
    scf.if %10 {
      %c0 = arith.constant 0 : index
      %c0_4 = arith.constant 0 : index
      %11 = vector.load %arg9[%c0, %c0_4] : memref<128x128xf32, #tpu.memory_space<vmem>>, vector<128x128xf32>
      %c0_5 = arith.constant 0 : index
      %c0_6 = arith.constant 0 : index
      %12 = vector.load %arg6[%c0_5, %c0_6] : memref<1x128xf32, #tpu.memory_space<vmem>>, vector<1x128xf32>
      %13 = vector.broadcast %12 : vector<1x128xf32> to vector<128x128xf32>
      %14 = arith.addf %11, %13 : vector<128x128xf32>
      %cst = arith.constant 0.000000e+00 : f32
      %15 = vector.broadcast %cst : f32 to vector<128x128xf32>
      %16 = arith.cmpf oge, %14, %15 : vector<128x128xf32>
      %cst_7 = arith.constant 0.00999999977 : f32
      %17 = vector.broadcast %cst_7 : f32 to vector<128x128xf32>
      %18 = arith.mulf %17, %14 : vector<128x128xf32>
      %19 = arith.select %16, %14, %18 : vector<128x128xi1>, vector<128x128xf32>
      %c0_8 = arith.constant 0 : index
      %c0_9 = arith.constant 0 : index
      %20 = vector.load %arg7[%c0_8, %c0_9] : memref<128x128xf32, #tpu.memory_space<vmem>>, vector<128x128xf32>
      tpu.vector_store %arg7[%c0_8, %c0_9], %19 {strides = array<i32>} : memref<128x128xf32, #tpu.memory_space<vmem>>, vector<128x128xf32>,
      %c128_i32 = arith.constant 128 : i32
      %21 = arith.muli %arg0, %c128_i32 : i32
      %22 = tpu.iota {dimensions = array<i32: 0>} : vector<128x128xi32>
      %23 = vector.broadcast %21 : i32 to vector<128x128xi32>
      %24 = arith.addi %23, %22 : vector<128x128xi32>
      %c16_i32 = arith.constant 16 : i32
      %25 = vector.broadcast %c16_i32 : i32 to vector<128x128xi32>
      %26 = arith.cmpi slt, %24, %25 : vector<128x128xi32>
      %cst_10 = arith.constant 0.000000e+00 : f32
      %27 = vector.broadcast %cst_10 : f32 to vector<128x128xf32>
      %28 = arith.select %26, %19, %27 : vector<128x128xi1>, vector<128x128xf32>
      %cst_11 = arith.constant dense<0.000000e+00> : vector<128xf32>
      %29 = vector.multi_reduction <add>, %28, %cst_11 [0] : vector<128x128xf32> to vector<128xf32>
      %30 = vector.shape_cast %29 : vector<128xf32> to vector<1x128xf32>
      %31 = arith.mulf %28, %28 : vector<128x128xf32>
      %cst_12 = arith.constant dense<0.000000e+00> : vector<128xf32>
      %32 = vector.multi_reduction <add>, %31, %cst_12 [0] : vector<128x128xf32> to vector<128xf32>
      %33 = vector.shape_cast %32 : vector<128xf32> to vector<1x128xf32>
      %34 = tpu.iota {dimensions = array<i32: 0>} : vector<8x128xi32>
      %c0_i32_13 = arith.constant 0 : i32
      %35 = vector.broadcast %c0_i32_13 : i32 to vector<8x128xi32>
      %36 = arith.cmpi eq, %34, %35 : vector<8x128xi32>
      %cst_14 = arith.constant 0.000000e+00 : f32
      %37 = vector.shape_cast %30 : vector<1x128xf32> to vector<1x128xf32>
      %38 = vector.broadcast %37 : vector<1x128xf32> to vector<8x128xf32>
      %39 = vector.broadcast %cst_14 : f32 to vector<8x128xf32>
      %40 = arith.select %36, %38, %39 : vector<8x128xi1>, vector<8x128xf32>
      %c1_i32 = arith.constant 1 : i32
      %41 = vector.broadcast %c1_i32 : i32 to vector<8x128xi32>
      %42 = arith.cmpi eq, %34, %41 : vector<8x128xi32>
      %cst_15 = arith.constant 0.000000e+00 : f32
      %43 = vector.shape_cast %33 : vector<1x128xf32> to vector<1x128xf32>
      %44 = vector.broadcast %43 : vector<1x128xf32> to vector<8x128xf32>
      %45 = vector.broadcast %cst_15 : f32 to vector<8x128xf32>
      %46 = arith.select %42, %44, %45 : vector<8x128xi1>, vector<8x128xf32>
      %47 = arith.addf %40, %46 : vector<8x128xf32>
      %c0_16 = arith.constant 0 : index
      %c0_17 = arith.constant 0 : index
      %48 = vector.load %arg8[%c0_16, %c0_17] : memref<8x128xf32, #tpu.memory_space<vmem>>, vector<8x128xf32>
      tpu.vector_store %arg8[%c0_16, %c0_17], %47 {strides = array<i32>} : memref<8x128xf32, #tpu.memory_space<vmem>>, vector<8x128xf32>,
    } else {
    }
    return
  }
  func.func @transform_0(%arg0: i32, %arg1: i32, %arg2: memref<1xi32, #tpu.memory_space<smem>>, %arg3: memref<1x1xi32, #tpu.memory_space<smem>>) -> (i32, i32) {
    %0 = arith.index_cast %arg0 : i32 to index
    %1 = arith.index_cast %arg1 : i32 to index
    %2 = memref.load %arg3[%0, %1] : memref<1x1xi32, #tpu.memory_space<smem>>
    %c0_i32 = arith.constant 0 : i32
    return %arg0, %2 : i32, i32
  }
  func.func @transform_1(%arg0: i32, %arg1: i32, %arg2: memref<1xi32, #tpu.memory_space<smem>>, %arg3: memref<1x1xi32, #tpu.memory_space<smem>>) -> (i32, i32) {
    %0 = arith.index_cast %arg0 : i32 to index
    %1 = arith.index_cast %arg1 : i32 to index
    %2 = memref.load %arg3[%0, %1] : memref<1x1xi32, #tpu.memory_space<smem>>
    %c0_i32 = arith.constant 0 : i32
    %c0_i32_0 = arith.constant 0 : i32
    return %2, %c0_i32 : i32, i32
  }
  func.func @transform_2(%arg0: i32, %arg1: i32, %arg2: memref<1xi32, #tpu.memory_space<smem>>, %arg3: memref<1x1xi32, #tpu.memory_space<smem>>) -> (i32, i32) {
    %c0_i32 = arith.constant 0 : i32
    %c0_i32_0 = arith.constant 0 : i32
    %c0_i32_1 = arith.constant 0 : i32
    return %c0_i32, %c0_i32_0 : i32, i32
  }
  func.func @transform_3(%arg0: i32, %arg1: i32, %arg2: memref<1xi32, #tpu.memory_space<smem>>, %arg3: memref<1x1xi32, #tpu.memory_space<smem>>) -> (i32, i32) {
    %c0_i32 = arith.constant 0 : i32
    %c0_i32_0 = arith.constant 0 : i32
    return %arg0, %c0_i32 : i32, i32
  }
  func.func @transform_4(%arg0: i32, %arg1: i32, %arg2: memref<1xi32, #tpu.memory_space<smem>>, %arg3: memref<1x1xi32, #tpu.memory_space<smem>>) -> (i32, i32) {
    %c0_i32 = arith.constant 0 : i32
    %c0_i32_0 = arith.constant 0 : i32
    return %arg0, %c0_i32 : i32, i32
  }
}

module attributes {stable_mosaic.version = 11 : i64} {
  func.func @_bn_res_kernel(%arg0: i32, %arg1: memref<128x128xf32, #tpu.memory_space<vmem>>, %arg2: memref<1x128xf32, #tpu.memory_space<vmem>>, %arg3: memref<1x128xf32, #tpu.memory_space<vmem>>, %arg4: memref<1x128xf32, #tpu.memory_space<vmem>>, %arg5: memref<1x128xf32, #tpu.memory_space<vmem>>, %arg6: memref<128x128xf32, #tpu.memory_space<vmem>>, %arg7: memref<128x128xf32, #tpu.memory_space<vmem>>) attributes {dimension_semantics = [#tpu.dimension_semantics<parallel>], iteration_bounds = array<i64: 1>, scalar_prefetch = 0 : i64, scratch_operands = 0 : i64, tpu.core_type = #tpu.core_type<tc>, window_params = [{transform_indices = @transform_0, window_bounds = array<i64: 128, 128>}, {pipeline_mode = #tpu.pipeline_mode<synchronous>, transform_indices = @transform_1, window_bounds = array<i64: 1, 128>}, {pipeline_mode = #tpu.pipeline_mode<synchronous>, transform_indices = @transform_2, window_bounds = array<i64: 1, 128>}, {pipeline_mode = #tpu.pipeline_mode<synchronous>, transform_indices = @transform_3, window_bounds = array<i64: 1, 128>}, {pipeline_mode = #tpu.pipeline_mode<synchronous>, transform_indices = @transform_4, window_bounds = array<i64: 1, 128>}, {transform_indices = @transform_5, window_bounds = array<i64: 128, 128>}, {transform_indices = @transform_6, window_bounds = array<i64: 128, 128>}]} {
    %c0 = arith.constant 0 : index
    %c0_0 = arith.constant 0 : index
    %0 = vector.load %arg1[%c0, %c0_0] : memref<128x128xf32, #tpu.memory_space<vmem>>, vector<128x128xf32>
    %c0_1 = arith.constant 0 : index
    %c0_2 = arith.constant 0 : index
    %1 = vector.load %arg2[%c0_1, %c0_2] : memref<1x128xf32, #tpu.memory_space<vmem>>, vector<1x128xf32>
    %2 = vector.broadcast %1 : vector<1x128xf32> to vector<128x128xf32>
    %3 = arith.subf %0, %2 : vector<128x128xf32>
    %c0_3 = arith.constant 0 : index
    %c0_4 = arith.constant 0 : index
    %4 = vector.load %arg3[%c0_3, %c0_4] : memref<1x128xf32, #tpu.memory_space<vmem>>, vector<1x128xf32>
    %5 = vector.broadcast %4 : vector<1x128xf32> to vector<128x128xf32>
    %6 = arith.mulf %3, %5 : vector<128x128xf32>
    %c0_5 = arith.constant 0 : index
    %c0_6 = arith.constant 0 : index
    %7 = vector.load %arg4[%c0_5, %c0_6] : memref<1x128xf32, #tpu.memory_space<vmem>>, vector<1x128xf32>
    %8 = vector.broadcast %7 : vector<1x128xf32> to vector<128x128xf32>
    %9 = arith.mulf %6, %8 : vector<128x128xf32>
    %c0_7 = arith.constant 0 : index
    %c0_8 = arith.constant 0 : index
    %10 = vector.load %arg5[%c0_7, %c0_8] : memref<1x128xf32, #tpu.memory_space<vmem>>, vector<1x128xf32>
    %11 = vector.broadcast %10 : vector<1x128xf32> to vector<128x128xf32>
    %12 = arith.addf %9, %11 : vector<128x128xf32>
    %c0_9 = arith.constant 0 : index
    %c0_10 = arith.constant 0 : index
    %13 = vector.load %arg6[%c0_9, %c0_10] : memref<128x128xf32, #tpu.memory_space<vmem>>, vector<128x128xf32>
    %14 = arith.addf %12, %13 : vector<128x128xf32>
    %c0_11 = arith.constant 0 : index
    %c0_12 = arith.constant 0 : index
    %15 = vector.load %arg7[%c0_11, %c0_12] : memref<128x128xf32, #tpu.memory_space<vmem>>, vector<128x128xf32>
    tpu.vector_store %arg7[%c0_11, %c0_12], %14 {strides = array<i32>} : memref<128x128xf32, #tpu.memory_space<vmem>>, vector<128x128xf32>,
    return
  }
  func.func @transform_0(%arg0: i32) -> (i32, i32) {
    %c0_i32 = arith.constant 0 : i32
    %c0_i32_0 = arith.constant 0 : i32
    return %arg0, %c0_i32 : i32, i32
  }
  func.func @transform_1(%arg0: i32) -> (i32, i32) {
    %c0_i32 = arith.constant 0 : i32
    %c0_i32_0 = arith.constant 0 : i32
    %c0_i32_1 = arith.constant 0 : i32
    return %c0_i32, %c0_i32_0 : i32, i32
  }
  func.func @transform_2(%arg0: i32) -> (i32, i32) {
    %c0_i32 = arith.constant 0 : i32
    %c0_i32_0 = arith.constant 0 : i32
    %c0_i32_1 = arith.constant 0 : i32
    return %c0_i32, %c0_i32_0 : i32, i32
  }
  func.func @transform_3(%arg0: i32) -> (i32, i32) {
    %c0_i32 = arith.constant 0 : i32
    %c0_i32_0 = arith.constant 0 : i32
    %c0_i32_1 = arith.constant 0 : i32
    return %c0_i32, %c0_i32_0 : i32, i32
  }
  func.func @transform_4(%arg0: i32) -> (i32, i32) {
    %c0_i32 = arith.constant 0 : i32
    %c0_i32_0 = arith.constant 0 : i32
    %c0_i32_1 = arith.constant 0 : i32
    return %c0_i32, %c0_i32_0 : i32, i32
  }
  func.func @transform_5(%arg0: i32) -> (i32, i32) {
    %c0_i32 = arith.constant 0 : i32
    %c0_i32_0 = arith.constant 0 : i32
    return %arg0, %c0_i32 : i32, i32
  }
  func.func @transform_6(%arg0: i32) -> (i32, i32) {
    %c0_i32 = arith.constant 0 : i32
    %c0_i32_0 = arith.constant 0 : i32
    return %arg0, %c0_i32 : i32, i32
  }
}

module attributes {stable_mosaic.version = 11 : i64} {
  func.func @_linear_kernel(%arg0: i32, %arg1: memref<128x128xf32, #tpu.memory_space<vmem>>, %arg2: memref<128x128xf32, #tpu.memory_space<vmem>>, %arg3: memref<1x128xf32, #tpu.memory_space<vmem>>, %arg4: memref<128x128xf32, #tpu.memory_space<vmem>>) attributes {dimension_semantics = [#tpu.dimension_semantics<parallel>], iteration_bounds = array<i64: 1>, scalar_prefetch = 0 : i64, scratch_operands = 0 : i64, tpu.core_type = #tpu.core_type<tc>, window_params = [{transform_indices = @transform_0, window_bounds = array<i64: 128, 128>}, {pipeline_mode = #tpu.pipeline_mode<synchronous>, transform_indices = @transform_1, window_bounds = array<i64: 128, 128>}, {pipeline_mode = #tpu.pipeline_mode<synchronous>, transform_indices = @transform_2, window_bounds = array<i64: 1, 128>}, {transform_indices = @transform_3, window_bounds = array<i64: 128, 128>}]} {
    %c0 = arith.constant 0 : index
    %c0_0 = arith.constant 0 : index
    %0 = vector.load %arg1[%c0, %c0_0] : memref<128x128xf32, #tpu.memory_space<vmem>>, vector<128x128xf32>
    %1 = arith.truncf %0 : vector<128x128xf32> to vector<128x128xbf16>
    %c0_1 = arith.constant 0 : index
    %c0_2 = arith.constant 0 : index
    %2 = vector.load %arg2[%c0_1, %c0_2] : memref<128x128xf32, #tpu.memory_space<vmem>>, vector<128x128xf32>
    %3 = arith.truncf %2 : vector<128x128xf32> to vector<128x128xbf16>
    %cst = arith.constant dense<0.000000e+00> : vector<128x128xf32>
    %4 = tpu.matmul %1, %3, %cst {dimension_numbers = #tpu.dot_dimension_numbers<[1], [0], [0], [1], [0, 0, 1, 1], [], []>} : vector<128x128xbf16>, vector<128x128xbf16>, vector<128x128xf32> -> vector<128x128xf32>
    %c0_3 = arith.constant 0 : index
    %c0_4 = arith.constant 0 : index
    %5 = vector.load %arg3[%c0_3, %c0_4] : memref<1x128xf32, #tpu.memory_space<vmem>>, vector<1x128xf32>
    %6 = vector.broadcast %5 : vector<1x128xf32> to vector<128x128xf32>
    %7 = arith.addf %4, %6 : vector<128x128xf32>
    %c0_5 = arith.constant 0 : index
    %c0_6 = arith.constant 0 : index
    %8 = vector.load %arg4[%c0_5, %c0_6] : memref<128x128xf32, #tpu.memory_space<vmem>>, vector<128x128xf32>
    tpu.vector_store %arg4[%c0_5, %c0_6], %7 {strides = array<i32>} : memref<128x128xf32, #tpu.memory_space<vmem>>, vector<128x128xf32>,
    return
  }
  func.func @transform_0(%arg0: i32) -> (i32, i32) {
    %c0_i32 = arith.constant 0 : i32
    %c0_i32_0 = arith.constant 0 : i32
    return %arg0, %c0_i32 : i32, i32
  }
  func.func @transform_1(%arg0: i32) -> (i32, i32) {
    %c0_i32 = arith.constant 0 : i32
    %c0_i32_0 = arith.constant 0 : i32
    %c0_i32_1 = arith.constant 0 : i32
    return %c0_i32, %c0_i32_0 : i32, i32
  }
  func.func @transform_2(%arg0: i32) -> (i32, i32) {
    %c0_i32 = arith.constant 0 : i32
    %c0_i32_0 = arith.constant 0 : i32
    %c0_i32_1 = arith.constant 0 : i32
    return %c0_i32, %c0_i32_0 : i32, i32
  }
  func.func @transform_3(%arg0: i32) -> (i32, i32) {
    %c0_i32 = arith.constant 0 : i32
    %c0_i32_0 = arith.constant 0 : i32
    return %arg0, %c0_i32 : i32, i32
  }
}

</mosaic_0001>

<llo_original>
// kernel: brain_surf_gcn_forward.25
$region0: #{brain_surf_gcn_forward.25}
  #allocation0 [shape = 'u32[]', space=smem, size = 0x4, offset = 0x4, fixed_abs, tag = 'smem constant byte address 0x4 - core index']
  #allocation1 [shape = 'u32[72,128]{1,0:T(1,128)}', space=vmem, size = 0x9000, scoped, tag = 'internal scratch']
  %s0 = inlined_call_operand.hbm [shape: f32[128,128], index: 0, kind: input, shape index: {}]
  %s1 = inlined_call_operand.hbm [shape: f32[128,128], index: 1, kind: input, shape index: {}]
  %s2 = inlined_call_operand.vmem [shape: bf16[128,128], index: 2, kind: output, shape index: {}]
  %s3 = sld [smem:[#allocation0]]
  $region26: #{brain_surf_gcn_forward.25} parent=0
    _
  %s5 = ssub.s32 1, %s3
  %s6 = scalar_select 0, %s5, %s3
  $region1: #{brain_surf_gcn_forward.25} parent=0
    #allocation2 [shape = 'u8[65536]{0}', space=vmem, size = 0x10000, scoped, tag = 'input window, operand 0, single buffered']
    #allocation3 [shape = 's32[1]{0}', space=sflag, size = 0x4, scoped, tag = 'scoped memory for brain_surf_gcn_forward.25']
    #allocation4 [shape = 'u8[65536]{0}', space=vmem, size = 0x10000, scoped, tag = 'input window, operand 1, single buffered']
    #allocation5 [shape = 's32[1]{0}', space=sflag, size = 0x4, scoped, tag = 'scoped memory for brain_surf_gcn_forward.25']
    %7 = vsyncpa [#allocation3], 0
    %8 = vsyncpa [#allocation5], 0
    // Predicated region
    $region2: #{brain_surf_gcn_forward.25} parent=1 // pred_check
      _
    $region3: #{brain_surf_gcn_forward.25} parent=1 // pred_check_branch
      %10 = sbr.rel (0) target = $region5
    $region4: #{brain_surf_gcn_forward.25} parent=1 // pred_region
      %12 = vsyncadd [#allocation3], 0
      %s13 = sshll.u32 %s0, 4
      %s14 = int_to_ptr.hbm [resolvable:$true] %s13
      %s15 = sshll.u32 [#allocation2], 4
      %s16 = int_to_ptr.vmem [resolvable:$true] %s15
      %21 = dma.hbm_to_vmem [thread:$0]  %s14, 2048, %s16, [#allocation3], 128, 128, 8
    $region5: #{brain_surf_gcn_forward.25} parent=1 // pred_fallthru
      _
    // Predicated region
    $region6: #{brain_surf_gcn_forward.25} parent=1 // pred_check
      _
    $region7: #{brain_surf_gcn_forward.25} parent=1 // pred_check_branch
      %23 = sbr.rel (0) target = $region9
    $region8: #{brain_surf_gcn_forward.25} parent=1 // pred_region
      %25 = vsyncadd [#allocation5], 0
      %s26 = sshll.u32 %s1, 4
      %s27 = int_to_ptr.hbm [resolvable:$true] %s26
      %s28 = sshll.u32 [#allocation4], 4
      %s29 = int_to_ptr.vmem [resolvable:$true] %s28
      %34 = dma.hbm_to_vmem [thread:$0]  %s27, 2048, %s29, [#allocation5], 128, 128, 8
    $region9: #{brain_surf_gcn_forward.25} parent=1 // pred_fallthru
      _
    // Predicated region
    $region10: #{brain_surf_gcn_forward.25} parent=1 // pred_check
      _
    $region11: #{brain_surf_gcn_forward.25} parent=1 // pred_check_branch
      %36 = sbr.rel (0) target = $region13
    $region12: #{brain_surf_gcn_forward.25} parent=1 // pred_region
      %38 = dma.done [#allocation3], 2048
    $region13: #{brain_surf_gcn_forward.25} parent=1 // pred_fallthru
      _
    // Predicated region
    $region14: #{brain_surf_gcn_forward.25} parent=1 // pred_check
      _
    $region15: #{brain_surf_gcn_forward.25} parent=1 // pred_check_branch
      %40 = sbr.rel (0) target = $region17
    $region16: #{brain_surf_gcn_forward.25} parent=1 // pred_region
      %42 = dma.done [#allocation5], 2048
    $region17: #{brain_surf_gcn_forward.25} parent=1 // pred_fallthru
      _
    %v43 = vld [vmem:[#allocation2] sm:$0xff]
    %v44 = vld [vmem:[#allocation2 + $0x8] sm:$0xff]
    %v45 = vld [vmem:[#allocation2 + $0x10] sm:$0xff]
    %v46 = vld [vmem:[#allocation2 + $0x18] sm:$0xff]
    %v47 = vld [vmem:[#allocation2 + $0x20] sm:$0xff]
    %v48 = vld [vmem:[#allocation2 + $0x28] sm:$0xff]
    %v49 = vld [vmem:[#allocation2 + $0x30] sm:$0xff]
    %v50 = vld [vmem:[#allocation2 + $0x38] sm:$0xff]
    %v51 = vld [vmem:[#allocation2 + $0x40] sm:$0xff]
    %v52 = vld [vmem:[#allocation2 + $0x48] sm:$0xff]
    %v53 = vld [vmem:[#allocation2 + $0x50] sm:$0xff]
    %v54 = vld [vmem:[#allocation2 + $0x58] sm:$0xff]
    %v55 = vld [vmem:[#allocation2 + $0x60] sm:$0xff]
    %v56 = vld [vmem:[#allocation2 + $0x68] sm:$0xff]
    %v57 = vld [vmem:[#allocation2 + $0x70] sm:$0xff]
    %v58 = vld [vmem:[#allocation2 + $0x78] sm:$0xff]
    %v59 = vpack.c.bf16 %v44, %v43
    %v60 = vpack.c.bf16 %v46, %v45
    %v61 = vpack.c.bf16 %v48, %v47
    %v62 = vpack.c.bf16 %v50, %v49
    %v63 = vpack.c.bf16 %v52, %v51
    %v64 = vpack.c.bf16 %v54, %v53
    %v65 = vpack.c.bf16 %v56, %v55
    %v66 = vpack.c.bf16 %v58, %v57
    %v67 = vld [vmem:[#allocation4] sm:$0xff]
    %v68 = vld [vmem:[#allocation4 + $0x8] sm:$0xff]
    %v69 = vld [vmem:[#allocation4 + $0x10] sm:$0xff]
    %v70 = vld [vmem:[#allocation4 + $0x18] sm:$0xff]
    %v71 = vld [vmem:[#allocation4 + $0x20] sm:$0xff]
    %v72 = vld [vmem:[#allocation4 + $0x28] sm:$0xff]
    %v73 = vld [vmem:[#allocation4 + $0x30] sm:$0xff]
    %v74 = vld [vmem:[#allocation4 + $0x38] sm:$0xff]
    %v75 = vld [vmem:[#allocation4 + $0x40] sm:$0xff]
    %v76 = vld [vmem:[#allocation4 + $0x48] sm:$0xff]
    %v77 = vld [vmem:[#allocation4 + $0x50] sm:$0xff]
    %v78 = vld [vmem:[#allocation4 + $0x58] sm:$0xff]
    %v79 = vld [vmem:[#allocation4 + $0x60] sm:$0xff]
    %v80 = vld [vmem:[#allocation4 + $0x68] sm:$0xff]
    %v81 = vld [vmem:[#allocation4 + $0x70] sm:$0xff]
    %v82 = vld [vmem:[#allocation4 + $0x78] sm:$0xff]
    %v83 = vpack.c.bf16 %v68, %v67
    %v84 = vpack.c.bf16 %v70, %v69
    %v85 = vpack.c.bf16 %v72, %v71
    %v86 = vpack.c.bf16 %v74, %v73
    %v87 = vpack.c.bf16 %v76, %v75
    %v88 = vpack.c.bf16 %v78, %v77
    %v89 = vpack.c.bf16 %v80, %v79
    %v90 = vpack.c.bf16 %v82, %v81
    %91 = vmatpush.bf16.msra.mxu0 %v90
    %92 = vmatpush.bf16.msra.mxu0 %v89
    %93 = vmatpush.bf16.msra.mxu0 %v88
    %94 = vmatpush.bf16.msra.mxu0 %v87
    %95 = vmatpush.bf16.msra.mxu0 %v86
    %96 = vmatpush.bf16.msra.mxu0 %v85
    %97 = vmatpush.bf16.msra.mxu0 %v84
    %98 = vmatpush.bf16.msra.mxu0 %v83
    %99 = vmatmul.bf16.gmra.mxu0 %v59
    %v100 = vpop.f32.mrf.mxu0
    %v101 = vadd.f32 0.0, %v100
    %v102 = vpop.f32.mrf.mxu0
    %v103 = vadd.f32 0.0, %v102
    %104 = vmatmul.bf16.gmra.mxu0 %v60
    %v105 = vpop.f32.mrf.mxu0
    %v106 = vadd.f32 0.0, %v105
    %v107 = vpop.f32.mrf.mxu0
    %v108 = vadd.f32 0.0, %v107
    %109 = vmatmul.bf16.gmra.mxu0 %v61
    %v110 = vpop.f32.mrf.mxu0
    %v111 = vadd.f32 0.0, %v110
    %v112 = vpop.f32.mrf.mxu0
    %v113 = vadd.f32 0.0, %v112
    %114 = vmatmul.bf16.gmra.mxu0 %v62
    %v115 = vpop.f32.mrf.mxu0
    %v116 = vadd.f32 0.0, %v115
    %v117 = vpop.f32.mrf.mxu0
    %v118 = vadd.f32 0.0, %v117
    %119 = vmatmul.bf16.gmra.mxu0 %v63
    %v120 = vpop.f32.mrf.mxu0
    %v121 = vadd.f32 0.0, %v120
    %v122 = vpop.f32.mrf.mxu0
    %v123 = vadd.f32 0.0, %v122
    %124 = vmatmul.bf16.gmra.mxu0 %v64
    %v125 = vpop.f32.mrf.mxu0
    %v126 = vadd.f32 0.0, %v125
    %v127 = vpop.f32.mrf.mxu0
    %v128 = vadd.f32 0.0, %v127
    %129 = vmatmul.bf16.gmra.mxu0 %v65
    %v130 = vpop.f32.mrf.mxu0
    %v131 = vadd.f32 0.0, %v130
    %v132 = vpop.f32.mrf.mxu0
    %v133 = vadd.f32 0.0, %v132
    %134 = vmatmul.bf16.gmra.mxu0 %v66
    %v135 = vpop.f32.mrf.mxu0
    %v136 = vadd.f32 0.0, %v135
    %v137 = vpop.f32.mrf.mxu0
    %v138 = vadd.f32 0.0, %v137
    %139 = vdwg.mxu0
    %v140 = vpack.c.bf16 %v101, %v101
    %v141 = vpack.c.bf16 %v103, %v103
    %v142 = vpack.c.bf16 %v106, %v106
    %v143 = vpack.c.bf16 %v108, %v108
    %v144 = vpack.c.bf16 %v111, %v111
    %v145 = vpack.c.bf16 %v113, %v113
    %v146 = vpack.c.bf16 %v116, %v116
    %v147 = vpack.c.bf16 %v118, %v118
    %v148 = vpack.c.bf16 %v121, %v121
    %v149 = vpack.c.bf16 %v123, %v123
    %v150 = vpack.c.bf16 %v126, %v126
    %v151 = vpack.c.bf16 %v128, %v128
    %v152 = vpack.c.bf16 %v131, %v131
    %v153 = vpack.c.bf16 %v133, %v133
    %v154 = vpack.c.bf16 %v136, %v136
    %v155 = vpack.c.bf16 %v138, %v138
    %156 = vst [vmem:[%s2] sm:$0xf] %v140
    %157 = vst [vmem:[%s2 + $0x4] sm:$0xf] %v141
    %158 = vst [vmem:[%s2 + $0x8] sm:$0xf] %v142
    %159 = vst [vmem:[%s2 + $0xc] sm:$0xf] %v143
    %160 = vst [vmem:[%s2 + $0x10] sm:$0xf] %v144
    %161 = vst [vmem:[%s2 + $0x14] sm:$0xf] %v145
    %162 = vst [vmem:[%s2 + $0x18] sm:$0xf] %v146
    %163 = vst [vmem:[%s2 + $0x1c] sm:$0xf] %v147
    %164 = vst [vmem:[%s2 + $0x20] sm:$0xf] %v148
    %165 = vst [vmem:[%s2 + $0x24] sm:$0xf] %v149
    %166 = vst [vmem:[%s2 + $0x28] sm:$0xf] %v150
    %167 = vst [vmem:[%s2 + $0x2c] sm:$0xf] %v151
    %168 = vst [vmem:[%s2 + $0x30] sm:$0xf] %v152
    %169 = vst [vmem:[%s2 + $0x34] sm:$0xf] %v153
    %170 = vst [vmem:[%s2 + $0x38] sm:$0xf] %v154
    %171 = vst [vmem:[%s2 + $0x3c] sm:$0xf] %v155
    // Predicated region
    $region18: #{brain_surf_gcn_forward.25} parent=1 // pred_check
      _
    $region19: #{brain_surf_gcn_forward.25} parent=1 // pred_check_branch
      %173 = sbr.rel (0) target = $region21
    $region20: #{brain_surf_gcn_forward.25} parent=1 // pred_region
      _
    $region21: #{brain_surf_gcn_forward.25} parent=1 // pred_fallthru
      _
    // Predicated region
    $region22: #{brain_surf_gcn_forward.25} parent=1 // pred_check
      _
    $region23: #{brain_surf_gcn_forward.25} parent=1 // pred_check_branch
      %175 = sbr.rel (0) target = $region25
    $region24: #{brain_surf_gcn_forward.25} parent=1 // pred_region
      _
    $region25: #{brain_surf_gcn_forward.25} parent=1 // pred_fallthru
      _
    %176 = vsyncpa [#allocation3], 1
    %177 = vsyncpa [#allocation5], 1

// kernel: brain_surf_gcn_forward.27
$region0: #{brain_surf_gcn_forward.27}
  #allocation0 [shape = 'u32[]', space=smem, size = 0x4, offset = 0x4, fixed_abs, tag = 'smem constant byte address 0x4 - core index']
  #allocation1 [shape = 'u32[72,128]{1,0:T(1,128)}', space=vmem, size = 0x9000, scoped, tag = 'internal scratch']
  %s0 = inlined_call_operand.vmem [shape: f32[128,128], index: 0, kind: input, shape index: {}]
  %s1 = inlined_call_operand.vmem [shape: f32[1,128], index: 1, kind: input, shape index: {}]
  %s2 = inlined_call_operand.vmem [shape: f32[1,128], index: 2, kind: input, shape index: {}]
  %s3 = inlined_call_operand.hbm [shape: f32[1,128], index: 3, kind: input, shape index: {}]
  %s4 = inlined_call_operand.hbm [shape: f32[1,128], index: 4, kind: input, shape index: {}]
  %s5 = inlined_call_operand.vmem [shape: f32[128,128], index: 5, kind: output, shape index: {}]
  %s6 = sld [smem:[#allocation0]]
  $region38: #{brain_surf_gcn_forward.27} parent=0
    _
  %s8 = ssub.s32 1, %s6
  %s9 = scalar_select 0, %s8, %s6
  $region1: #{brain_surf_gcn_forward.27} parent=0
    #allocation2 [shape = 'u8[512]{0}', space=vmem, size = 0x400, scoped, tag = 'input window, operand 3, single buffered']
    #allocation3 [shape = 's32[1]{0}', space=sflag, size = 0x4, scoped, tag = 'scoped memory for brain_surf_gcn_forward.27']
    #allocation4 [shape = 'u8[512]{0}', space=vmem, size = 0x400, scoped, tag = 'input window, operand 4, single buffered']
    #allocation5 [shape = 's32[1]{0}', space=sflag, size = 0x4, scoped, tag = 'scoped memory for brain_surf_gcn_forward.27']
    %10 = vsyncpa [#allocation3], 0
    %11 = vsyncpa [#allocation5], 0
    // Predicated region
    $region2: #{brain_surf_gcn_forward.27} parent=1 // pred_check
      _
    $region3: #{brain_surf_gcn_forward.27} parent=1 // pred_check_branch
      %13 = sbr.rel (0) target = $region5
    $region4: #{brain_surf_gcn_forward.27} parent=1 // pred_region
      _
    $region5: #{brain_surf_gcn_forward.27} parent=1 // pred_fallthru
      _
    // Predicated region
    $region6: #{brain_surf_gcn_forward.27} parent=1 // pred_check
      _
    $region7: #{brain_surf_gcn_forward.27} parent=1 // pred_check_branch
      %15 = sbr.rel (0) target = $region9
    $region8: #{brain_surf_gcn_forward.27} parent=1 // pred_region
      _
    $region9: #{brain_surf_gcn_forward.27} parent=1 // pred_fallthru
      _
    // Predicated region
    $region10: #{brain_surf_gcn_forward.27} parent=1 // pred_check
      _
    $region11: #{brain_surf_gcn_forward.27} parent=1 // pred_check_branch
      %17 = sbr.rel (0) target = $region13
    $region12: #{brain_surf_gcn_forward.27} parent=1 // pred_region
      _
    $region13: #{brain_surf_gcn_forward.27} parent=1 // pred_fallthru
      _
    // Predicated region
    $region14: #{brain_surf_gcn_forward.27} parent=1 // pred_check
      _
    $region15: #{brain_surf_gcn_forward.27} parent=1 // pred_check_branch
      %19 = sbr.rel (0) target = $region17
    $region16: #{brain_surf_gcn_forward.27} parent=1 // pred_region
      %21 = vsyncadd [#allocation3], 0
      %s23 = sshll.u32 %s3, 4
      %s24 = int_to_ptr.hbm [resolvable:$true] %s23
      %s25 = sshll.u32 [#allocation2], 4
      %s26 = int_to_ptr.vmem [resolvable:$true] %s25
      %28 = dma.hbm_to_vmem [thread:$0]  %s24, 16, %s26, [#allocation3]
    $region17: #{brain_surf_gcn_forward.27} parent=1 // pred_fallthru
      _
    // Predicated region
    $region18: #{brain_surf_gcn_forward.27} parent=1 // pred_check
      _
    $region19: #{brain_surf_gcn_forward.27} parent=1 // pred_check_branch
      %30 = sbr.rel (0) target = $region21
    $region20: #{brain_surf_gcn_forward.27} parent=1 // pred_region
      %32 = vsyncadd [#allocation5], 0
      %s34 = sshll.u32 %s4, 4
      %s35 = int_to_ptr.hbm [resolvable:$true] %s34
      %s36 = sshll.u32 [#allocation4], 4
      %s37 = int_to_ptr.vmem [resolvable:$true] %s36
      %39 = dma.hbm_to_vmem [thread:$0]  %s35, 16, %s37, [#allocation5]
    $region21: #{brain_surf_gcn_forward.27} parent=1 // pred_fallthru
      _
    // Predicated region
    $region22: #{brain_surf_gcn_forward.27} parent=1 // pred_check
      _
    $region23: #{brain_surf_gcn_forward.27} parent=1 // pred_check_branch
      %41 = sbr.rel (0) target = $region25
    $region24: #{brain_surf_gcn_forward.27} parent=1 // pred_region
      %43 = dma.done [#allocation3], 16
    $region25: #{brain_surf_gcn_forward.27} parent=1 // pred_fallthru
      _
    // Predicated region
    $region26: #{brain_surf_gcn_forward.27} parent=1 // pred_check
      _
    $region27: #{brain_surf_gcn_forward.27} parent=1 // pred_check_branch
      %45 = sbr.rel (0) target = $region29
    $region28: #{brain_surf_gcn_forward.27} parent=1 // pred_region
      %47 = dma.done [#allocation5], 16
    $region29: #{brain_surf_gcn_forward.27} parent=1 // pred_fallthru
      _
    %v48 = vld [vmem:[%s0] sm:$0xff]
    %v49 = vld [vmem:[%s0 + $0x8] sm:$0xff]
    %v50 = vld [vmem:[%s0 + $0x10] sm:$0xff]
    %v51 = vld [vmem:[%s0 + $0x18] sm:$0xff]
    %v52 = vld [vmem:[%s0 + $0x20] sm:$0xff]
    %v53 = vld [vmem:[%s0 + $0x28] sm:$0xff]
    %v54 = vld [vmem:[%s0 + $0x30] sm:$0xff]
    %v55 = vld [vmem:[%s0 + $0x38] sm:$0xff]
    %v56 = vld [vmem:[%s0 + $0x40] sm:$0xff]
    %v57 = vld [vmem:[%s0 + $0x48] sm:$0xff]
    %v58 = vld [vmem:[%s0 + $0x50] sm:$0xff]
    %v59 = vld [vmem:[%s0 + $0x58] sm:$0xff]
    %v60 = vld [vmem:[%s0 + $0x60] sm:$0xff]
    %v61 = vld [vmem:[%s0 + $0x68] sm:$0xff]
    %v62 = vld [vmem:[%s0 + $0x70] sm:$0xff]
    %v63 = vld [vmem:[%s0 + $0x78] sm:$0xff]
    %v64 = vld [vmem:[%s1] sm:$0x1]
    %v66 = vperm.slane %v64, 0
    %v68 = vsub.f32 %v48, %v66
    %v69 = vsub.f32 %v49, %v66
    %v70 = vsub.f32 %v50, %v66
    %v71 = vsub.f32 %v51, %v66
    %v72 = vsub.f32 %v52, %v66
    %v73 = vsub.f32 %v53, %v66
    %v74 = vsub.f32 %v54, %v66
    %v75 = vsub.f32 %v55, %v66
    %v76 = vsub.f32 %v56, %v66
    %v77 = vsub.f32 %v57, %v66
    %v78 = vsub.f32 %v58, %v66
    %v79 = vsub.f32 %v59, %v66
    %v80 = vsub.f32 %v60, %v66
    %v81 = vsub.f32 %v61, %v66
    %v82 = vsub.f32 %v62, %v66
    %v83 = vsub.f32 %v63, %v66
    %v84 = vld [vmem:[%s2] sm:$0x1]
    %v86 = vperm.slane %v84, 0
    %v88 = vmul.f32 %v68, %v86
    %v89 = vmul.f32 %v69, %v86
    %v90 = vmul.f32 %v70, %v86
    %v91 = vmul.f32 %v71, %v86
    %v92 = vmul.f32 %v72, %v86
    %v93 = vmul.f32 %v73, %v86
    %v94 = vmul.f32 %v74, %v86
    %v95 = vmul.f32 %v75, %v86
    %v96 = vmul.f32 %v76, %v86
    %v97 = vmul.f32 %v77, %v86
    %v98 = vmul.f32 %v78, %v86
    %v99 = vmul.f32 %v79, %v86
    %v100 = vmul.f32 %v80, %v86
    %v101 = vmul.f32 %v81, %v86
    %v102 = vmul.f32 %v82, %v86
    %v103 = vmul.f32 %v83, %v86
    %v104 = vld [vmem:[#allocation2] sm:$0x1]
    %v106 = vperm.slane %v104, 0
    %v108 = vmul.f32 %v88, %v106
    %v109 = vmul.f32 %v89, %v106
    %v110 = vmul.f32 %v90, %v106
    %v111 = vmul.f32 %v91, %v106
    %v112 = vmul.f32 %v92, %v106
    %v113 = vmul.f32 %v93, %v106
    %v114 = vmul.f32 %v94, %v106
    %v115 = vmul.f32 %v95, %v106
    %v116 = vmul.f32 %v96, %v106
    %v117 = vmul.f32 %v97, %v106
    %v118 = vmul.f32 %v98, %v106
    %v119 = vmul.f32 %v99, %v106
    %v120 = vmul.f32 %v100, %v106
    %v121 = vmul.f32 %v101, %v106
    %v122 = vmul.f32 %v102, %v106
    %v123 = vmul.f32 %v103, %v106
    %v124 = vld [vmem:[#allocation4] sm:$0x1]
    %v126 = vperm.slane %v124, 0
    %v128 = vadd.f32 %v108, %v126
    %v129 = vadd.f32 %v109, %v126
    %v130 = vadd.f32 %v110, %v126
    %v131 = vadd.f32 %v111, %v126
    %v132 = vadd.f32 %v112, %v126
    %v133 = vadd.f32 %v113, %v126
    %v134 = vadd.f32 %v114, %v126
    %v135 = vadd.f32 %v115, %v126
    %v136 = vadd.f32 %v116, %v126
    %v137 = vadd.f32 %v117, %v126
    %v138 = vadd.f32 %v118, %v126
    %v139 = vadd.f32 %v119, %v126
    %v140 = vadd.f32 %v120, %v126
    %v141 = vadd.f32 %v121, %v126
    %v142 = vadd.f32 %v122, %v126
    %v143 = vadd.f32 %v123, %v126
    %144 = vst [vmem:[%s5] sm:$0xff] %v128
    %145 = vst [vmem:[%s5 + $0x8] sm:$0xff] %v129
    %146 = vst [vmem:[%s5 + $0x10] sm:$0xff] %v130
    %147 = vst [vmem:[%s5 + $0x18] sm:$0xff] %v131
    %148 = vst [vmem:[%s5 + $0x20] sm:$0xff] %v132
    %149 = vst [vmem:[%s5 + $0x28] sm:$0xff] %v133
    %150 = vst [vmem:[%s5 + $0x30] sm:$0xff] %v134
    %151 = vst [vmem:[%s5 + $0x38] sm:$0xff] %v135
    %152 = vst [vmem:[%s5 + $0x40] sm:$0xff] %v136
    %153 = vst [vmem:[%s5 + $0x48] sm:$0xff] %v137
    %154 = vst [vmem:[%s5 + $0x50] sm:$0xff] %v138
    %155 = vst [vmem:[%s5 + $0x58] sm:$0xff] %v139
    %156 = vst [vmem:[%s5 + $0x60] sm:$0xff] %v140
    %157 = vst [vmem:[%s5 + $0x68] sm:$0xff] %v141
    %158 = vst [vmem:[%s5 + $0x70] sm:$0xff] %v142
    %159 = vst [vmem:[%s5 + $0x78] sm:$0xff] %v143
    // Predicated region
    $region30: #{brain_surf_gcn_forward.27} parent=1 // pred_check
      _
    $region31: #{brain_surf_gcn_forward.27} parent=1 // pred_check_branch
      %161 = sbr.rel (0) target = $region33
    $region32: #{brain_surf_gcn_forward.27} parent=1 // pred_region
      _
    $region33: #{brain_surf_gcn_forward.27} parent=1 // pred_fallthru
      _
    // Predicated region
    $region34: #{brain_surf_gcn_forward.27} parent=1 // pred_check
      _
    $region35: #{brain_surf_gcn_forward.27} parent=1 // pred_check_branch
      %163 = sbr.rel (0) target = $region37
    $region36: #{brain_surf_gcn_forward.27} parent=1 // pred_region
      _
    $region37: #{brain_surf_gcn_forward.27} parent=1 // pred_fallthru
      _
    %164 = vsyncpa [#allocation3], 1
    %165 = vsyncpa [#allocation5], 1

// kernel: brain_surf_gcn_forward.28
$region0: #{brain_surf_gcn_forward.28}
  #allocation0 [shape = 'u32[]', space=smem, size = 0x4, offset = 0x4, fixed_abs, tag = 'smem constant byte address 0x4 - core index']
  #allocation1 [shape = 'u32[72,128]{1,0:T(1,128)}', space=vmem, size = 0x9000, scoped, tag = 'internal scratch']
  %s0 = inlined_call_operand.vmem [shape: f32[128,128], index: 0, kind: input, shape index: {}]
  %s1 = inlined_call_operand.hbm [shape: f32[128,128], index: 1, kind: input, shape index: {}]
  %s2 = inlined_call_operand.vmem [shape: bf16[128,128], index: 2, kind: output, shape index: {}]
  %s3 = sld [smem:[#allocation0]]
  $region22: #{brain_surf_gcn_forward.28} parent=0
    _
  %s5 = ssub.s32 1, %s3
  %s6 = scalar_select 0, %s5, %s3
  $region1: #{brain_surf_gcn_forward.28} parent=0
    #allocation2 [shape = 'u8[65536]{0}', space=vmem, size = 0x10000, scoped, tag = 'input window, operand 1, single buffered']
    #allocation3 [shape = 's32[1]{0}', space=sflag, size = 0x4, scoped, tag = 'scoped memory for brain_surf_gcn_forward.28']
    %7 = vsyncpa [#allocation3], 0
    // Predicated region
    $region2: #{brain_surf_gcn_forward.28} parent=1 // pred_check
      _
    $region3: #{brain_surf_gcn_forward.28} parent=1 // pred_check_branch
      %9 = sbr.rel (0) target = $region5
    $region4: #{brain_surf_gcn_forward.28} parent=1 // pred_region
      _
    $region5: #{brain_surf_gcn_forward.28} parent=1 // pred_fallthru
      _
    // Predicated region
    $region6: #{brain_surf_gcn_forward.28} parent=1 // pred_check
      _
    $region7: #{brain_surf_gcn_forward.28} parent=1 // pred_check_branch
      %11 = sbr.rel (0) target = $region9
    $region8: #{brain_surf_gcn_forward.28} parent=1 // pred_region
      %13 = vsyncadd [#allocation3], 0
      %s14 = sshll.u32 %s1, 4
      %s15 = int_to_ptr.hbm [resolvable:$true] %s14
      %s16 = sshll.u32 [#allocation2], 4
      %s17 = int_to_ptr.vmem [resolvable:$true] %s16
      %22 = dma.hbm_to_vmem [thread:$0]  %s15, 2048, %s17, [#allocation3], 128, 128, 8
    $region9: #{brain_surf_gcn_forward.28} parent=1 // pred_fallthru
      _
    // Predicated region
    $region10: #{brain_surf_gcn_forward.28} parent=1 // pred_check
      _
    $region11: #{brain_surf_gcn_forward.28} parent=1 // pred_check_branch
      %24 = sbr.rel (0) target = $region13
    $region12: #{brain_surf_gcn_forward.28} parent=1 // pred_region
      %26 = dma.done [#allocation3], 2048
    $region13: #{brain_surf_gcn_forward.28} parent=1 // pred_fallthru
      _
    %v27 = vld [vmem:[%s0] sm:$0xff]
    %v28 = vld [vmem:[%s0 + $0x8] sm:$0xff]
    %v29 = vld [vmem:[%s0 + $0x10] sm:$0xff]
    %v30 = vld [vmem:[%s0 + $0x18] sm:$0xff]
    %v31 = vld [vmem:[%s0 + $0x20] sm:$0xff]
    %v32 = vld [vmem:[%s0 + $0x28] sm:$0xff]
    %v33 = vld [vmem:[%s0 + $0x30] sm:$0xff]
    %v34 = vld [vmem:[%s0 + $0x38] sm:$0xff]
    %v35 = vld [vmem:[%s0 + $0x40] sm:$0xff]
    %v36 = vld [vmem:[%s0 + $0x48] sm:$0xff]
    %v37 = vld [vmem:[%s0 + $0x50] sm:$0xff]
    %v38 = vld [vmem:[%s0 + $0x58] sm:$0xff]
    %v39 = vld [vmem:[%s0 + $0x60] sm:$0xff]
    %v40 = vld [vmem:[%s0 + $0x68] sm:$0xff]
    %v41 = vld [vmem:[%s0 + $0x70] sm:$0xff]
    %v42 = vld [vmem:[%s0 + $0x78] sm:$0xff]
    %v43 = vpack.c.bf16 %v28, %v27
    %v44 = vpack.c.bf16 %v30, %v29
    %v45 = vpack.c.bf16 %v32, %v31
    %v46 = vpack.c.bf16 %v34, %v33
    %v47 = vpack.c.bf16 %v36, %v35
    %v48 = vpack.c.bf16 %v38, %v37
    %v49 = vpack.c.bf16 %v40, %v39
    %v50 = vpack.c.bf16 %v42, %v41
    %v51 = vld [vmem:[#allocation2] sm:$0xff]
    %v52 = vld [vmem:[#allocation2 + $0x8] sm:$0xff]
    %v53 = vld [vmem:[#allocation2 + $0x10] sm:$0xff]
    %v54 = vld [vmem:[#allocation2 + $0x18] sm:$0xff]
    %v55 = vld [vmem:[#allocation2 + $0x20] sm:$0xff]
    %v56 = vld [vmem:[#allocation2 + $0x28] sm:$0xff]
    %v57 = vld [vmem:[#allocation2 + $0x30] sm:$0xff]
    %v58 = vld [vmem:[#allocation2 + $0x38] sm:$0xff]
    %v59 = vld [vmem:[#allocation2 + $0x40] sm:$0xff]
    %v60 = vld [vmem:[#allocation2 + $0x48] sm:$0xff]
    %v61 = vld [vmem:[#allocation2 + $0x50] sm:$0xff]
    %v62 = vld [vmem:[#allocation2 + $0x58] sm:$0xff]
    %v63 = vld [vmem:[#allocation2 + $0x60] sm:$0xff]
    %v64 = vld [vmem:[#allocation2 + $0x68] sm:$0xff]
    %v65 = vld [vmem:[#allocation2 + $0x70] sm:$0xff]
    %v66 = vld [vmem:[#allocation2 + $0x78] sm:$0xff]
    %v67 = vpack.c.bf16 %v52, %v51
    %v68 = vpack.c.bf16 %v54, %v53
    %v69 = vpack.c.bf16 %v56, %v55
    %v70 = vpack.c.bf16 %v58, %v57
    %v71 = vpack.c.bf16 %v60, %v59
    %v72 = vpack.c.bf16 %v62, %v61
    %v73 = vpack.c.bf16 %v64, %v63
    %v74 = vpack.c.bf16 %v66, %v65
    %75 = vmatpush.bf16.msra.mxu0 %v74
    %76 = vmatpush.bf16.msra.mxu0 %v73
    %77 = vmatpush.bf16.msra.mxu0 %v72
    %78 = vmatpush.bf16.msra.mxu0 %v71
    %79 = vmatpush.bf16.msra.mxu0 %v70
    %80 = vmatpush.bf16.msra.mxu0 %v69
    %81 = vmatpush.bf16.msra.mxu0 %v68
    %82 = vmatpush.bf16.msra.mxu0 %v67
    %83 = vmatmul.bf16.gmra.mxu0 %v43
    %v84 = vpop.f32.mrf.mxu0
    %v85 = vadd.f32 0.0, %v84
    %v86 = vpop.f32.mrf.mxu0
    %v87 = vadd.f32 0.0, %v86
    %88 = vmatmul.bf16.gmra.mxu0 %v44
    %v89 = vpop.f32.mrf.mxu0
    %v90 = vadd.f32 0.0, %v89
    %v91 = vpop.f32.mrf.mxu0
    %v92 = vadd.f32 0.0, %v91
    %93 = vmatmul.bf16.gmra.mxu0 %v45
    %v94 = vpop.f32.mrf.mxu0
    %v95 = vadd.f32 0.0, %v94
    %v96 = vpop.f32.mrf.mxu0
    %v97 = vadd.f32 0.0, %v96
    %98 = vmatmul.bf16.gmra.mxu0 %v46
    %v99 = vpop.f32.mrf.mxu0
    %v100 = vadd.f32 0.0, %v99
    %v101 = vpop.f32.mrf.mxu0
    %v102 = vadd.f32 0.0, %v101
    %103 = vmatmul.bf16.gmra.mxu0 %v47
    %v104 = vpop.f32.mrf.mxu0
    %v105 = vadd.f32 0.0, %v104
    %v106 = vpop.f32.mrf.mxu0
    %v107 = vadd.f32 0.0, %v106
    %108 = vmatmul.bf16.gmra.mxu0 %v48
    %v109 = vpop.f32.mrf.mxu0
    %v110 = vadd.f32 0.0, %v109
    %v111 = vpop.f32.mrf.mxu0
    %v112 = vadd.f32 0.0, %v111
    %113 = vmatmul.bf16.gmra.mxu0 %v49
    %v114 = vpop.f32.mrf.mxu0
    %v115 = vadd.f32 0.0, %v114
    %v116 = vpop.f32.mrf.mxu0
    %v117 = vadd.f32 0.0, %v116
    %118 = vmatmul.bf16.gmra.mxu0 %v50
    %v119 = vpop.f32.mrf.mxu0
    %v120 = vadd.f32 0.0, %v119
    %v121 = vpop.f32.mrf.mxu0
    %v122 = vadd.f32 0.0, %v121
    %123 = vdwg.mxu0
    %v124 = vpack.c.bf16 %v85, %v85
    %v125 = vpack.c.bf16 %v87, %v87
    %v126 = vpack.c.bf16 %v90, %v90
    %v127 = vpack.c.bf16 %v92, %v92
    %v128 = vpack.c.bf16 %v95, %v95
    %v129 = vpack.c.bf16 %v97, %v97
    %v130 = vpack.c.bf16 %v100, %v100
    %v131 = vpack.c.bf16 %v102, %v102
    %v132 = vpack.c.bf16 %v105, %v105
    %v133 = vpack.c.bf16 %v107, %v107
    %v134 = vpack.c.bf16 %v110, %v110
    %v135 = vpack.c.bf16 %v112, %v112
    %v136 = vpack.c.bf16 %v115, %v115
    %v137 = vpack.c.bf16 %v117, %v117
    %v138 = vpack.c.bf16 %v120, %v120
    %v139 = vpack.c.bf16 %v122, %v122
    %140 = vst [vmem:[%s2] sm:$0xf] %v124
    %141 = vst [vmem:[%s2 + $0x4] sm:$0xf] %v125
    %142 = vst [vmem:[%s2 + $0x8] sm:$0xf] %v126
    %143 = vst [vmem:[%s2 + $0xc] sm:$0xf] %v127
    %144 = vst [vmem:[%s2 + $0x10] sm:$0xf] %v128
    %145 = vst [vmem:[%s2 + $0x14] sm:$0xf] %v129
    %146 = vst [vmem:[%s2 + $0x18] sm:$0xf] %v130
    %147 = vst [vmem:[%s2 + $0x1c] sm:$0xf] %v131
    %148 = vst [vmem:[%s2 + $0x20] sm:$0xf] %v132
    %149 = vst [vmem:[%s2 + $0x24] sm:$0xf] %v133
    %150 = vst [vmem:[%s2 + $0x28] sm:$0xf] %v134
    %151 = vst [vmem:[%s2 + $0x2c] sm:$0xf] %v135
    %152 = vst [vmem:[%s2 + $0x30] sm:$0xf] %v136
    %153 = vst [vmem:[%s2 + $0x34] sm:$0xf] %v137
    %154 = vst [vmem:[%s2 + $0x38] sm:$0xf] %v138
    %155 = vst [vmem:[%s2 + $0x3c] sm:$0xf] %v139
    // Predicated region
    $region14: #{brain_surf_gcn_forward.28} parent=1 // pred_check
      _
    $region15: #{brain_surf_gcn_forward.28} parent=1 // pred_check_branch
      %157 = sbr.rel (0) target = $region17
    $region16: #{brain_surf_gcn_forward.28} parent=1 // pred_region
      _
    $region17: #{brain_surf_gcn_forward.28} parent=1 // pred_fallthru
      _
    // Predicated region
    $region18: #{brain_surf_gcn_forward.28} parent=1 // pred_check
      _
    $region19: #{brain_surf_gcn_forward.28} parent=1 // pred_check_branch
      %159 = sbr.rel (0) target = $region21
    $region20: #{brain_surf_gcn_forward.28} parent=1 // pred_region
      _
    $region21: #{brain_surf_gcn_forward.28} parent=1 // pred_fallthru
      _
    %160 = vsyncpa [#allocation3], 1

// kernel: brain_surf_gcn_forward.26
$region0: #{brain_surf_gcn_forward.26}
  #allocation0 [shape = 'u32[]', space=smem, size = 0x4, offset = 0x4, fixed_abs, tag = 'smem constant byte address 0x4 - core index']
  #allocation1 [shape = 'u32[72,128]{1,0:T(1,128)}', space=vmem, size = 0x9000, scoped, tag = 'internal scratch']
  #allocation2 [shape = 'f32[128,128]{1,0:T(8,128)}', space=vmem, size = 0x10000, scoped, tag = 'scratch operand']
  #allocation3 [shape = 's32[1]{0}', space=sflag, size = 0x4, scoped, tag = 'scoped memory for brain_surf_gcn_forward.26']
  #allocation4 [shape = 's32[1]{0:T(128)S(6)}', space=smem, size = 0x200, scoped, tag = 'prefetched SMEM operand 0']
  #allocation5 [shape = 's32[1,1]{1,0:T(1,128)S(6)}', space=smem, size = 0x200, scoped, tag = 'prefetched SMEM operand 1']
  %s0 = inlined_call_operand.<no memory space> [shape: s32[1], index: 0, kind: input, shape index: {}]
  %s1 = inlined_call_operand.<no memory space> [shape: s32[1,1], index: 1, kind: input, shape index: {}]
  %s2 = inlined_call_operand.hbm [shape: bf16[128,128], index: 2, kind: input, shape index: {}]
  %s3 = inlined_call_operand.vmem [shape: bf16[128,128], index: 3, kind: input, shape index: {}]
  %s4 = inlined_call_operand.hbm [shape: f32[1,128], index: 4, kind: input, shape index: {}]
  %s5 = inlined_call_operand.vmem [shape: f32[128,128], index: 5, kind: output, shape index: {0}]
  %s6 = inlined_call_operand.vmem [shape: f32[8,128], index: 6, kind: output, shape index: {1}]
  %7 = xla_tuple %s5, %s6
  %s8 = sld [smem:[#allocation0]]
  $region50: #{brain_surf_gcn_forward.26} parent=0
    _
  %s10 = ssub.s32 1, %s8
  %s11 = scalar_select 0, %s10, %s8
  %12 = sst [smem:[#allocation4]] %s0
  %13 = sst [smem:[#allocation5]] %s1
  $region1: #{brain_surf_gcn_forward.26} parent=0
    #allocation6 [shape = 'u8[32768]{0}', space=vmem, size = 0x8000, scoped, tag = 'input window, operand 2, single buffered']
    #allocation7 [shape = 's32[1]{0}', space=sflag, size = 0x4, scoped, tag = 'scoped memory for brain_surf_gcn_forward.26']
    #allocation8 [shape = 'u8[512]{0}', space=vmem, size = 0x400, scoped, tag = 'input window, operand 4, single buffered']
    #allocation9 [shape = 's32[1]{0}', space=sflag, size = 0x4, scoped, tag = 'scoped memory for brain_surf_gcn_forward.26']
    %14 = vsyncpa [#allocation7], 0
    %15 = vsyncpa [#allocation9], 0
    // Predicated region
    $region2: #{brain_surf_gcn_forward.26} parent=1 // pred_check
      _
    $region3: #{brain_surf_gcn_forward.26} parent=1 // pred_check_branch
      %17 = sbr.rel (0) target = $region5
    $region4: #{brain_surf_gcn_forward.26} parent=1 // pred_region
      %s18 = sadd.s32 0, 0
      %s19 = smul.u32 %s18, 128
      %s20 = sadd.s32 %s19, 0
      %s21 = sld [smem:[#allocation5 + %s20]]
      %23 = vsyncadd [#allocation7], 0
      %s24 = smul.addr %s21, 4
      %s25 = scalar_lea.hbm %s2, %s24
      %s26 = sshll.u32 %s25, 4
      %s27 = int_to_ptr.hbm [resolvable:$true] %s26
      %s28 = sshll.u32 [#allocation6], 4
      %s29 = int_to_ptr.vmem [resolvable:$true] %s28
      %34 = dma.hbm_to_vmem [thread:$0]  %s27, 1024, %s29, [#allocation7], 64, 64, 4
    $region5: #{brain_surf_gcn_forward.26} parent=1 // pred_fallthru
      _
    // Predicated region
    $region6: #{brain_surf_gcn_forward.26} parent=1 // pred_check
      _
    $region7: #{brain_surf_gcn_forward.26} parent=1 // pred_check_branch
      %36 = sbr.rel (0) target = $region9
    $region8: #{brain_surf_gcn_forward.26} parent=1 // pred_region
      %s37 = sadd.s32 0, 0
      %s38 = smul.u32 %s37, 128
      %s39 = sadd.s32 %s38, 0
      %s40 = sld [smem:[#allocation5 + %s39]]
      %s41 = smul.u32 16, %s40
      %p42 = scmp.lt.s32.totalorder %s41, 15
      %s43 = scalar_select %p42, %s41, 15
      %s44 = smul.addr %s43, 4
      %s45 = scalar_lea.vmem %s3, %s44
      %s46 = sadd.s32 0, 0
      %s47 = smul.u32 %s46, 128
      %s48 = sadd.s32 %s47, 0
      %s49 = sld [smem:[#allocation5 + %s48]]
      %s50 = smul.u32 16, %s49
    $region9: #{brain_surf_gcn_forward.26} parent=1 // pred_fallthru
      _
    // Predicated region
    $region10: #{brain_surf_gcn_forward.26} parent=1 // pred_check
      _
    $region11: #{brain_surf_gcn_forward.26} parent=1 // pred_check_branch
      %52 = sbr.rel (0) target = $region13
    $region12: #{brain_surf_gcn_forward.26} parent=1 // pred_region
      %54 = vsyncadd [#allocation9], 0
      %s56 = sshll.u32 %s4, 4
      %s57 = int_to_ptr.hbm [resolvable:$true] %s56
      %s58 = sshll.u32 [#allocation8], 4
      %s59 = int_to_ptr.vmem [resolvable:$true] %s58
      %61 = dma.hbm_to_vmem [thread:$0]  %s57, 16, %s59, [#allocation9]
    $region13: #{brain_surf_gcn_forward.26} parent=1 // pred_fallthru
      _
    // Predicated region
    $region14: #{brain_surf_gcn_forward.26} parent=1 // pred_check
      _
    $region15: #{brain_surf_gcn_forward.26} parent=1 // pred_check_branch
      %63 = sbr.rel (0) target = $region17
    $region16: #{brain_surf_gcn_forward.26} parent=1 // pred_region
      %65 = dma.done [#allocation7], 1024
    $region17: #{brain_surf_gcn_forward.26} parent=1 // pred_fallthru
      _
    // Predicated region
    $region18: #{brain_surf_gcn_forward.26} parent=1 // pred_check
      _
    $region19: #{brain_surf_gcn_forward.26} parent=1 // pred_check_branch
      %67 = sbr.rel (0) target = $region21
    $region20: #{brain_surf_gcn_forward.26} parent=1 // pred_region
      %69 = dma.done [#allocation9], 16
    $region21: #{brain_surf_gcn_forward.26} parent=1 // pred_fallthru
      _
    %s70 = sadd.s32 0, 0
    %s71 = smul.u32 %s70, 128
    %s72 = sadd.s32 %s71, 0
    %s73 = sld [smem:[#allocation5 + %s72]]
    %s74 = smul.u32 16, %s73
    %p75 = scmp.lt.s32.totalorder %s74, 15
    %s76 = scalar_select %p75, %s74, 15
    %s77 = smul.addr %s76, 4
    %s78 = scalar_lea.vmem %s3, %s77
    %s79 = sadd.s32 0, 0
    %s80 = smul.u32 %s79, 128
    %s81 = sadd.s32 %s80, 0
    %s82 = sld [smem:[#allocation5 + %s81]]
    %s83 = sadd.s32 0, 0
    %s84 = smul.u32 %s83, 128
    %s85 = sadd.s32 %s84, 0
    %s86 = sld [smem:[#allocation5 + %s85]]
    %s87 = smul.u32 16, %s86
    %p88 = scmp.lt.s32.totalorder %s87, 15
    %s89 = scalar_select %p88, %s87, 15
    %s90 = smul.addr %s89, 4
    %s91 = scalar_lea.vmem %s3, %s90
    %s92 = sadd.s32 0, 0
    %s93 = smul.u32 %s92, 128
    %s94 = sadd.s32 %s93, 0
    %s95 = sld [smem:[#allocation5 + %s94]]
    %s96 = smul.u32 16, %s95
    %p97 = scmp.eq.s32.totalorder 0, 0
    // Predicated region
    $region22: #{brain_surf_gcn_forward.26} parent=1 // pred_check
      %p98 = pneg %p97
    $region23: #{brain_surf_gcn_forward.26} parent=1 // pred_check_branch
      %100 = sbr.rel (%p98) target = $region25
    $region24: #{brain_surf_gcn_forward.26} parent=1 // pred_region
      %101 = vst [vmem:[#allocation2] sm:$0xff] 0.0
      %102 = vst [vmem:[#allocation2 + $0x8] sm:$0xff] 0.0
      %103 = vst [vmem:[#allocation2 + $0x10] sm:$0xff] 0.0
      %104 = vst [vmem:[#allocation2 + $0x18] sm:$0xff] 0.0
      %105 = vst [vmem:[#allocation2 + $0x20] sm:$0xff] 0.0
      %106 = vst [vmem:[#allocation2 + $0x28] sm:$0xff] 0.0
      %107 = vst [vmem:[#allocation2 + $0x30] sm:$0xff] 0.0
      %108 = vst [vmem:[#allocation2 + $0x38] sm:$0xff] 0.0
      %109 = vst [vmem:[#allocation2 + $0x40] sm:$0xff] 0.0
      %110 = vst [vmem:[#allocation2 + $0x48] sm:$0xff] 0.0
      %111 = vst [vmem:[#allocation2 + $0x50] sm:$0xff] 0.0
      %112 = vst [vmem:[#allocation2 + $0x58] sm:$0xff] 0.0
      %113 = vst [vmem:[#allocation2 + $0x60] sm:$0xff] 0.0
      %114 = vst [vmem:[#allocation2 + $0x68] sm:$0xff] 0.0
      %115 = vst [vmem:[#allocation2 + $0x70] sm:$0xff] 0.0
      %116 = vst [vmem:[#allocation2 + $0x78] sm:$0xff] 0.0
    $region25: #{brain_surf_gcn_forward.26} parent=1 // pred_fallthru
      _
    %s117 = sld [smem:[#allocation4]]
    %p118 = scmp.lt.s32.totalorder 0, %s117
    // Predicated region
    $region26: #{brain_surf_gcn_forward.26} parent=1 // pred_check
      %p119 = pneg %p118
    $region27: #{brain_surf_gcn_forward.26} parent=1 // pred_check_branch
      %121 = sbr.rel (%p119) target = $region29
    $region28: #{brain_surf_gcn_forward.26} parent=1 // pred_region
      %v122 = vld [vmem:[#allocation2] sm:$0xff]
      %v123 = vld [vmem:[#allocation2 + $0x8] sm:$0xff]
      %v124 = vld [vmem:[#allocation2 + $0x10] sm:$0xff]
      %v125 = vld [vmem:[#allocation2 + $0x18] sm:$0xff]
      %v126 = vld [vmem:[#allocation2 + $0x20] sm:$0xff]
      %v127 = vld [vmem:[#allocation2 + $0x28] sm:$0xff]
      %v128 = vld [vmem:[#allocation2 + $0x30] sm:$0xff]
      %v129 = vld [vmem:[#allocation2 + $0x38] sm:$0xff]
      %v130 = vld [vmem:[#allocation2 + $0x40] sm:$0xff]
      %v131 = vld [vmem:[#allocation2 + $0x48] sm:$0xff]
      %v132 = vld [vmem:[#allocation2 + $0x50] sm:$0xff]
      %v133 = vld [vmem:[#allocation2 + $0x58] sm:$0xff]
      %v134 = vld [vmem:[#allocation2 + $0x60] sm:$0xff]
      %v135 = vld [vmem:[#allocation2 + $0x68] sm:$0xff]
      %v136 = vld [vmem:[#allocation2 + $0x70] sm:$0xff]
      %v137 = vld [vmem:[#allocation2 + $0x78] sm:$0xff]
      %v138 = vld [vmem:[#allocation6] sm:$0xf]
      %v139 = vld [vmem:[#allocation6 + $0x4] sm:$0xf]
      %v140 = vld [vmem:[#allocation6 + $0x8] sm:$0xf]
      %v141 = vld [vmem:[#allocation6 + $0xc] sm:$0xf]
      %v142 = vld [vmem:[#allocation6 + $0x10] sm:$0xf]
      %v143 = vld [vmem:[#allocation6 + $0x14] sm:$0xf]
      %v144 = vld [vmem:[#allocation6 + $0x18] sm:$0xf]
      %v145 = vld [vmem:[#allocation6 + $0x1c] sm:$0xf]
      %v146 = vld [vmem:[#allocation6 + $0x20] sm:$0xf]
      %v147 = vld [vmem:[#allocation6 + $0x24] sm:$0xf]
      %v148 = vld [vmem:[#allocation6 + $0x28] sm:$0xf]
      %v149 = vld [vmem:[#allocation6 + $0x2c] sm:$0xf]
      %v150 = vld [vmem:[#allocation6 + $0x30] sm:$0xf]
      %v151 = vld [vmem:[#allocation6 + $0x34] sm:$0xf]
      %v152 = vld [vmem:[#allocation6 + $0x38] sm:$0xf]
      %v153 = vld [vmem:[#allocation6 + $0x3c] sm:$0xf]
      %v154 = vld [vmem:[%s91] sm:$0xf]
      %v155 = vld [vmem:[%s91 + $0x4] sm:$0xf]
      %v156 = vld [vmem:[%s91 + $0x8] sm:$0xf]
      %v157 = vld [vmem:[%s91 + $0xc] sm:$0xf]
      %v158 = vld [vmem:[%s91 + $0x10] sm:$0xf]
      %v159 = vld [vmem:[%s91 + $0x14] sm:$0xf]
      %v160 = vld [vmem:[%s91 + $0x18] sm:$0xf]
      %v161 = vld [vmem:[%s91 + $0x1c] sm:$0xf]
      %v162 = vld [vmem:[%s91 + $0x20] sm:$0xf]
      %v163 = vld [vmem:[%s91 + $0x24] sm:$0xf]
      %v164 = vld [vmem:[%s91 + $0x28] sm:$0xf]
      %v165 = vld [vmem:[%s91 + $0x2c] sm:$0xf]
      %v166 = vld [vmem:[%s91 + $0x30] sm:$0xf]
      %v167 = vld [vmem:[%s91 + $0x34] sm:$0xf]
      %v168 = vld [vmem:[%s91 + $0x38] sm:$0xf]
      %v169 = vld [vmem:[%s91 + $0x3c] sm:$0xf]
      %v186 = vunpack.c.l.b16 %v138
      %v187 = vunpack.c.l.b16 %v139
      %v188 = vunpack.c.l.b16 %v140
      %v189 = vunpack.c.l.b16 %v141
      %v190 = vunpack.c.l.b16 %v142
      %v191 = vunpack.c.l.b16 %v143
      %v192 = vunpack.c.l.b16 %v144
      %v193 = vunpack.c.l.b16 %v145
      %v194 = vunpack.c.l.b16 %v146
      %v195 = vunpack.c.l.b16 %v147
      %v196 = vunpack.c.l.b16 %v148
      %v197 = vunpack.c.l.b16 %v149
      %v198 = vunpack.c.l.b16 %v150
      %v199 = vunpack.c.l.b16 %v151
      %v200 = vunpack.c.l.b16 %v152
      %v201 = vunpack.c.l.b16 %v153
      %v202 = vpack.c.b16 %v187, %v186
      %v203 = vpack.c.b16 %v189, %v188
      %v204 = vpack.c.b16 %v191, %v190
      %v205 = vpack.c.b16 %v193, %v192
      %v206 = vpack.c.b16 %v195, %v194
      %v207 = vpack.c.b16 %v197, %v196
      %v208 = vpack.c.b16 %v199, %v198
      %v209 = vpack.c.b16 %v201, %v200
      %v234 = vunpack.c.l.b16 %v154
      %v235 = vunpack.c.l.b16 %v155
      %v236 = vunpack.c.l.b16 %v156
      %v237 = vunpack.c.l.b16 %v157
      %v238 = vunpack.c.l.b16 %v158
      %v239 = vunpack.c.l.b16 %v159
      %v240 = vunpack.c.l.b16 %v160
      %v241 = vunpack.c.l.b16 %v161
      %v242 = vunpack.c.l.b16 %v162
      %v243 = vunpack.c.l.b16 %v163
      %v244 = vunpack.c.l.b16 %v164
      %v245 = vunpack.c.l.b16 %v165
      %v246 = vunpack.c.l.b16 %v166
      %v247 = vunpack.c.l.b16 %v167
      %v248 = vunpack.c.l.b16 %v168
      %v249 = vunpack.c.l.b16 %v169
      %v250 = vpack.c.b16 %v235, %v234
      %v251 = vpack.c.b16 %v237, %v236
      %v252 = vpack.c.b16 %v239, %v238
      %v253 = vpack.c.b16 %v241, %v240
      %v254 = vpack.c.b16 %v243, %v242
      %v255 = vpack.c.b16 %v245, %v244
      %v256 = vpack.c.b16 %v247, %v246
      %v257 = vpack.c.b16 %v249, %v248
      %266 = vmatpush.bf16.msra.mxu0 %v257
      %267 = vmatpush.bf16.msra.mxu0 %v256
      %268 = vmatpush.bf16.msra.mxu0 %v255
      %269 = vmatpush.bf16.msra.mxu0 %v254
      %270 = vmatpush.bf16.msra.mxu0 %v253
      %271 = vmatpush.bf16.msra.mxu0 %v252
      %272 = vmatpush.bf16.msra.mxu0 %v251
      %273 = vmatpush.bf16.msra.mxu0 %v250
      %274 = vmatmul.bf16.gmra.mxu0 %v202
      %v275 = vpop.f32.mrf.mxu0
      %v276 = vadd.f32 0.0, %v275
      %v277 = vpop.f32.mrf.mxu0
      %v278 = vadd.f32 0.0, %v277
      %279 = vmatmul.bf16.gmra.mxu0 %v203
      %v280 = vpop.f32.mrf.mxu0
      %v281 = vadd.f32 0.0, %v280
      %v282 = vpop.f32.mrf.mxu0
      %v283 = vadd.f32 0.0, %v282
      %284 = vmatmul.bf16.gmra.mxu0 %v204
      %v285 = vpop.f32.mrf.mxu0
      %v286 = vadd.f32 0.0, %v285
      %v287 = vpop.f32.mrf.mxu0
      %v288 = vadd.f32 0.0, %v287
      %289 = vmatmul.bf16.gmra.mxu0 %v205
      %v290 = vpop.f32.mrf.mxu0
      %v291 = vadd.f32 0.0, %v290
      %v292 = vpop.f32.mrf.mxu0
      %v293 = vadd.f32 0.0, %v292
      %294 = vmatmul.bf16.gmra.mxu0 %v206
      %v295 = vpop.f32.mrf.mxu0
      %v296 = vadd.f32 0.0, %v295
      %v297 = vpop.f32.mrf.mxu0
      %v298 = vadd.f32 0.0, %v297
      %299 = vmatmul.bf16.gmra.mxu0 %v207
      %v300 = vpop.f32.mrf.mxu0
      %v301 = vadd.f32 0.0, %v300
      %v302 = vpop.f32.mrf.mxu0
      %v303 = vadd.f32 0.0, %v302
      %304 = vmatmul.bf16.gmra.mxu0 %v208
      %v305 = vpop.f32.mrf.mxu0
      %v306 = vadd.f32 0.0, %v305
      %v307 = vpop.f32.mrf.mxu0
      %v308 = vadd.f32 0.0, %v307
      %309 = vmatmul.bf16.gmra.mxu0 %v209
      %v310 = vpop.f32.mrf.mxu0
      %v311 = vadd.f32 0.0, %v310
      %v312 = vpop.f32.mrf.mxu0
      %v313 = vadd.f32 0.0, %v312
      %314 = vdwg.mxu0
      %v315 = vadd.f32 %v122, %v276
      %v316 = vadd.f32 %v123, %v278
      %v317 = vadd.f32 %v124, %v281
      %v318 = vadd.f32 %v125, %v283
      %v319 = vadd.f32 %v126, %v286
      %v320 = vadd.f32 %v127, %v288
      %v321 = vadd.f32 %v128, %v291
      %v322 = vadd.f32 %v129, %v293
      %v323 = vadd.f32 %v130, %v296
      %v324 = vadd.f32 %v131, %v298
      %v325 = vadd.f32 %v132, %v301
      %v326 = vadd.f32 %v133, %v303
      %v327 = vadd.f32 %v134, %v306
      %v328 = vadd.f32 %v135, %v308
      %v329 = vadd.f32 %v136, %v311
      %v330 = vadd.f32 %v137, %v313
      %331 = vst [vmem:[#allocation2] sm:$0xff] %v315
      %332 = vst [vmem:[#allocation2 + $0x8] sm:$0xff] %v316
      %333 = vst [vmem:[#allocation2 + $0x10] sm:$0xff] %v317
      %334 = vst [vmem:[#allocation2 + $0x18] sm:$0xff] %v318
      %335 = vst [vmem:[#allocation2 + $0x20] sm:$0xff] %v319
      %336 = vst [vmem:[#allocation2 + $0x28] sm:$0xff] %v320
      %337 = vst [vmem:[#allocation2 + $0x30] sm:$0xff] %v321
      %338 = vst [vmem:[#allocation2 + $0x38] sm:$0xff] %v322
      %339 = vst [vmem:[#allocation2 + $0x40] sm:$0xff] %v323
      %340 = vst [vmem:[#allocation2 + $0x48] sm:$0xff] %v324
      %341 = vst [vmem:[#allocation2 + $0x50] sm:$0xff] %v325
      %342 = vst [vmem:[#allocation2 + $0x58] sm:$0xff] %v326
      %343 = vst [vmem:[#allocation2 + $0x60] sm:$0xff] %v327
      %344 = vst [vmem:[#allocation2 + $0x68] sm:$0xff] %v328
      %345 = vst [vmem:[#allocation2 + $0x70] sm:$0xff] %v329
      %346 = vst [vmem:[#allocation2 + $0x78] sm:$0xff] %v330
    $region29: #{brain_surf_gcn_forward.26} parent=1 // pred_fallthru
      _
    // Predicated region
    $region30: #{brain_surf_gcn_forward.26} parent=1 // pred_check
      %p347 = pneg %p97
    $region31: #{brain_surf_gcn_forward.26} parent=1 // pred_check_branch
      %349 = sbr.rel (%p347) target = $region33
    $region32: #{brain_surf_gcn_forward.26} parent=1 // pred_region
      %v350 = vld [vmem:[#allocation2] sm:$0xff]
      %v351 = vld [vmem:[#allocation2 + $0x8] sm:$0xff]
      %v352 = vld [vmem:[#allocation2 + $0x10] sm:$0xff]
      %v353 = vld [vmem:[#allocation2 + $0x18] sm:$0xff]
      %v354 = vld [vmem:[#allocation2 + $0x20] sm:$0xff]
      %v355 = vld [vmem:[#allocation2 + $0x28] sm:$0xff]
      %v356 = vld [vmem:[#allocation2 + $0x30] sm:$0xff]
      %v357 = vld [vmem:[#allocation2 + $0x38] sm:$0xff]
      %v358 = vld [vmem:[#allocation2 + $0x40] sm:$0xff]
      %v359 = vld [vmem:[#allocation2 + $0x48] sm:$0xff]
      %v360 = vld [vmem:[#allocation2 + $0x50] sm:$0xff]
      %v361 = vld [vmem:[#allocation2 + $0x58] sm:$0xff]
      %v362 = vld [vmem:[#allocation2 + $0x60] sm:$0xff]
      %v363 = vld [vmem:[#allocation2 + $0x68] sm:$0xff]
      %v364 = vld [vmem:[#allocation2 + $0x70] sm:$0xff]
      %v365 = vld [vmem:[#allocation2 + $0x78] sm:$0xff]
      %v366 = vld [vmem:[#allocation8] sm:$0x1]
      %v368 = vperm.slane %v366, 0
      %v370 = vadd.f32 %v350, %v368
      %v371 = vadd.f32 %v351, %v368
      %v372 = vadd.f32 %v352, %v368
      %v373 = vadd.f32 %v353, %v368
      %v374 = vadd.f32 %v354, %v368
      %v375 = vadd.f32 %v355, %v368
      %v376 = vadd.f32 %v356, %v368
      %v377 = vadd.f32 %v357, %v368
      %v378 = vadd.f32 %v358, %v368
      %v379 = vadd.f32 %v359, %v368
      %v380 = vadd.f32 %v360, %v368
      %v381 = vadd.f32 %v361, %v368
      %v382 = vadd.f32 %v362, %v368
      %v383 = vadd.f32 %v363, %v368
      %v384 = vadd.f32 %v364, %v368
      %v385 = vadd.f32 %v365, %v368
      %vm386 = vcmp.ge.f32.partialorder %v370, 0.0
      %vm387 = vcmp.ge.f32.partialorder %v371, 0.0
      %vm388 = vcmp.ge.f32.partialorder %v372, 0.0
      %vm389 = vcmp.ge.f32.partialorder %v373, 0.0
      %vm390 = vcmp.ge.f32.partialorder %v374, 0.0
      %vm391 = vcmp.ge.f32.partialorder %v375, 0.0
      %vm392 = vcmp.ge.f32.partialorder %v376, 0.0
      %vm393 = vcmp.ge.f32.partialorder %v377, 0.0
      %vm394 = vcmp.ge.f32.partialorder %v378, 0.0
      %vm395 = vcmp.ge.f32.partialorder %v379, 0.0
      %vm396 = vcmp.ge.f32.partialorder %v380, 0.0
      %vm397 = vcmp.ge.f32.partialorder %v381, 0.0
      %vm398 = vcmp.ge.f32.partialorder %v382, 0.0
      %vm399 = vcmp.ge.f32.partialorder %v383, 0.0
      %vm400 = vcmp.ge.f32.partialorder %v384, 0.0
      %vm401 = vcmp.ge.f32.partialorder %v385, 0.0
      %v402 = vmul.f32 %v370, 0.01
      %v403 = vmul.f32 %v371, 0.01
      %v404 = vmul.f32 %v372, 0.01
      %v405 = vmul.f32 %v373, 0.01
      %v406 = vmul.f32 %v374, 0.01
      %v407 = vmul.f32 %v375, 0.01
      %v408 = vmul.f32 %v376, 0.01
      %v409 = vmul.f32 %v377, 0.01
      %v410 = vmul.f32 %v378, 0.01
      %v411 = vmul.f32 %v379, 0.01
      %v412 = vmul.f32 %v380, 0.01
      %v413 = vmul.f32 %v381, 0.01
      %v414 = vmul.f32 %v382, 0.01
      %v415 = vmul.f32 %v383, 0.01
      %v416 = vmul.f32 %v384, 0.01
      %v417 = vmul.f32 %v385, 0.01
      %v418 = vsel %vm386, %v370, %v402
      %v419 = vsel %vm387, %v371, %v403
      %v420 = vsel %vm388, %v372, %v404
      %v421 = vsel %vm389, %v373, %v405
      %v422 = vsel %vm390, %v374, %v406
      %v423 = vsel %vm391, %v375, %v407
      %v424 = vsel %vm392, %v376, %v408
      %v425 = vsel %vm393, %v377, %v409
      %v426 = vsel %vm394, %v378, %v410
      %v427 = vsel %vm395, %v379, %v411
      %v428 = vsel %vm396, %v380, %v412
      %v429 = vsel %vm397, %v381, %v413
      %v430 = vsel %vm398, %v382, %v414
      %v431 = vsel %vm399, %v383, %v415
      %v432 = vsel %vm400, %v384, %v416
      %v433 = vsel %vm401, %v385, %v417
      %434 = vst [vmem:[%s5] sm:$0xff] %v418
      %435 = vst [vmem:[%s5 + $0x8] sm:$0xff] %v419
      %436 = vst [vmem:[%s5 + $0x10] sm:$0xff] %v420
      %437 = vst [vmem:[%s5 + $0x18] sm:$0xff] %v421
      %438 = vst [vmem:[%s5 + $0x20] sm:$0xff] %v422
      %439 = vst [vmem:[%s5 + $0x28] sm:$0xff] %v423
      %440 = vst [vmem:[%s5 + $0x30] sm:$0xff] %v424
      %441 = vst [vmem:[%s5 + $0x38] sm:$0xff] %v425
      %442 = vst [vmem:[%s5 + $0x40] sm:$0xff] %v426
      %443 = vst [vmem:[%s5 + $0x48] sm:$0xff] %v427
      %444 = vst [vmem:[%s5 + $0x50] sm:$0xff] %v428
      %445 = vst [vmem:[%s5 + $0x58] sm:$0xff] %v429
      %446 = vst [vmem:[%s5 + $0x60] sm:$0xff] %v430
      %447 = vst [vmem:[%s5 + $0x68] sm:$0xff] %v431
      %448 = vst [vmem:[%s5 + $0x70] sm:$0xff] %v432
      %449 = vst [vmem:[%s5 + $0x78] sm:$0xff] %v433
      %s450 = smul.u32 0, 128
      %v451 = vlaneseq
      %v452 = vshrl.u32 %v451, 7
      %v453 = vadd.s32 %v452, 8
      %v454 = vadd.s32 %v452, 16
      %v455 = vadd.s32 %v452, 24
      %v456 = vadd.s32 %v452, 32
      %v457 = vadd.s32 %v452, 40
      %v458 = vadd.s32 %v452, 48
      %v459 = vadd.s32 %v452, 56
      %v460 = vadd.s32 %v452, 64
      %v461 = vadd.s32 %v452, 72
      %v462 = vadd.s32 %v452, 80
      %v463 = vadd.s32 %v452, 88
      %v464 = vadd.s32 %v452, 96
      %v465 = vadd.s32 %v452, 104
      %v466 = vadd.s32 %v452, 112
      %v467 = vadd.s32 %v452, 120
      %v468 = vstv %s450
      %v469 = vadd.s32 %v468, %v452
      %v470 = vadd.s32 %v468, %v453
      %v471 = vadd.s32 %v468, %v454
      %v472 = vadd.s32 %v468, %v455
      %v473 = vadd.s32 %v468, %v456
      %v474 = vadd.s32 %v468, %v457
      %v475 = vadd.s32 %v468, %v458
      %v476 = vadd.s32 %v468, %v459
      %v477 = vadd.s32 %v468, %v460
      %v478 = vadd.s32 %v468, %v461
      %v479 = vadd.s32 %v468, %v462
      %v480 = vadd.s32 %v468, %v463
      %v481 = vadd.s32 %v468, %v464
      %v482 = vadd.s32 %v468, %v465
      %v483 = vadd.s32 %v468, %v466
      %v484 = vadd.s32 %v468, %v467
      %vm485 = vcmp.lt.s32.totalorder %v469, 16
      %vm486 = vcmp.lt.s32.totalorder %v470, 16
      %vm487 = vcmp.lt.s32.totalorder %v471, 16
      %vm488 = vcmp.lt.s32.totalorder %v472, 16
      %vm489 = vcmp.lt.s32.totalorder %v473, 16
      %vm490 = vcmp.lt.s32.totalorder %v474, 16
      %vm491 = vcmp.lt.s32.totalorder %v475, 16
      %vm492 = vcmp.lt.s32.totalorder %v476, 16
      %vm493 = vcmp.lt.s32.totalorder %v477, 16
      %vm494 = vcmp.lt.s32.totalorder %v478, 16
      %vm495 = vcmp.lt.s32.totalorder %v479, 16
      %vm496 = vcmp.lt.s32.totalorder %v480, 16
      %vm497 = vcmp.lt.s32.totalorder %v481, 16
      %vm498 = vcmp.lt.s32.totalorder %v482, 16
      %vm499 = vcmp.lt.s32.totalorder %v483, 16
      %vm500 = vcmp.lt.s32.totalorder %v484, 16
      %v501 = vsel %vm485, %v418, 0.0
      %v502 = vsel %vm486, %v419, 0.0
      %v503 = vsel %vm487, %v420, 0.0
      %v504 = vsel %vm488, %v421, 0.0
      %v505 = vsel %vm489, %v422, 0.0
      %v506 = vsel %vm490, %v423, 0.0
      %v507 = vsel %vm491, %v424, 0.0
      %v508 = vsel %vm492, %v425, 0.0
      %v509 = vsel %vm493, %v426, 0.0
      %v510 = vsel %vm494, %v427, 0.0
      %v511 = vsel %vm495, %v428, 0.0
      %v512 = vsel %vm496, %v429, 0.0
      %v513 = vsel %vm497, %v430, 0.0
      %v514 = vsel %vm498, %v431, 0.0
      %v515 = vsel %vm499, %v432, 0.0
      %v516 = vsel %vm500, %v433, 0.0
      %v517 = vadd.f32 %v501, %v502
      %v518 = vadd.f32 %v517, %v503
      %v519 = vadd.f32 %v518, %v504
      %v520 = vadd.f32 %v519, %v505
      %v521 = vadd.f32 %v520, %v506
      %v522 = vadd.f32 %v521, %v507
      %v523 = vadd.f32 %v522, %v508
      %v524 = vadd.f32 %v523, %v509
      %v525 = vadd.f32 %v524, %v510
      %v526 = vadd.f32 %v525, %v511
      %v527 = vadd.f32 %v526, %v512
      %v528 = vadd.f32 %v527, %v513
      %v529 = vadd.f32 %v528, %v514
      %v530 = vadd.f32 %v529, %v515
      %v531 = vadd.f32 %v530, %v516
      %v532 = vrot.slane %v531, 4
      %v533 = vadd.f32 %v531, %v532
      %v534 = vrot.slane %v533, 2
      %v535 = vadd.f32 %v533, %v534
      %v536 = vrot.slane %v535, 1
      %v537 = vadd.f32 %v535, %v536
      %v538 = vmul.f32 %v501, %v501
      %v539 = vmul.f32 %v502, %v502
      %v540 = vmul.f32 %v503, %v503
      %v541 = vmul.f32 %v504, %v504
      %v542 = vmul.f32 %v505, %v505
      %v543 = vmul.f32 %v506, %v506
      %v544 = vmul.f32 %v507, %v507
      %v545 = vmul.f32 %v508, %v508
      %v546 = vmul.f32 %v509, %v509
      %v547 = vmul.f32 %v510, %v510
      %v548 = vmul.f32 %v511, %v511
      %v549 = vmul.f32 %v512, %v512
      %v550 = vmul.f32 %v513, %v513
      %v551 = vmul.f32 %v514, %v514
      %v552 = vmul.f32 %v515, %v515
      %v553 = vmul.f32 %v516, %v516
      %v554 = vadd.f32 %v538, %v539
      %v555 = vadd.f32 %v554, %v540
      %v556 = vadd.f32 %v555, %v541
      %v557 = vadd.f32 %v556, %v542
      %v558 = vadd.f32 %v557, %v543
      %v559 = vadd.f32 %v558, %v544
      %v560 = vadd.f32 %v559, %v545
      %v561 = vadd.f32 %v560, %v546
      %v562 = vadd.f32 %v561, %v547
      %v563 = vadd.f32 %v562, %v548
      %v564 = vadd.f32 %v563, %v549
      %v565 = vadd.f32 %v564, %v550
      %v566 = vadd.f32 %v565, %v551
      %v567 = vadd.f32 %v566, %v552
      %v568 = vadd.f32 %v567, %v553
      %v569 = vrot.slane %v568, 4
      %v570 = vadd.f32 %v568, %v569
      %v571 = vrot.slane %v570, 2
      %v572 = vadd.f32 %v570, %v571
      %v573 = vrot.slane %v572, 1
      %v574 = vadd.f32 %v572, %v573
      %vm575 = vcmp.eq.s32.totalorder %v452, 0
      %v576 = vsel %vm575, %v537, 0.0
      %vm577 = vcmp.eq.s32.totalorder %v452, 1
      %v578 = vsel %vm577, %v574, 0.0
      %v579 = vadd.f32 %v576, %v578
      %580 = vst [vmem:[%s6] sm:$0xff] %v579
    $region33: #{brain_surf_gcn_forward.26} parent=1 // pred_fallthru
      _
    // Predicated region
    $region34: #{brain_surf_gcn_forward.26} parent=1 // pred_check
      _
    $region35: #{brain_surf_gcn_forward.26} parent=1 // pred_check_branch
      %582 = sbr.rel (0) target = $region37
    $region36: #{brain_surf_gcn_forward.26} parent=1 // pred_region
      _
    $region37: #{brain_surf_gcn_forward.26} parent=1 // pred_fallthru
      _
    // Predicated region
    $region38: #{brain_surf_gcn_forward.26} parent=1 // pred_check
      _
    $region39: #{brain_surf_gcn_forward.26} parent=1 // pred_check_branch
      %584 = sbr.rel (0) target = $region41
    $region40: #{brain_surf_gcn_forward.26} parent=1 // pred_region
      _
    $region41: #{brain_surf_gcn_forward.26} parent=1 // pred_fallthru
      _
    // Predicated region
    $region42: #{brain_surf_gcn_forward.26} parent=1 // pred_check
      _
    $region43: #{brain_surf_gcn_forward.26} parent=1 // pred_check_branch
      %586 = sbr.rel (0) target = $region45
    $region44: #{brain_surf_gcn_forward.26} parent=1 // pred_region
      _
    $region45: #{brain_surf_gcn_forward.26} parent=1 // pred_fallthru
      _
    // Predicated region
    $region46: #{brain_surf_gcn_forward.26} parent=1 // pred_check
      _
    $region47: #{brain_surf_gcn_forward.26} parent=1 // pred_check_branch
      %588 = sbr.rel (0) target = $region49
    $region48: #{brain_surf_gcn_forward.26} parent=1 // pred_region
      _
    $region49: #{brain_surf_gcn_forward.26} parent=1 // pred_fallthru
      _
    %589 = vsyncpa [#allocation7], 1
    %590 = vsyncpa [#allocation9], 1

// kernel: brain_surf_gcn_forward.33
$region0: #{brain_surf_gcn_forward.33}
  #allocation0 [shape = 'u32[]', space=smem, size = 0x4, offset = 0x4, fixed_abs, tag = 'smem constant byte address 0x4 - core index']
  #allocation1 [shape = 'u32[72,128]{1,0:T(1,128)}', space=vmem, size = 0x9000, scoped, tag = 'internal scratch']
  %s0 = inlined_call_operand.vmem [shape: f32[128,128], index: 0, kind: input, shape index: {}]
  %s1 = inlined_call_operand.vmem [shape: f32[1,128], index: 1, kind: input, shape index: {}]
  %s2 = inlined_call_operand.vmem [shape: f32[1,128], index: 2, kind: input, shape index: {}]
  %s3 = inlined_call_operand.vmem [shape: f32[1,128], index: 3, kind: input, shape index: {}]
  %s4 = inlined_call_operand.vmem [shape: f32[1,128], index: 4, kind: input, shape index: {}]
  %s5 = inlined_call_operand.vmem [shape: f32[128,128], index: 5, kind: output, shape index: {}]
  %s6 = sld [smem:[#allocation0]]
  $region30: #{brain_surf_gcn_forward.33} parent=0
    _
  %s8 = ssub.s32 1, %s6
  %s9 = scalar_select 0, %s8, %s6
  // Predicated region
  $region2: #{brain_surf_gcn_forward.33} parent=0 // pred_check
    _
  $region3: #{brain_surf_gcn_forward.33} parent=0 // pred_check_branch
    %11 = sbr.rel (0) target = $region5
  $region4: #{brain_surf_gcn_forward.33} parent=0 // pred_region
    _
  $region5: #{brain_surf_gcn_forward.33} parent=0 // pred_fallthru
    _
  // Predicated region
  $region6: #{brain_surf_gcn_forward.33} parent=0 // pred_check
    _
  $region7: #{brain_surf_gcn_forward.33} parent=0 // pred_check_branch
    %13 = sbr.rel (0) target = $region9
  $region8: #{brain_surf_gcn_forward.33} parent=0 // pred_region
    _
  $region9: #{brain_surf_gcn_forward.33} parent=0 // pred_fallthru
    _
  // Predicated region
  $region10: #{brain_surf_gcn_forward.33} parent=0 // pred_check
    _
  $region11: #{brain_surf_gcn_forward.33} parent=0 // pred_check_branch
    %15 = sbr.rel (0) target = $region13
  $region12: #{brain_surf_gcn_forward.33} parent=0 // pred_region
    _
  $region13: #{brain_surf_gcn_forward.33} parent=0 // pred_fallthru
    _
  // Predicated region
  $region14: #{brain_surf_gcn_forward.33} parent=0 // pred_check
    _
  $region15: #{brain_surf_gcn_forward.33} parent=0 // pred_check_branch
    %17 = sbr.rel (0) target = $region17
  $region16: #{brain_surf_gcn_forward.33} parent=0 // pred_region
    _
  $region17: #{brain_surf_gcn_forward.33} parent=0 // pred_fallthru
    _
  // Predicated region
  $region18: #{brain_surf_gcn_forward.33} parent=0 // pred_check
    _
  $region19: #{brain_surf_gcn_forward.33} parent=0 // pred_check_branch
    %19 = sbr.rel (0) target = $region21
  $region20: #{brain_surf_gcn_forward.33} parent=0 // pred_region
    _
  $region21: #{brain_surf_gcn_forward.33} parent=0 // pred_fallthru
    _
  %v20 = vld [vmem:[%s0] sm:$0xff]
  %v21 = vld [vmem:[%s0 + $0x8] sm:$0xff]
  %v22 = vld [vmem:[%s0 + $0x10] sm:$0xff]
  %v23 = vld [vmem:[%s0 + $0x18] sm:$0xff]
  %v24 = vld [vmem:[%s0 + $0x20] sm:$0xff]
  %v25 = vld [vmem:[%s0 + $0x28] sm:$0xff]
  %v26 = vld [vmem:[%s0 + $0x30] sm:$0xff]
  %v27 = vld [vmem:[%s0 + $0x38] sm:$0xff]
  %v28 = vld [vmem:[%s0 + $0x40] sm:$0xff]
  %v29 = vld [vmem:[%s0 + $0x48] sm:$0xff]
  %v30 = vld [vmem:[%s0 + $0x50] sm:$0xff]
  %v31 = vld [vmem:[%s0 + $0x58] sm:$0xff]
  %v32 = vld [vmem:[%s0 + $0x60] sm:$0xff]
  %v33 = vld [vmem:[%s0 + $0x68] sm:$0xff]
  %v34 = vld [vmem:[%s0 + $0x70] sm:$0xff]
  %v35 = vld [vmem:[%s0 + $0x78] sm:$0xff]
  %v36 = vld [vmem:[%s1] sm:$0x1]
  %v38 = vperm.slane %v36, 0
  %v40 = vsub.f32 %v20, %v38
  %v41 = vsub.f32 %v21, %v38
  %v42 = vsub.f32 %v22, %v38
  %v43 = vsub.f32 %v23, %v38
  %v44 = vsub.f32 %v24, %v38
  %v45 = vsub.f32 %v25, %v38
  %v46 = vsub.f32 %v26, %v38
  %v47 = vsub.f32 %v27, %v38
  %v48 = vsub.f32 %v28, %v38
  %v49 = vsub.f32 %v29, %v38
  %v50 = vsub.f32 %v30, %v38
  %v51 = vsub.f32 %v31, %v38
  %v52 = vsub.f32 %v32, %v38
  %v53 = vsub.f32 %v33, %v38
  %v54 = vsub.f32 %v34, %v38
  %v55 = vsub.f32 %v35, %v38
  %v56 = vld [vmem:[%s2] sm:$0x1]
  %v58 = vperm.slane %v56, 0
  %v60 = vmul.f32 %v40, %v58
  %v61 = vmul.f32 %v41, %v58
  %v62 = vmul.f32 %v42, %v58
  %v63 = vmul.f32 %v43, %v58
  %v64 = vmul.f32 %v44, %v58
  %v65 = vmul.f32 %v45, %v58
  %v66 = vmul.f32 %v46, %v58
  %v67 = vmul.f32 %v47, %v58
  %v68 = vmul.f32 %v48, %v58
  %v69 = vmul.f32 %v49, %v58
  %v70 = vmul.f32 %v50, %v58
  %v71 = vmul.f32 %v51, %v58
  %v72 = vmul.f32 %v52, %v58
  %v73 = vmul.f32 %v53, %v58
  %v74 = vmul.f32 %v54, %v58
  %v75 = vmul.f32 %v55, %v58
  %v76 = vld [vmem:[%s3] sm:$0x1]
  %v78 = vperm.slane %v76, 0
  %v80 = vmul.f32 %v60, %v78
  %v81 = vmul.f32 %v61, %v78
  %v82 = vmul.f32 %v62, %v78
  %v83 = vmul.f32 %v63, %v78
  %v84 = vmul.f32 %v64, %v78
  %v85 = vmul.f32 %v65, %v78
  %v86 = vmul.f32 %v66, %v78
  %v87 = vmul.f32 %v67, %v78
  %v88 = vmul.f32 %v68, %v78
  %v89 = vmul.f32 %v69, %v78
  %v90 = vmul.f32 %v70, %v78
  %v91 = vmul.f32 %v71, %v78
  %v92 = vmul.f32 %v72, %v78
  %v93 = vmul.f32 %v73, %v78
  %v94 = vmul.f32 %v74, %v78
  %v95 = vmul.f32 %v75, %v78
  %v96 = vld [vmem:[%s4] sm:$0x1]
  %v98 = vperm.slane %v96, 0
  %v100 = vadd.f32 %v80, %v98
  %v101 = vadd.f32 %v81, %v98
  %v102 = vadd.f32 %v82, %v98
  %v103 = vadd.f32 %v83, %v98
  %v104 = vadd.f32 %v84, %v98
  %v105 = vadd.f32 %v85, %v98
  %v106 = vadd.f32 %v86, %v98
  %v107 = vadd.f32 %v87, %v98
  %v108 = vadd.f32 %v88, %v98
  %v109 = vadd.f32 %v89, %v98
  %v110 = vadd.f32 %v90, %v98
  %v111 = vadd.f32 %v91, %v98
  %v112 = vadd.f32 %v92, %v98
  %v113 = vadd.f32 %v93, %v98
  %v114 = vadd.f32 %v94, %v98
  %v115 = vadd.f32 %v95, %v98
  %116 = vst [vmem:[%s5] sm:$0xff] %v100
  %117 = vst [vmem:[%s5 + $0x8] sm:$0xff] %v101
  %118 = vst [vmem:[%s5 + $0x10] sm:$0xff] %v102
  %119 = vst [vmem:[%s5 + $0x18] sm:$0xff] %v103
  %120 = vst [vmem:[%s5 + $0x20] sm:$0xff] %v104
  %121 = vst [vmem:[%s5 + $0x28] sm:$0xff] %v105
  %122 = vst [vmem:[%s5 + $0x30] sm:$0xff] %v106
  %123 = vst [vmem:[%s5 + $0x38] sm:$0xff] %v107
  %124 = vst [vmem:[%s5 + $0x40] sm:$0xff] %v108
  %125 = vst [vmem:[%s5 + $0x48] sm:$0xff] %v109
  %126 = vst [vmem:[%s5 + $0x50] sm:$0xff] %v110
  %127 = vst [vmem:[%s5 + $0x58] sm:$0xff] %v111
  %128 = vst [vmem:[%s5 + $0x60] sm:$0xff] %v112
  %129 = vst [vmem:[%s5 + $0x68] sm:$0xff] %v113
  %130 = vst [vmem:[%s5 + $0x70] sm:$0xff] %v114
  %131 = vst [vmem:[%s5 + $0x78] sm:$0xff] %v115
  // Predicated region
  $region22: #{brain_surf_gcn_forward.33} parent=0 // pred_check
    _
  $region23: #{brain_surf_gcn_forward.33} parent=0 // pred_check_branch
    %133 = sbr.rel (0) target = $region25
  $region24: #{brain_surf_gcn_forward.33} parent=0 // pred_region
    _
  $region25: #{brain_surf_gcn_forward.33} parent=0 // pred_fallthru
    _
  // Predicated region
  $region26: #{brain_surf_gcn_forward.33} parent=0 // pred_check
    _
  $region27: #{brain_surf_gcn_forward.33} parent=0 // pred_check_branch
    %135 = sbr.rel (0) target = $region29
  $region28: #{brain_surf_gcn_forward.33} parent=0 // pred_region
    _
  $region29: #{brain_surf_gcn_forward.33} parent=0 // pred_fallthru
    _

// kernel: brain_surf_gcn_forward.39
$region0: #{brain_surf_gcn_forward.39}
  #allocation0 [shape = 'u32[]', space=smem, size = 0x4, offset = 0x4, fixed_abs, tag = 'smem constant byte address 0x4 - core index']
  #allocation1 [shape = 'u32[72,128]{1,0:T(1,128)}', space=vmem, size = 0x9000, scoped, tag = 'internal scratch']
  %s0 = inlined_call_operand.vmem [shape: f32[128,128], index: 0, kind: input, shape index: {}]
  %s1 = inlined_call_operand.vmem [shape: f32[1,128], index: 1, kind: input, shape index: {}]
  %s2 = inlined_call_operand.vmem [shape: f32[1,128], index: 2, kind: input, shape index: {}]
  %s3 = inlined_call_operand.vmem [shape: f32[1,128], index: 3, kind: input, shape index: {}]
  %s4 = inlined_call_operand.vmem [shape: f32[1,128], index: 4, kind: input, shape index: {}]
  %s5 = inlined_call_operand.vmem [shape: f32[128,128], index: 5, kind: input, shape index: {}]
  %s6 = inlined_call_operand.vmem [shape: f32[128,128], index: 6, kind: output, shape index: {}]
  %s7 = sld [smem:[#allocation0]]
  $region34: #{brain_surf_gcn_forward.39} parent=0
    _
  %s9 = ssub.s32 1, %s7
  %s10 = scalar_select 0, %s9, %s7
  // Predicated region
  $region2: #{brain_surf_gcn_forward.39} parent=0 // pred_check
    _
  $region3: #{brain_surf_gcn_forward.39} parent=0 // pred_check_branch
    %12 = sbr.rel (0) target = $region5
  $region4: #{brain_surf_gcn_forward.39} parent=0 // pred_region
    _
  $region5: #{brain_surf_gcn_forward.39} parent=0 // pred_fallthru
    _
  // Predicated region
  $region6: #{brain_surf_gcn_forward.39} parent=0 // pred_check
    _
  $region7: #{brain_surf_gcn_forward.39} parent=0 // pred_check_branch
    %14 = sbr.rel (0) target = $region9
  $region8: #{brain_surf_gcn_forward.39} parent=0 // pred_region
    _
  $region9: #{brain_surf_gcn_forward.39} parent=0 // pred_fallthru
    _
  // Predicated region
  $region10: #{brain_surf_gcn_forward.39} parent=0 // pred_check
    _
  $region11: #{brain_surf_gcn_forward.39} parent=0 // pred_check_branch
    %16 = sbr.rel (0) target = $region13
  $region12: #{brain_surf_gcn_forward.39} parent=0 // pred_region
    _
  $region13: #{brain_surf_gcn_forward.39} parent=0 // pred_fallthru
    _
  // Predicated region
  $region14: #{brain_surf_gcn_forward.39} parent=0 // pred_check
    _
  $region15: #{brain_surf_gcn_forward.39} parent=0 // pred_check_branch
    %18 = sbr.rel (0) target = $region17
  $region16: #{brain_surf_gcn_forward.39} parent=0 // pred_region
    _
  $region17: #{brain_surf_gcn_forward.39} parent=0 // pred_fallthru
    _
  // Predicated region
  $region18: #{brain_surf_gcn_forward.39} parent=0 // pred_check
    _
  $region19: #{brain_surf_gcn_forward.39} parent=0 // pred_check_branch
    %20 = sbr.rel (0) target = $region21
  $region20: #{brain_surf_gcn_forward.39} parent=0 // pred_region
    _
  $region21: #{brain_surf_gcn_forward.39} parent=0 // pred_fallthru
    _
  // Predicated region
  $region22: #{brain_surf_gcn_forward.39} parent=0 // pred_check
    _
  $region23: #{brain_surf_gcn_forward.39} parent=0 // pred_check_branch
    %22 = sbr.rel (0) target = $region25
  $region24: #{brain_surf_gcn_forward.39} parent=0 // pred_region
    _
  $region25: #{brain_surf_gcn_forward.39} parent=0 // pred_fallthru
    _
  %v23 = vld [vmem:[%s0] sm:$0xff]
  %v24 = vld [vmem:[%s0 + $0x8] sm:$0xff]
  %v25 = vld [vmem:[%s0 + $0x10] sm:$0xff]
  %v26 = vld [vmem:[%s0 + $0x18] sm:$0xff]
  %v27 = vld [vmem:[%s0 + $0x20] sm:$0xff]
  %v28 = vld [vmem:[%s0 + $0x28] sm:$0xff]
  %v29 = vld [vmem:[%s0 + $0x30] sm:$0xff]
  %v30 = vld [vmem:[%s0 + $0x38] sm:$0xff]
  %v31 = vld [vmem:[%s0 + $0x40] sm:$0xff]
  %v32 = vld [vmem:[%s0 + $0x48] sm:$0xff]
  %v33 = vld [vmem:[%s0 + $0x50] sm:$0xff]
  %v34 = vld [vmem:[%s0 + $0x58] sm:$0xff]
  %v35 = vld [vmem:[%s0 + $0x60] sm:$0xff]
  %v36 = vld [vmem:[%s0 + $0x68] sm:$0xff]
  %v37 = vld [vmem:[%s0 + $0x70] sm:$0xff]
  %v38 = vld [vmem:[%s0 + $0x78] sm:$0xff]
  %v39 = vld [vmem:[%s1] sm:$0x1]
  %v41 = vperm.slane %v39, 0
  %v43 = vsub.f32 %v23, %v41
  %v44 = vsub.f32 %v24, %v41
  %v45 = vsub.f32 %v25, %v41
  %v46 = vsub.f32 %v26, %v41
  %v47 = vsub.f32 %v27, %v41
  %v48 = vsub.f32 %v28, %v41
  %v49 = vsub.f32 %v29, %v41
  %v50 = vsub.f32 %v30, %v41
  %v51 = vsub.f32 %v31, %v41
  %v52 = vsub.f32 %v32, %v41
  %v53 = vsub.f32 %v33, %v41
  %v54 = vsub.f32 %v34, %v41
  %v55 = vsub.f32 %v35, %v41
  %v56 = vsub.f32 %v36, %v41
  %v57 = vsub.f32 %v37, %v41
  %v58 = vsub.f32 %v38, %v41
  %v59 = vld [vmem:[%s2] sm:$0x1]
  %v61 = vperm.slane %v59, 0
  %v63 = vmul.f32 %v43, %v61
  %v64 = vmul.f32 %v44, %v61
  %v65 = vmul.f32 %v45, %v61
  %v66 = vmul.f32 %v46, %v61
  %v67 = vmul.f32 %v47, %v61
  %v68 = vmul.f32 %v48, %v61
  %v69 = vmul.f32 %v49, %v61
  %v70 = vmul.f32 %v50, %v61
  %v71 = vmul.f32 %v51, %v61
  %v72 = vmul.f32 %v52, %v61
  %v73 = vmul.f32 %v53, %v61
  %v74 = vmul.f32 %v54, %v61
  %v75 = vmul.f32 %v55, %v61
  %v76 = vmul.f32 %v56, %v61
  %v77 = vmul.f32 %v57, %v61
  %v78 = vmul.f32 %v58, %v61
  %v79 = vld [vmem:[%s3] sm:$0x1]
  %v81 = vperm.slane %v79, 0
  %v83 = vmul.f32 %v63, %v81
  %v84 = vmul.f32 %v64, %v81
  %v85 = vmul.f32 %v65, %v81
  %v86 = vmul.f32 %v66, %v81
  %v87 = vmul.f32 %v67, %v81
  %v88 = vmul.f32 %v68, %v81
  %v89 = vmul.f32 %v69, %v81
  %v90 = vmul.f32 %v70, %v81
  %v91 = vmul.f32 %v71, %v81
  %v92 = vmul.f32 %v72, %v81
  %v93 = vmul.f32 %v73, %v81
  %v94 = vmul.f32 %v74, %v81
  %v95 = vmul.f32 %v75, %v81
  %v96 = vmul.f32 %v76, %v81
  %v97 = vmul.f32 %v77, %v81
  %v98 = vmul.f32 %v78, %v81
  %v99 = vld [vmem:[%s4] sm:$0x1]
  %v101 = vperm.slane %v99, 0
  %v103 = vadd.f32 %v83, %v101
  %v104 = vadd.f32 %v84, %v101
  %v105 = vadd.f32 %v85, %v101
  %v106 = vadd.f32 %v86, %v101
  %v107 = vadd.f32 %v87, %v101
  %v108 = vadd.f32 %v88, %v101
  %v109 = vadd.f32 %v89, %v101
  %v110 = vadd.f32 %v90, %v101
  %v111 = vadd.f32 %v91, %v101
  %v112 = vadd.f32 %v92, %v101
  %v113 = vadd.f32 %v93, %v101
  %v114 = vadd.f32 %v94, %v101
  %v115 = vadd.f32 %v95, %v101
  %v116 = vadd.f32 %v96, %v101
  %v117 = vadd.f32 %v97, %v101
  %v118 = vadd.f32 %v98, %v101
  %v119 = vld [vmem:[%s5] sm:$0xff]
  %v120 = vld [vmem:[%s5 + $0x8] sm:$0xff]
  %v121 = vld [vmem:[%s5 + $0x10] sm:$0xff]
  %v122 = vld [vmem:[%s5 + $0x18] sm:$0xff]
  %v123 = vld [vmem:[%s5 + $0x20] sm:$0xff]
  %v124 = vld [vmem:[%s5 + $0x28] sm:$0xff]
  %v125 = vld [vmem:[%s5 + $0x30] sm:$0xff]
  %v126 = vld [vmem:[%s5 + $0x38] sm:$0xff]
  %v127 = vld [vmem:[%s5 + $0x40] sm:$0xff]
  %v128 = vld [vmem:[%s5 + $0x48] sm:$0xff]
  %v129 = vld [vmem:[%s5 + $0x50] sm:$0xff]
  %v130 = vld [vmem:[%s5 + $0x58] sm:$0xff]
  %v131 = vld [vmem:[%s5 + $0x60] sm:$0xff]
  %v132 = vld [vmem:[%s5 + $0x68] sm:$0xff]
  %v133 = vld [vmem:[%s5 + $0x70] sm:$0xff]
  %v134 = vld [vmem:[%s5 + $0x78] sm:$0xff]
  %v135 = vadd.f32 %v103, %v119
  %v136 = vadd.f32 %v104, %v120
  %v137 = vadd.f32 %v105, %v121
  %v138 = vadd.f32 %v106, %v122
  %v139 = vadd.f32 %v107, %v123
  %v140 = vadd.f32 %v108, %v124
  %v141 = vadd.f32 %v109, %v125
  %v142 = vadd.f32 %v110, %v126
  %v143 = vadd.f32 %v111, %v127
  %v144 = vadd.f32 %v112, %v128
  %v145 = vadd.f32 %v113, %v129
  %v146 = vadd.f32 %v114, %v130
  %v147 = vadd.f32 %v115, %v131
  %v148 = vadd.f32 %v116, %v132
  %v149 = vadd.f32 %v117, %v133
  %v150 = vadd.f32 %v118, %v134
  %151 = vst [vmem:[%s6] sm:$0xff] %v135
  %152 = vst [vmem:[%s6 + $0x8] sm:$0xff] %v136
  %153 = vst [vmem:[%s6 + $0x10] sm:$0xff] %v137
  %154 = vst [vmem:[%s6 + $0x18] sm:$0xff] %v138
  %155 = vst [vmem:[%s6 + $0x20] sm:$0xff] %v139
  %156 = vst [vmem:[%s6 + $0x28] sm:$0xff] %v140
  %157 = vst [vmem:[%s6 + $0x30] sm:$0xff] %v141
  %158 = vst [vmem:[%s6 + $0x38] sm:$0xff] %v142
  %159 = vst [vmem:[%s6 + $0x40] sm:$0xff] %v143
  %160 = vst [vmem:[%s6 + $0x48] sm:$0xff] %v144
  %161 = vst [vmem:[%s6 + $0x50] sm:$0xff] %v145
  %162 = vst [vmem:[%s6 + $0x58] sm:$0xff] %v146
  %163 = vst [vmem:[%s6 + $0x60] sm:$0xff] %v147
  %164 = vst [vmem:[%s6 + $0x68] sm:$0xff] %v148
  %165 = vst [vmem:[%s6 + $0x70] sm:$0xff] %v149
  %166 = vst [vmem:[%s6 + $0x78] sm:$0xff] %v150
  // Predicated region
  $region26: #{brain_surf_gcn_forward.39} parent=0 // pred_check
    _
  $region27: #{brain_surf_gcn_forward.39} parent=0 // pred_check_branch
    %168 = sbr.rel (0) target = $region29
  $region28: #{brain_surf_gcn_forward.39} parent=0 // pred_region
    _
  $region29: #{brain_surf_gcn_forward.39} parent=0 // pred_fallthru
    _
  // Predicated region
  $region30: #{brain_surf_gcn_forward.39} parent=0 // pred_check
    _
  $region31: #{brain_surf_gcn_forward.39} parent=0 // pred_check_branch
    %170 = sbr.rel (0) target = $region33
  $region32: #{brain_surf_gcn_forward.39} parent=0 // pred_region
    _
  $region33: #{brain_surf_gcn_forward.39} parent=0 // pred_fallthru
    _

// kernel: brain_surf_gcn_forward.49
$region0: #{brain_surf_gcn_forward.49}
  #allocation0 [shape = 'u32[]', space=smem, size = 0x4, offset = 0x4, fixed_abs, tag = 'smem constant byte address 0x4 - core index']
  #allocation1 [shape = 'u32[72,128]{1,0:T(1,128)}', space=vmem, size = 0x9000, scoped, tag = 'internal scratch']
  %s0 = inlined_call_operand.vmem [shape: f32[128,128], index: 0, kind: input, shape index: {}]
  %s1 = inlined_call_operand.hbm [shape: f32[128,128], index: 1, kind: input, shape index: {}]
  %s2 = inlined_call_operand.vmem [shape: f32[1,128], index: 2, kind: input, shape index: {}]
  %s3 = inlined_call_operand.vmem [shape: f32[128,128], index: 3, kind: output, shape index: {}]
  %s4 = sld [smem:[#allocation0]]
  $region26: #{brain_surf_gcn_forward.49} parent=0
    _
  %s6 = ssub.s32 1, %s4
  %s7 = scalar_select 0, %s6, %s4
  $region1: #{brain_surf_gcn_forward.49} parent=0
    #allocation2 [shape = 'u8[65536]{0}', space=vmem, size = 0x10000, scoped, tag = 'input window, operand 1, single buffered']
    #allocation3 [shape = 's32[1]{0}', space=sflag, size = 0x4, scoped, tag = 'scoped memory for brain_surf_gcn_forward.49']
    %8 = vsyncpa [#allocation3], 0
    // Predicated region
    $region2: #{brain_surf_gcn_forward.49} parent=1 // pred_check
      _
    $region3: #{brain_surf_gcn_forward.49} parent=1 // pred_check_branch
      %10 = sbr.rel (0) target = $region5
    $region4: #{brain_surf_gcn_forward.49} parent=1 // pred_region
      _
    $region5: #{brain_surf_gcn_forward.49} parent=1 // pred_fallthru
      _
    // Predicated region
    $region6: #{brain_surf_gcn_forward.49} parent=1 // pred_check
      _
    $region7: #{brain_surf_gcn_forward.49} parent=1 // pred_check_branch
      %12 = sbr.rel (0) target = $region9
    $region8: #{brain_surf_gcn_forward.49} parent=1 // pred_region
      %14 = vsyncadd [#allocation3], 0
      %s15 = sshll.u32 %s1, 4
      %s16 = int_to_ptr.hbm [resolvable:$true] %s15
      %s17 = sshll.u32 [#allocation2], 4
      %s18 = int_to_ptr.vmem [resolvable:$true] %s17
      %23 = dma.hbm_to_vmem [thread:$0]  %s16, 2048, %s18, [#allocation3], 128, 128, 8
    $region9: #{brain_surf_gcn_forward.49} parent=1 // pred_fallthru
      _
    // Predicated region
    $region10: #{brain_surf_gcn_forward.49} parent=1 // pred_check
      _
    $region11: #{brain_surf_gcn_forward.49} parent=1 // pred_check_branch
      %25 = sbr.rel (0) target = $region13
    $region12: #{brain_surf_gcn_forward.49} parent=1 // pred_region
      _
    $region13: #{brain_surf_gcn_forward.49} parent=1 // pred_fallthru
      _
    // Predicated region
    $region14: #{brain_surf_gcn_forward.49} parent=1 // pred_check
      _
    $region15: #{brain_surf_gcn_forward.49} parent=1 // pred_check_branch
      %27 = sbr.rel (0) target = $region17
    $region16: #{brain_surf_gcn_forward.49} parent=1 // pred_region
      %29 = dma.done [#allocation3], 2048
    $region17: #{brain_surf_gcn_forward.49} parent=1 // pred_fallthru
      _
    %v30 = vld [vmem:[%s0] sm:$0xff]
    %v31 = vld [vmem:[%s0 + $0x8] sm:$0xff]
    %v32 = vld [vmem:[%s0 + $0x10] sm:$0xff]
    %v33 = vld [vmem:[%s0 + $0x18] sm:$0xff]
    %v34 = vld [vmem:[%s0 + $0x20] sm:$0xff]
    %v35 = vld [vmem:[%s0 + $0x28] sm:$0xff]
    %v36 = vld [vmem:[%s0 + $0x30] sm:$0xff]
    %v37 = vld [vmem:[%s0 + $0x38] sm:$0xff]
    %v38 = vld [vmem:[%s0 + $0x40] sm:$0xff]
    %v39 = vld [vmem:[%s0 + $0x48] sm:$0xff]
    %v40 = vld [vmem:[%s0 + $0x50] sm:$0xff]
    %v41 = vld [vmem:[%s0 + $0x58] sm:$0xff]
    %v42 = vld [vmem:[%s0 + $0x60] sm:$0xff]
    %v43 = vld [vmem:[%s0 + $0x68] sm:$0xff]
    %v44 = vld [vmem:[%s0 + $0x70] sm:$0xff]
    %v45 = vld [vmem:[%s0 + $0x78] sm:$0xff]
    %v46 = vpack.c.bf16 %v31, %v30
    %v47 = vpack.c.bf16 %v33, %v32
    %v48 = vpack.c.bf16 %v35, %v34
    %v49 = vpack.c.bf16 %v37, %v36
    %v50 = vpack.c.bf16 %v39, %v38
    %v51 = vpack.c.bf16 %v41, %v40
    %v52 = vpack.c.bf16 %v43, %v42
    %v53 = vpack.c.bf16 %v45, %v44
    %v54 = vld [vmem:[#allocation2] sm:$0xff]
    %v55 = vld [vmem:[#allocation2 + $0x8] sm:$0xff]
    %v56 = vld [vmem:[#allocation2 + $0x10] sm:$0xff]
    %v57 = vld [vmem:[#allocation2 + $0x18] sm:$0xff]
    %v58 = vld [vmem:[#allocation2 + $0x20] sm:$0xff]
    %v59 = vld [vmem:[#allocation2 + $0x28] sm:$0xff]
    %v60 = vld [vmem:[#allocation2 + $0x30] sm:$0xff]
    %v61 = vld [vmem:[#allocation2 + $0x38] sm:$0xff]
    %v62 = vld [vmem:[#allocation2 + $0x40] sm:$0xff]
    %v63 = vld [vmem:[#allocation2 + $0x48] sm:$0xff]
    %v64 = vld [vmem:[#allocation2 + $0x50] sm:$0xff]
    %v65 = vld [vmem:[#allocation2 + $0x58] sm:$0xff]
    %v66 = vld [vmem:[#allocation2 + $0x60] sm:$0xff]
    %v67 = vld [vmem:[#allocation2 + $0x68] sm:$0xff]
    %v68 = vld [vmem:[#allocation2 + $0x70] sm:$0xff]
    %v69 = vld [vmem:[#allocation2 + $0x78] sm:$0xff]
    %v70 = vpack.c.bf16 %v55, %v54
    %v71 = vpack.c.bf16 %v57, %v56
    %v72 = vpack.c.bf16 %v59, %v58
    %v73 = vpack.c.bf16 %v61, %v60
    %v74 = vpack.c.bf16 %v63, %v62
    %v75 = vpack.c.bf16 %v65, %v64
    %v76 = vpack.c.bf16 %v67, %v66
    %v77 = vpack.c.bf16 %v69, %v68
    %v78 = vld [vmem:[%s2] sm:$0x1]
    %v80 = vperm.slane %v78, 0
    %82 = vmatpush.bf16.msra.mxu0 %v77
    %83 = vmatpush.bf16.msra.mxu0 %v76
    %84 = vmatpush.bf16.msra.mxu0 %v75
    %85 = vmatpush.bf16.msra.mxu0 %v74
    %86 = vmatpush.bf16.msra.mxu0 %v73
    %87 = vmatpush.bf16.msra.mxu0 %v72
    %88 = vmatpush.bf16.msra.mxu0 %v71
    %89 = vmatpush.bf16.msra.mxu0 %v70
    %90 = vmatmul.bf16.gmra.mxu0 %v46
    %v91 = vpop.f32.mrf.mxu0
    %v92 = vadd.f32 %v80, %v91
    %v93 = vpop.f32.mrf.mxu0
    %v94 = vadd.f32 %v80, %v93
    %95 = vmatmul.bf16.gmra.mxu0 %v47
    %v96 = vpop.f32.mrf.mxu0
    %v97 = vadd.f32 %v80, %v96
    %v98 = vpop.f32.mrf.mxu0
    %v99 = vadd.f32 %v80, %v98
    %100 = vmatmul.bf16.gmra.mxu0 %v48
    %v101 = vpop.f32.mrf.mxu0
    %v102 = vadd.f32 %v80, %v101
    %v103 = vpop.f32.mrf.mxu0
    %v104 = vadd.f32 %v80, %v103
    %105 = vmatmul.bf16.gmra.mxu0 %v49
    %v106 = vpop.f32.mrf.mxu0
    %v107 = vadd.f32 %v80, %v106
    %v108 = vpop.f32.mrf.mxu0
    %v109 = vadd.f32 %v80, %v108
    %110 = vmatmul.bf16.gmra.mxu0 %v50
    %v111 = vpop.f32.mrf.mxu0
    %v112 = vadd.f32 %v80, %v111
    %v113 = vpop.f32.mrf.mxu0
    %v114 = vadd.f32 %v80, %v113
    %115 = vmatmul.bf16.gmra.mxu0 %v51
    %v116 = vpop.f32.mrf.mxu0
    %v117 = vadd.f32 %v80, %v116
    %v118 = vpop.f32.mrf.mxu0
    %v119 = vadd.f32 %v80, %v118
    %120 = vmatmul.bf16.gmra.mxu0 %v52
    %v121 = vpop.f32.mrf.mxu0
    %v122 = vadd.f32 %v80, %v121
    %v123 = vpop.f32.mrf.mxu0
    %v124 = vadd.f32 %v80, %v123
    %125 = vmatmul.bf16.gmra.mxu0 %v53
    %v126 = vpop.f32.mrf.mxu0
    %v127 = vadd.f32 %v80, %v126
    %v128 = vpop.f32.mrf.mxu0
    %v129 = vadd.f32 %v80, %v128
    %130 = vdwg.mxu0
    %131 = vst [vmem:[%s3] sm:$0xff] %v92
    %132 = vst [vmem:[%s3 + $0x8] sm:$0xff] %v94
    %133 = vst [vmem:[%s3 + $0x10] sm:$0xff] %v97
    %134 = vst [vmem:[%s3 + $0x18] sm:$0xff] %v99
    %135 = vst [vmem:[%s3 + $0x20] sm:$0xff] %v102
    %136 = vst [vmem:[%s3 + $0x28] sm:$0xff] %v104
    %137 = vst [vmem:[%s3 + $0x30] sm:$0xff] %v107
    %138 = vst [vmem:[%s3 + $0x38] sm:$0xff] %v109
    %139 = vst [vmem:[%s3 + $0x40] sm:$0xff] %v112
    %140 = vst [vmem:[%s3 + $0x48] sm:$0xff] %v114
    %141 = vst [vmem:[%s3 + $0x50] sm:$0xff] %v117
    %142 = vst [vmem:[%s3 + $0x58] sm:$0xff] %v119
    %143 = vst [vmem:[%s3 + $0x60] sm:$0xff] %v122
    %144 = vst [vmem:[%s3 + $0x68] sm:$0xff] %v124
    %145 = vst [vmem:[%s3 + $0x70] sm:$0xff] %v127
    %146 = vst [vmem:[%s3 + $0x78] sm:$0xff] %v129
    // Predicated region
    $region18: #{brain_surf_gcn_forward.49} parent=1 // pred_check
      _
    $region19: #{brain_surf_gcn_forward.49} parent=1 // pred_check_branch
      %148 = sbr.rel (0) target = $region21
    $region20: #{brain_surf_gcn_forward.49} parent=1 // pred_region
      _
    $region21: #{brain_surf_gcn_forward.49} parent=1 // pred_fallthru
      _
    // Predicated region
    $region22: #{brain_surf_gcn_forward.49} parent=1 // pred_check
      _
    $region23: #{brain_surf_gcn_forward.49} parent=1 // pred_check_branch
      %150 = sbr.rel (0) target = $region25
    $region24: #{brain_surf_gcn_forward.49} parent=1 // pred_region
      _
    $region25: #{brain_surf_gcn_forward.49} parent=1 // pred_fallthru
      _
    %151 = vsyncpa [#allocation3], 1

// kernel: brain_surf_gcn_forward.35
$region0: #{brain_surf_gcn_forward.35}
  #allocation0 [shape = 'u32[]', space=smem, size = 0x4, offset = 0x4, fixed_abs, tag = 'smem constant byte address 0x4 - core index']
  #allocation1 [shape = 'u32[72,128]{1,0:T(1,128)}', space=vmem, size = 0x9000, scoped, tag = 'internal scratch']
  #allocation2 [shape = 'f32[128,128]{1,0:T(8,128)}', space=vmem, size = 0x10000, scoped, tag = 'scratch operand']
  #allocation3 [shape = 's32[1]{0}', space=sflag, size = 0x4, scoped, tag = 'scoped memory for brain_surf_gcn_forward.35']
  #allocation4 [shape = 's32[1]{0:T(128)S(6)}', space=smem, size = 0x200, scoped, tag = 'prefetched SMEM operand 0']
  #allocation5 [shape = 's32[1,1]{1,0:T(1,128)S(6)}', space=smem, size = 0x200, scoped, tag = 'prefetched SMEM operand 1']
  %s0 = inlined_call_operand.<no memory space> [shape: s32[1], index: 0, kind: input, shape index: {}]
  %s1 = inlined_call_operand.<no memory space> [shape: s32[1,1], index: 1, kind: input, shape index: {}]
  %s2 = inlined_call_operand.vmem [shape: bf16[128,128], index: 2, kind: input, shape index: {}]
  %s3 = inlined_call_operand.vmem [shape: bf16[128,128], index: 3, kind: input, shape index: {}]
  %s4 = inlined_call_operand.vmem [shape: f32[1,128], index: 4, kind: input, shape index: {}]
  %s5 = inlined_call_operand.vmem [shape: f32[128,128], index: 5, kind: output, shape index: {0}]
  %s6 = inlined_call_operand.vmem [shape: f32[8,128], index: 6, kind: output, shape index: {1}]
  %7 = xla_tuple %s5, %s6
  %s8 = sld [smem:[#allocation0]]
  $region42: #{brain_surf_gcn_forward.35} parent=0
    _
  %s10 = ssub.s32 1, %s8
  %s11 = scalar_select 0, %s10, %s8
  %12 = sst [smem:[#allocation4]] %s0
  %13 = sst [smem:[#allocation5]] %s1
  // Predicated region
  $region2: #{brain_surf_gcn_forward.35} parent=0 // pred_check
    _
  $region3: #{brain_surf_gcn_forward.35} parent=0 // pred_check_branch
    %15 = sbr.rel (0) target = $region5
  $region4: #{brain_surf_gcn_forward.35} parent=0 // pred_region
    %s16 = sadd.s32 0, 0
    %s17 = smul.u32 %s16, 128
    %s18 = sadd.s32 %s17, 0
    %s19 = sld [smem:[#allocation5 + %s18]]
    %p20 = scmp.lt.s32.totalorder %s19, 0
    %s21 = scalar_select %p20, %s19, 0
    %s22 = smul.addr %s21, 4
    %s23 = scalar_lea.vmem %s2, %s22
    %s24 = sadd.s32 0, 0
    %s25 = smul.u32 %s24, 128
    %s26 = sadd.s32 %s25, 0
    %s27 = sld [smem:[#allocation5 + %s26]]
  $region5: #{brain_surf_gcn_forward.35} parent=0 // pred_fallthru
    _
  // Predicated region
  $region6: #{brain_surf_gcn_forward.35} parent=0 // pred_check
    _
  $region7: #{brain_surf_gcn_forward.35} parent=0 // pred_check_branch
    %29 = sbr.rel (0) target = $region9
  $region8: #{brain_surf_gcn_forward.35} parent=0 // pred_region
    %s30 = sadd.s32 0, 0
    %s31 = smul.u32 %s30, 128
    %s32 = sadd.s32 %s31, 0
    %s33 = sld [smem:[#allocation5 + %s32]]
    %s34 = smul.u32 16, %s33
    %p35 = scmp.lt.s32.totalorder %s34, 15
    %s36 = scalar_select %p35, %s34, 15
    %s37 = smul.addr %s36, 4
    %s38 = scalar_lea.vmem %s3, %s37
    %s39 = sadd.s32 0, 0
    %s40 = smul.u32 %s39, 128
    %s41 = sadd.s32 %s40, 0
    %s42 = sld [smem:[#allocation5 + %s41]]
    %s43 = smul.u32 16, %s42
  $region9: #{brain_surf_gcn_forward.35} parent=0 // pred_fallthru
    _
  // Predicated region
  $region10: #{brain_surf_gcn_forward.35} parent=0 // pred_check
    _
  $region11: #{brain_surf_gcn_forward.35} parent=0 // pred_check_branch
    %45 = sbr.rel (0) target = $region13
  $region12: #{brain_surf_gcn_forward.35} parent=0 // pred_region
    _
  $region13: #{brain_surf_gcn_forward.35} parent=0 // pred_fallthru
    _
  %s46 = sadd.s32 0, 0
  %s47 = smul.u32 %s46, 128
  %s48 = sadd.s32 %s47, 0
  %s49 = sld [smem:[#allocation5 + %s48]]
  %p50 = scmp.lt.s32.totalorder %s49, 0
  %s51 = scalar_select %p50, %s49, 0
  %s52 = smul.addr %s51, 4
  %s53 = scalar_lea.vmem %s2, %s52
  %s54 = sadd.s32 0, 0
  %s55 = smul.u32 %s54, 128
  %s56 = sadd.s32 %s55, 0
  %s57 = sld [smem:[#allocation5 + %s56]]
  %s58 = smul.u32 16, %s57
  %p59 = scmp.lt.s32.totalorder %s58, 15
  %s60 = scalar_select %p59, %s58, 15
  %s61 = smul.addr %s60, 4
  %s62 = scalar_lea.vmem %s3, %s61
  %s63 = sadd.s32 0, 0
  %s64 = smul.u32 %s63, 128
  %s65 = sadd.s32 %s64, 0
  %s66 = sld [smem:[#allocation5 + %s65]]
  %p67 = scmp.lt.s32.totalorder %s66, 0
  %s68 = scalar_select %p67, %s66, 0
  %s69 = smul.addr %s68, 4
  %s70 = scalar_lea.vmem %s2, %s69
  %s71 = sadd.s32 0, 0
  %s72 = smul.u32 %s71, 128
  %s73 = sadd.s32 %s72, 0
  %s74 = sld [smem:[#allocation5 + %s73]]
  %s75 = sadd.s32 0, 0
  %s76 = smul.u32 %s75, 128
  %s77 = sadd.s32 %s76, 0
  %s78 = sld [smem:[#allocation5 + %s77]]
  %s79 = smul.u32 16, %s78
  %p80 = scmp.lt.s32.totalorder %s79, 15
  %s81 = scalar_select %p80, %s79, 15
  %s82 = smul.addr %s81, 4
  %s83 = scalar_lea.vmem %s3, %s82
  %s84 = sadd.s32 0, 0
  %s85 = smul.u32 %s84, 128
  %s86 = sadd.s32 %s85, 0
  %s87 = sld [smem:[#allocation5 + %s86]]
  %s88 = smul.u32 16, %s87
  %p89 = scmp.eq.s32.totalorder 0, 0
  // Predicated region
  $region14: #{brain_surf_gcn_forward.35} parent=0 // pred_check
    %p90 = pneg %p89
  $region15: #{brain_surf_gcn_forward.35} parent=0 // pred_check_branch
    %92 = sbr.rel (%p90) target = $region17
  $region16: #{brain_surf_gcn_forward.35} parent=0 // pred_region
    %93 = vst [vmem:[#allocation2] sm:$0xff] 0.0
    %94 = vst [vmem:[#allocation2 + $0x8] sm:$0xff] 0.0
    %95 = vst [vmem:[#allocation2 + $0x10] sm:$0xff] 0.0
    %96 = vst [vmem:[#allocation2 + $0x18] sm:$0xff] 0.0
    %97 = vst [vmem:[#allocation2 + $0x20] sm:$0xff] 0.0
    %98 = vst [vmem:[#allocation2 + $0x28] sm:$0xff] 0.0
    %99 = vst [vmem:[#allocation2 + $0x30] sm:$0xff] 0.0
    %100 = vst [vmem:[#allocation2 + $0x38] sm:$0xff] 0.0
    %101 = vst [vmem:[#allocation2 + $0x40] sm:$0xff] 0.0
    %102 = vst [vmem:[#allocation2 + $0x48] sm:$0xff] 0.0
    %103 = vst [vmem:[#allocation2 + $0x50] sm:$0xff] 0.0
    %104 = vst [vmem:[#allocation2 + $0x58] sm:$0xff] 0.0
    %105 = vst [vmem:[#allocation2 + $0x60] sm:$0xff] 0.0
    %106 = vst [vmem:[#allocation2 + $0x68] sm:$0xff] 0.0
    %107 = vst [vmem:[#allocation2 + $0x70] sm:$0xff] 0.0
    %108 = vst [vmem:[#allocation2 + $0x78] sm:$0xff] 0.0
  $region17: #{brain_surf_gcn_forward.35} parent=0 // pred_fallthru
    _
  %s109 = sld [smem:[#allocation4]]
  %p110 = scmp.lt.s32.totalorder 0, %s109
  // Predicated region
  $region18: #{brain_surf_gcn_forward.35} parent=0 // pred_check
    %p111 = pneg %p110
  $region19: #{brain_surf_gcn_forward.35} parent=0 // pred_check_branch
    %113 = sbr.rel (%p111) target = $region21
  $region20: #{brain_surf_gcn_forward.35} parent=0 // pred_region
    %v114 = vld [vmem:[#allocation2] sm:$0xff]
    %v115 = vld [vmem:[#allocation2 + $0x8] sm:$0xff]
    %v116 = vld [vmem:[#allocation2 + $0x10] sm:$0xff]
    %v117 = vld [vmem:[#allocation2 + $0x18] sm:$0xff]
    %v118 = vld [vmem:[#allocation2 + $0x20] sm:$0xff]
    %v119 = vld [vmem:[#allocation2 + $0x28] sm:$0xff]
    %v120 = vld [vmem:[#allocation2 + $0x30] sm:$0xff]
    %v121 = vld [vmem:[#allocation2 + $0x38] sm:$0xff]
    %v122 = vld [vmem:[#allocation2 + $0x40] sm:$0xff]
    %v123 = vld [vmem:[#allocation2 + $0x48] sm:$0xff]
    %v124 = vld [vmem:[#allocation2 + $0x50] sm:$0xff]
    %v125 = vld [vmem:[#allocation2 + $0x58] sm:$0xff]
    %v126 = vld [vmem:[#allocation2 + $0x60] sm:$0xff]
    %v127 = vld [vmem:[#allocation2 + $0x68] sm:$0xff]
    %v128 = vld [vmem:[#allocation2 + $0x70] sm:$0xff]
    %v129 = vld [vmem:[#allocation2 + $0x78] sm:$0xff]
    %v130 = vld [vmem:[%s70] sm:$0xf]
    %v131 = vld [vmem:[%s70 + $0x4] sm:$0xf]
    %v132 = vld [vmem:[%s70 + $0x8] sm:$0xf]
    %v133 = vld [vmem:[%s70 + $0xc] sm:$0xf]
    %v134 = vld [vmem:[%s70 + $0x10] sm:$0xf]
    %v135 = vld [vmem:[%s70 + $0x14] sm:$0xf]
    %v136 = vld [vmem:[%s70 + $0x18] sm:$0xf]
    %v137 = vld [vmem:[%s70 + $0x1c] sm:$0xf]
    %v138 = vld [vmem:[%s70 + $0x20] sm:$0xf]
    %v139 = vld [vmem:[%s70 + $0x24] sm:$0xf]
    %v140 = vld [vmem:[%s70 + $0x28] sm:$0xf]
    %v141 = vld [vmem:[%s70 + $0x2c] sm:$0xf]
    %v142 = vld [vmem:[%s70 + $0x30] sm:$0xf]
    %v143 = vld [vmem:[%s70 + $0x34] sm:$0xf]
    %v144 = vld [vmem:[%s70 + $0x38] sm:$0xf]
    %v145 = vld [vmem:[%s70 + $0x3c] sm:$0xf]
    %v146 = vld [vmem:[%s83] sm:$0xf]
    %v147 = vld [vmem:[%s83 + $0x4] sm:$0xf]
    %v148 = vld [vmem:[%s83 + $0x8] sm:$0xf]
    %v149 = vld [vmem:[%s83 + $0xc] sm:$0xf]
    %v150 = vld [vmem:[%s83 + $0x10] sm:$0xf]
    %v151 = vld [vmem:[%s83 + $0x14] sm:$0xf]
    %v152 = vld [vmem:[%s83 + $0x18] sm:$0xf]
    %v153 = vld [vmem:[%s83 + $0x1c] sm:$0xf]
    %v154 = vld [vmem:[%s83 + $0x20] sm:$0xf]
    %v155 = vld [vmem:[%s83 + $0x24] sm:$0xf]
    %v156 = vld [vmem:[%s83 + $0x28] sm:$0xf]
    %v157 = vld [vmem:[%s83 + $0x2c] sm:$0xf]
    %v158 = vld [vmem:[%s83 + $0x30] sm:$0xf]
    %v159 = vld [vmem:[%s83 + $0x34] sm:$0xf]
    %v160 = vld [vmem:[%s83 + $0x38] sm:$0xf]
    %v161 = vld [vmem:[%s83 + $0x3c] sm:$0xf]
    %v178 = vunpack.c.l.b16 %v130
    %v179 = vunpack.c.l.b16 %v131
    %v180 = vunpack.c.l.b16 %v132
    %v181 = vunpack.c.l.b16 %v133
    %v182 = vunpack.c.l.b16 %v134
    %v183 = vunpack.c.l.b16 %v135
    %v184 = vunpack.c.l.b16 %v136
    %v185 = vunpack.c.l.b16 %v137
    %v186 = vunpack.c.l.b16 %v138
    %v187 = vunpack.c.l.b16 %v139
    %v188 = vunpack.c.l.b16 %v140
    %v189 = vunpack.c.l.b16 %v141
    %v190 = vunpack.c.l.b16 %v142
    %v191 = vunpack.c.l.b16 %v143
    %v192 = vunpack.c.l.b16 %v144
    %v193 = vunpack.c.l.b16 %v145
    %v194 = vpack.c.b16 %v179, %v178
    %v195 = vpack.c.b16 %v181, %v180
    %v196 = vpack.c.b16 %v183, %v182
    %v197 = vpack.c.b16 %v185, %v184
    %v198 = vpack.c.b16 %v187, %v186
    %v199 = vpack.c.b16 %v189, %v188
    %v200 = vpack.c.b16 %v191, %v190
    %v201 = vpack.c.b16 %v193, %v192
    %v226 = vunpack.c.l.b16 %v146
    %v227 = vunpack.c.l.b16 %v147
    %v228 = vunpack.c.l.b16 %v148
    %v229 = vunpack.c.l.b16 %v149
    %v230 = vunpack.c.l.b16 %v150
    %v231 = vunpack.c.l.b16 %v151
    %v232 = vunpack.c.l.b16 %v152
    %v233 = vunpack.c.l.b16 %v153
    %v234 = vunpack.c.l.b16 %v154
    %v235 = vunpack.c.l.b16 %v155
    %v236 = vunpack.c.l.b16 %v156
    %v237 = vunpack.c.l.b16 %v157
    %v238 = vunpack.c.l.b16 %v158
    %v239 = vunpack.c.l.b16 %v159
    %v240 = vunpack.c.l.b16 %v160
    %v241 = vunpack.c.l.b16 %v161
    %v242 = vpack.c.b16 %v227, %v226
    %v243 = vpack.c.b16 %v229, %v228
    %v244 = vpack.c.b16 %v231, %v230
    %v245 = vpack.c.b16 %v233, %v232
    %v246 = vpack.c.b16 %v235, %v234
    %v247 = vpack.c.b16 %v237, %v236
    %v248 = vpack.c.b16 %v239, %v238
    %v249 = vpack.c.b16 %v241, %v240
    %258 = vmatpush.bf16.msra.mxu0 %v249
    %259 = vmatpush.bf16.msra.mxu0 %v248
    %260 = vmatpush.bf16.msra.mxu0 %v247
    %261 = vmatpush.bf16.msra.mxu0 %v246
    %262 = vmatpush.bf16.msra.mxu0 %v245
    %263 = vmatpush.bf16.msra.mxu0 %v244
    %264 = vmatpush.bf16.msra.mxu0 %v243
    %265 = vmatpush.bf16.msra.mxu0 %v242
    %266 = vmatmul.bf16.gmra.mxu0 %v194
    %v267 = vpop.f32.mrf.mxu0
    %v268 = vadd.f32 0.0, %v267
    %v269 = vpop.f32.mrf.mxu0
    %v270 = vadd.f32 0.0, %v269
    %271 = vmatmul.bf16.gmra.mxu0 %v195
    %v272 = vpop.f32.mrf.mxu0
    %v273 = vadd.f32 0.0, %v272
    %v274 = vpop.f32.mrf.mxu0
    %v275 = vadd.f32 0.0, %v274
    %276 = vmatmul.bf16.gmra.mxu0 %v196
    %v277 = vpop.f32.mrf.mxu0
    %v278 = vadd.f32 0.0, %v277
    %v279 = vpop.f32.mrf.mxu0
    %v280 = vadd.f32 0.0, %v279
    %281 = vmatmul.bf16.gmra.mxu0 %v197
    %v282 = vpop.f32.mrf.mxu0
    %v283 = vadd.f32 0.0, %v282
    %v284 = vpop.f32.mrf.mxu0
    %v285 = vadd.f32 0.0, %v284
    %286 = vmatmul.bf16.gmra.mxu0 %v198
    %v287 = vpop.f32.mrf.mxu0
    %v288 = vadd.f32 0.0, %v287
    %v289 = vpop.f32.mrf.mxu0
    %v290 = vadd.f32 0.0, %v289
    %291 = vmatmul.bf16.gmra.mxu0 %v199
    %v292 = vpop.f32.mrf.mxu0
    %v293 = vadd.f32 0.0, %v292
    %v294 = vpop.f32.mrf.mxu0
    %v295 = vadd.f32 0.0, %v294
    %296 = vmatmul.bf16.gmra.mxu0 %v200
    %v297 = vpop.f32.mrf.mxu0
    %v298 = vadd.f32 0.0, %v297
    %v299 = vpop.f32.mrf.mxu0
    %v300 = vadd.f32 0.0, %v299
    %301 = vmatmul.bf16.gmra.mxu0 %v201
    %v302 = vpop.f32.mrf.mxu0
    %v303 = vadd.f32 0.0, %v302
    %v304 = vpop.f32.mrf.mxu0
    %v305 = vadd.f32 0.0, %v304
    %306 = vdwg.mxu0
    %v307 = vadd.f32 %v114, %v268
    %v308 = vadd.f32 %v115, %v270
    %v309 = vadd.f32 %v116, %v273
    %v310 = vadd.f32 %v117, %v275
    %v311 = vadd.f32 %v118, %v278
    %v312 = vadd.f32 %v119, %v280
    %v313 = vadd.f32 %v120, %v283
    %v314 = vadd.f32 %v121, %v285
    %v315 = vadd.f32 %v122, %v288
    %v316 = vadd.f32 %v123, %v290
    %v317 = vadd.f32 %v124, %v293
    %v318 = vadd.f32 %v125, %v295
    %v319 = vadd.f32 %v126, %v298
    %v320 = vadd.f32 %v127, %v300
    %v321 = vadd.f32 %v128, %v303
    %v322 = vadd.f32 %v129, %v305
    %323 = vst [vmem:[#allocation2] sm:$0xff] %v307
    %324 = vst [vmem:[#allocation2 + $0x8] sm:$0xff] %v308
    %325 = vst [vmem:[#allocation2 + $0x10] sm:$0xff] %v309
    %326 = vst [vmem:[#allocation2 + $0x18] sm:$0xff] %v310
    %327 = vst [vmem:[#allocation2 + $0x20] sm:$0xff] %v311
    %328 = vst [vmem:[#allocation2 + $0x28] sm:$0xff] %v312
    %329 = vst [vmem:[#allocation2 + $0x30] sm:$0xff] %v313
    %330 = vst [vmem:[#allocation2 + $0x38] sm:$0xff] %v314
    %331 = vst [vmem:[#allocation2 + $0x40] sm:$0xff] %v315
    %332 = vst [vmem:[#allocation2 + $0x48] sm:$0xff] %v316
    %333 = vst [vmem:[#allocation2 + $0x50] sm:$0xff] %v317
    %334 = vst [vmem:[#allocation2 + $0x58] sm:$0xff] %v318
    %335 = vst [vmem:[#allocation2 + $0x60] sm:$0xff] %v319
    %336 = vst [vmem:[#allocation2 + $0x68] sm:$0xff] %v320
    %337 = vst [vmem:[#allocation2 + $0x70] sm:$0xff] %v321
    %338 = vst [vmem:[#allocation2 + $0x78] sm:$0xff] %v322
  $region21: #{brain_surf_gcn_forward.35} parent=0 // pred_fallthru
    _
  // Predicated region
  $region22: #{brain_surf_gcn_forward.35} parent=0 // pred_check
    %p339 = pneg %p89
  $region23: #{brain_surf_gcn_forward.35} parent=0 // pred_check_branch
    %341 = sbr.rel (%p339) target = $region25
  $region24: #{brain_surf_gcn_forward.35} parent=0 // pred_region
    %v342 = vld [vmem:[#allocation2] sm:$0xff]
    %v343 = vld [vmem:[#allocation2 + $0x8] sm:$0xff]
    %v344 = vld [vmem:[#allocation2 + $0x10] sm:$0xff]
    %v345 = vld [vmem:[#allocation2 + $0x18] sm:$0xff]
    %v346 = vld [vmem:[#allocation2 + $0x20] sm:$0xff]
    %v347 = vld [vmem:[#allocation2 + $0x28] sm:$0xff]
    %v348 = vld [vmem:[#allocation2 + $0x30] sm:$0xff]
    %v349 = vld [vmem:[#allocation2 + $0x38] sm:$0xff]
    %v350 = vld [vmem:[#allocation2 + $0x40] sm:$0xff]
    %v351 = vld [vmem:[#allocation2 + $0x48] sm:$0xff]
    %v352 = vld [vmem:[#allocation2 + $0x50] sm:$0xff]
    %v353 = vld [vmem:[#allocation2 + $0x58] sm:$0xff]
    %v354 = vld [vmem:[#allocation2 + $0x60] sm:$0xff]
    %v355 = vld [vmem:[#allocation2 + $0x68] sm:$0xff]
    %v356 = vld [vmem:[#allocation2 + $0x70] sm:$0xff]
    %v357 = vld [vmem:[#allocation2 + $0x78] sm:$0xff]
    %v358 = vld [vmem:[%s4] sm:$0x1]
    %v360 = vperm.slane %v358, 0
    %v362 = vadd.f32 %v342, %v360
    %v363 = vadd.f32 %v343, %v360
    %v364 = vadd.f32 %v344, %v360
    %v365 = vadd.f32 %v345, %v360
    %v366 = vadd.f32 %v346, %v360
    %v367 = vadd.f32 %v347, %v360
    %v368 = vadd.f32 %v348, %v360
    %v369 = vadd.f32 %v349, %v360
    %v370 = vadd.f32 %v350, %v360
    %v371 = vadd.f32 %v351, %v360
    %v372 = vadd.f32 %v352, %v360
    %v373 = vadd.f32 %v353, %v360
    %v374 = vadd.f32 %v354, %v360
    %v375 = vadd.f32 %v355, %v360
    %v376 = vadd.f32 %v356, %v360
    %v377 = vadd.f32 %v357, %v360
    %vm378 = vcmp.ge.f32.partialorder %v362, 0.0
    %vm379 = vcmp.ge.f32.partialorder %v363, 0.0
    %vm380 = vcmp.ge.f32.partialorder %v364, 0.0
    %vm381 = vcmp.ge.f32.partialorder %v365, 0.0
    %vm382 = vcmp.ge.f32.partialorder %v366, 0.0
    %vm383 = vcmp.ge.f32.partialorder %v367, 0.0
    %vm384 = vcmp.ge.f32.partialorder %v368, 0.0
    %vm385 = vcmp.ge.f32.partialorder %v369, 0.0
    %vm386 = vcmp.ge.f32.partialorder %v370, 0.0
    %vm387 = vcmp.ge.f32.partialorder %v371, 0.0
    %vm388 = vcmp.ge.f32.partialorder %v372, 0.0
    %vm389 = vcmp.ge.f32.partialorder %v373, 0.0
    %vm390 = vcmp.ge.f32.partialorder %v374, 0.0
    %vm391 = vcmp.ge.f32.partialorder %v375, 0.0
    %vm392 = vcmp.ge.f32.partialorder %v376, 0.0
    %vm393 = vcmp.ge.f32.partialorder %v377, 0.0
    %v394 = vmul.f32 %v362, 0.01
    %v395 = vmul.f32 %v363, 0.01
    %v396 = vmul.f32 %v364, 0.01
    %v397 = vmul.f32 %v365, 0.01
    %v398 = vmul.f32 %v366, 0.01
    %v399 = vmul.f32 %v367, 0.01
    %v400 = vmul.f32 %v368, 0.01
    %v401 = vmul.f32 %v369, 0.01
    %v402 = vmul.f32 %v370, 0.01
    %v403 = vmul.f32 %v371, 0.01
    %v404 = vmul.f32 %v372, 0.01
    %v405 = vmul.f32 %v373, 0.01
    %v406 = vmul.f32 %v374, 0.01
    %v407 = vmul.f32 %v375, 0.01
    %v408 = vmul.f32 %v376, 0.01
    %v409 = vmul.f32 %v377, 0.01
    %v410 = vsel %vm378, %v362, %v394
    %v411 = vsel %vm379, %v363, %v395
    %v412 = vsel %vm380, %v364, %v396
    %v413 = vsel %vm381, %v365, %v397
    %v414 = vsel %vm382, %v366, %v398
    %v415 = vsel %vm383, %v367, %v399
    %v416 = vsel %vm384, %v368, %v400
    %v417 = vsel %vm385, %v369, %v401
    %v418 = vsel %vm386, %v370, %v402
    %v419 = vsel %vm387, %v371, %v403
    %v420 = vsel %vm388, %v372, %v404
    %v421 = vsel %vm389, %v373, %v405
    %v422 = vsel %vm390, %v374, %v406
    %v423 = vsel %vm391, %v375, %v407
    %v424 = vsel %vm392, %v376, %v408
    %v425 = vsel %vm393, %v377, %v409
    %426 = vst [vmem:[%s5] sm:$0xff] %v410
    %427 = vst [vmem:[%s5 + $0x8] sm:$0xff] %v411
    %428 = vst [vmem:[%s5 + $0x10] sm:$0xff] %v412
    %429 = vst [vmem:[%s5 + $0x18] sm:$0xff] %v413
    %430 = vst [vmem:[%s5 + $0x20] sm:$0xff] %v414
    %431 = vst [vmem:[%s5 + $0x28] sm:$0xff] %v415
    %432 = vst [vmem:[%s5 + $0x30] sm:$0xff] %v416
    %433 = vst [vmem:[%s5 + $0x38] sm:$0xff] %v417
    %434 = vst [vmem:[%s5 + $0x40] sm:$0xff] %v418
    %435 = vst [vmem:[%s5 + $0x48] sm:$0xff] %v419
    %436 = vst [vmem:[%s5 + $0x50] sm:$0xff] %v420
    %437 = vst [vmem:[%s5 + $0x58] sm:$0xff] %v421
    %438 = vst [vmem:[%s5 + $0x60] sm:$0xff] %v422
    %439 = vst [vmem:[%s5 + $0x68] sm:$0xff] %v423
    %440 = vst [vmem:[%s5 + $0x70] sm:$0xff] %v424
    %441 = vst [vmem:[%s5 + $0x78] sm:$0xff] %v425
    %s442 = smul.u32 0, 128
    %v443 = vlaneseq
    %v444 = vshrl.u32 %v443, 7
    %v445 = vadd.s32 %v444, 8
    %v446 = vadd.s32 %v444, 16
    %v447 = vadd.s32 %v444, 24
    %v448 = vadd.s32 %v444, 32
    %v449 = vadd.s32 %v444, 40
    %v450 = vadd.s32 %v444, 48
    %v451 = vadd.s32 %v444, 56
    %v452 = vadd.s32 %v444, 64
    %v453 = vadd.s32 %v444, 72
    %v454 = vadd.s32 %v444, 80
    %v455 = vadd.s32 %v444, 88
    %v456 = vadd.s32 %v444, 96
    %v457 = vadd.s32 %v444, 104
    %v458 = vadd.s32 %v444, 112
    %v459 = vadd.s32 %v444, 120
    %v460 = vstv %s442
    %v461 = vadd.s32 %v460, %v444
    %v462 = vadd.s32 %v460, %v445
    %v463 = vadd.s32 %v460, %v446
    %v464 = vadd.s32 %v460, %v447
    %v465 = vadd.s32 %v460, %v448
    %v466 = vadd.s32 %v460, %v449
    %v467 = vadd.s32 %v460, %v450
    %v468 = vadd.s32 %v460, %v451
    %v469 = vadd.s32 %v460, %v452
    %v470 = vadd.s32 %v460, %v453
    %v471 = vadd.s32 %v460, %v454
    %v472 = vadd.s32 %v460, %v455
    %v473 = vadd.s32 %v460, %v456
    %v474 = vadd.s32 %v460, %v457
    %v475 = vadd.s32 %v460, %v458
    %v476 = vadd.s32 %v460, %v459
    %vm477 = vcmp.lt.s32.totalorder %v461, 16
    %vm478 = vcmp.lt.s32.totalorder %v462, 16
    %vm479 = vcmp.lt.s32.totalorder %v463, 16
    %vm480 = vcmp.lt.s32.totalorder %v464, 16
    %vm481 = vcmp.lt.s32.totalorder %v465, 16
    %vm482 = vcmp.lt.s32.totalorder %v466, 16
    %vm483 = vcmp.lt.s32.totalorder %v467, 16
    %vm484 = vcmp.lt.s32.totalorder %v468, 16
    %vm485 = vcmp.lt.s32.totalorder %v469, 16
    %vm486 = vcmp.lt.s32.totalorder %v470, 16
    %vm487 = vcmp.lt.s32.totalorder %v471, 16
    %vm488 = vcmp.lt.s32.totalorder %v472, 16
    %vm489 = vcmp.lt.s32.totalorder %v473, 16
    %vm490 = vcmp.lt.s32.totalorder %v474, 16
    %vm491 = vcmp.lt.s32.totalorder %v475, 16
    %vm492 = vcmp.lt.s32.totalorder %v476, 16
    %v493 = vsel %vm477, %v410, 0.0
    %v494 = vsel %vm478, %v411, 0.0
    %v495 = vsel %vm479, %v412, 0.0
    %v496 = vsel %vm480, %v413, 0.0
    %v497 = vsel %vm481, %v414, 0.0
    %v498 = vsel %vm482, %v415, 0.0
    %v499 = vsel %vm483, %v416, 0.0
    %v500 = vsel %vm484, %v417, 0.0
    %v501 = vsel %vm485, %v418, 0.0
    %v502 = vsel %vm486, %v419, 0.0
    %v503 = vsel %vm487, %v420, 0.0
    %v504 = vsel %vm488, %v421, 0.0
    %v505 = vsel %vm489, %v422, 0.0
    %v506 = vsel %vm490, %v423, 0.0
    %v507 = vsel %vm491, %v424, 0.0
    %v508 = vsel %vm492, %v425, 0.0
    %v509 = vadd.f32 %v493, %v494
    %v510 = vadd.f32 %v509, %v495
    %v511 = vadd.f32 %v510, %v496
    %v512 = vadd.f32 %v511, %v497
    %v513 = vadd.f32 %v512, %v498
    %v514 = vadd.f32 %v513, %v499
    %v515 = vadd.f32 %v514, %v500
    %v516 = vadd.f32 %v515, %v501
    %v517 = vadd.f32 %v516, %v502
    %v518 = vadd.f32 %v517, %v503
    %v519 = vadd.f32 %v518, %v504
    %v520 = vadd.f32 %v519, %v505
    %v521 = vadd.f32 %v520, %v506
    %v522 = vadd.f32 %v521, %v507
    %v523 = vadd.f32 %v522, %v508
    %v524 = vrot.slane %v523, 4
    %v525 = vadd.f32 %v523, %v524
    %v526 = vrot.slane %v525, 2
    %v527 = vadd.f32 %v525, %v526
    %v528 = vrot.slane %v527, 1
    %v529 = vadd.f32 %v527, %v528
    %v530 = vmul.f32 %v493, %v493
    %v531 = vmul.f32 %v494, %v494
    %v532 = vmul.f32 %v495, %v495
    %v533 = vmul.f32 %v496, %v496
    %v534 = vmul.f32 %v497, %v497
    %v535 = vmul.f32 %v498, %v498
    %v536 = vmul.f32 %v499, %v499
    %v537 = vmul.f32 %v500, %v500
    %v538 = vmul.f32 %v501, %v501
    %v539 = vmul.f32 %v502, %v502
    %v540 = vmul.f32 %v503, %v503
    %v541 = vmul.f32 %v504, %v504
    %v542 = vmul.f32 %v505, %v505
    %v543 = vmul.f32 %v506, %v506
    %v544 = vmul.f32 %v507, %v507
    %v545 = vmul.f32 %v508, %v508
    %v546 = vadd.f32 %v530, %v531
    %v547 = vadd.f32 %v546, %v532
    %v548 = vadd.f32 %v547, %v533
    %v549 = vadd.f32 %v548, %v534
    %v550 = vadd.f32 %v549, %v535
    %v551 = vadd.f32 %v550, %v536
    %v552 = vadd.f32 %v551, %v537
    %v553 = vadd.f32 %v552, %v538
    %v554 = vadd.f32 %v553, %v539
    %v555 = vadd.f32 %v554, %v540
    %v556 = vadd.f32 %v555, %v541
    %v557 = vadd.f32 %v556, %v542
    %v558 = vadd.f32 %v557, %v543
    %v559 = vadd.f32 %v558, %v544
    %v560 = vadd.f32 %v559, %v545
    %v561 = vrot.slane %v560, 4
    %v562 = vadd.f32 %v560, %v561
    %v563 = vrot.slane %v562, 2
    %v564 = vadd.f32 %v562, %v563
    %v565 = vrot.slane %v564, 1
    %v566 = vadd.f32 %v564, %v565
    %vm567 = vcmp.eq.s32.totalorder %v444, 0
    %v568 = vsel %vm567, %v529, 0.0
    %vm569 = vcmp.eq.s32.totalorder %v444, 1
    %v570 = vsel %vm569, %v566, 0.0
    %v571 = vadd.f32 %v568, %v570
    %572 = vst [vmem:[%s6] sm:$0xff] %v571
  $region25: #{brain_surf_gcn_forward.35} parent=0 // pred_fallthru
    _
  // Predicated region
  $region26: #{brain_surf_gcn_forward.35} parent=0 // pred_check
    _
  $region27: #{brain_surf_gcn_forward.35} parent=0 // pred_check_branch
    %574 = sbr.rel (0) target = $region29
  $region28: #{brain_surf_gcn_forward.35} parent=0 // pred_region
    _
  $region29: #{brain_surf_gcn_forward.35} parent=0 // pred_fallthru
    _
  // Predicated region
  $region30: #{brain_surf_gcn_forward.35} parent=0 // pred_check
    _
  $region31: #{brain_surf_gcn_forward.35} parent=0 // pred_check_branch
    %576 = sbr.rel (0) target = $region33
  $region32: #{brain_surf_gcn_forward.35} parent=0 // pred_region
    _
  $region33: #{brain_surf_gcn_forward.35} parent=0 // pred_fallthru
    _
  // Predicated region
  $region34: #{brain_surf_gcn_forward.35} parent=0 // pred_check
    _
  $region35: #{brain_surf_gcn_forward.35} parent=0 // pred_check_branch
    %578 = sbr.rel (0) target = $region37
  $region36: #{brain_surf_gcn_forward.35} parent=0 // pred_region
    _
  $region37: #{brain_surf_gcn_forward.35} parent=0 // pred_fallthru
    _
  // Predicated region
  $region38: #{brain_surf_gcn_forward.35} parent=0 // pred_check
    _
  $region39: #{brain_surf_gcn_forward.35} parent=0 // pred_check_branch
    %580 = sbr.rel (0) target = $region41
  $region40: #{brain_surf_gcn_forward.35} parent=0 // pred_region
    _
  $region41: #{brain_surf_gcn_forward.35} parent=0 // pred_fallthru
    _

</llo_original>
